<compile_context>
chip_gen: v7x
topology: tpu7x:2x2x1
jax: 0.10.0
libtpu: 0.0.40
codegen_flags: <defaults>
</compile_context>

<pallas_src>
import jax
import jax.numpy as jnp
from jax.experimental import pallas as pl
from jax.experimental.pallas import tpu as pltpu


def _fold_pool_into_conv(w_hwio, k):
    """Fold a uniform k x k average pool into a 3x3 / stride-1 / pad-1 conv.

    conv3x3(pad=1) followed by avgpool(k) on an H = k*P input is exactly a
    (k+2) x (k+2) stride-k conv on the same zero-padded input with weights
        Wc[jh, jw] = (1/k^2) * sum_{dy+ky = jh, dx+kx = jw} W[dy, dx],
    dy, dx in [0, 3), ky, kx in [0, k).
    """
    kh, kw, c_in, c_out = w_hwio.shape
    assert kh == 3 and kw == 3
    wc = jnp.zeros((kh + k - 1, kw + k - 1, c_in, c_out), w_hwio.dtype)
    for dy in range(kh):
        for dx in range(kw):
            for ky in range(k):
                for kx in range(k):
                    wc = wc.at[dy + ky, dx + kx].add(w_hwio[dy, dx])
    return wc * (1.0 / (k * k))


def make_fused_basicconv(N, H, W, C_in, C_out, P, m_block=None):
    """Fused BasicConv: Conv3x3(no bias) -> AdaptiveAvgPool2d(P) -> BN(eval) -> ReLU.

    Returns a jitted function (x_nchw, w_hwio, gamma, beta, mean, var) -> (N, C_out, P, P).
    """
    assert H % P == 0 and W % P == 0 and H // P == W // P, \
        "adaptive pool reduces to a uniform pool only for divisible sizes"
    k = H // P
    T_side = k + 2                       # folded (strided-conv) kernel side
    T = T_side * T_side                  # number of folded taps
    # Pack tap pairs along K so the MXU sees K = 256 when C_in == 128 (review items 5/6).
    pair = (C_in <= 128) and (T % 2 == 0)
    T_eff = T // 2 if pair else T
    K_eff = 2 * C_in if pair else C_in
    M = P * P                            # flattened, lane-dense output spatial

    if m_block is None:
        target = max(8, M // 3)          # aim for ~3 output blocks per image
        cands = [d for d in range(8, target + 1, 8) if M % d == 0]
        m_block = max(cands) if cands else M
    assert M % m_block == 0
    n_blocks = M // m_block

    def kernel(x_ref, w_ref, scale_ref, shift_ref, o_ref, acc_ref):
        # x_ref     : (1, T_eff, m_block, K_eff) bf16 im2col slab for this output block
        # w_ref     : (T_eff, K_eff, C_out)      bf16 folded conv weights
        # scale/shift: (1, C_out)                f32 folded eval-mode BatchNorm affine
        # o_ref     : (1, m_block, C_out)        f32 output block (flattened spatial)
        # acc_ref   : VMEM (m_block, C_out)      f32 accumulator scratch
        acc_ref[...] = jnp.dot(x_ref[0, 0], w_ref[0],
                               preferred_element_type=jnp.float32)
        for t in range(1, T_eff):        # accumulate remaining taps into VMEM scratch
            acc_ref[...] += jnp.dot(x_ref[0, t], w_ref[t],
                                    preferred_element_type=jnp.float32)
        y = acc_ref[...] * scale_ref[...] + shift_ref[...]
        o_ref[0] = jnp.maximum(y, 0.0).astype(o_ref.dtype)

    grid_spec = pltpu.PrefetchScalarGridSpec(
        num_scalar_prefetch=0,
        grid=(N, n_blocks),
        in_specs=[
            pl.BlockSpec((1, T_eff, m_block, K_eff), lambda n, r: (n, 0, r, 0)),
            pl.BlockSpec((T_eff, K_eff, C_out), lambda n, r: (0, 0, 0)),
            pl.BlockSpec((1, C_out), lambda n, r: (0, 0)),
            pl.BlockSpec((1, C_out), lambda n, r: (0, 0)),
        ],
        out_specs=pl.BlockSpec((1, m_block, C_out), lambda n, r: (n, r, 0)),
        scratch_shapes=[pltpu.VMEM((m_block, C_out), jnp.float32)],
    )

    call = pl.pallas_call(
        kernel,
        out_shape=jax.ShapeDtypeStruct((N, M, C_out), jnp.float32),
        grid_spec=grid_spec,
        # Both axes are independent -> "parallel" lets v7x use both TensorCores.
        compiler_params=pltpu.CompilerParams(
            dimension_semantics=("parallel", "parallel")),
    )

    @jax.jit
    def run(x_nchw, w_hwio, gamma, beta, run_mean, run_var, eps=1e-5):
        # Fold eval-mode BatchNorm into a per-channel scale/shift.
        scale = gamma / jnp.sqrt(run_var + eps)
        shift = beta - run_mean * scale

        # Fold the k x k average pool into the conv (exact), tap-major weights.
        wc = _fold_pool_into_conv(w_hwio, k)                  # (k+2, k+2, C_in, C_out)
        w_taps = wc.reshape(T, C_in, C_out)

        # NCHW -> NHWC (channels on the 128-lane axis), cast to bf16 for the MXU,
        # zero-pad by 1, then tap-major strided im2col of the stride-k folded conv.
        x = jnp.transpose(x_nchw, (0, 2, 3, 1)).astype(jnp.bfloat16)
        xp = jnp.pad(x, ((0, 0), (1, 1), (1, 1), (0, 0)))
        span = k * (P - 1) + 1
        taps = []
        for jh in range(T_side):
            for jw in range(T_side):
                taps.append(xp[:, jh:jh + span:k, jw:jw + span:k, :])   # (N, P, P, C_in)
        if pair:
            # Pack taps (2t, 2t+1) along the contraction axis -> K_eff = 2*C_in.
            taps = [jnp.concatenate([taps[2 * t], taps[2 * t + 1]], axis=-1)
                    for t in range(T_eff)]
            w_taps = w_taps.reshape(T_eff, K_eff, C_out)
        xcol = jnp.stack(taps, axis=1).reshape(N, T_eff, M, K_eff)

        out = call(xcol,
                   w_taps.astype(jnp.bfloat16),
                   scale.reshape(1, C_out).astype(jnp.float32),
                   shift.reshape(1, C_out).astype(jnp.float32))
        out = out.reshape(N, P, P, C_out)
        return jnp.transpose(out, (0, 3, 1, 2))               # back to NCHW

    return run


def _basicconv_ref(x_nchw, w_hwio, gamma, beta, mean, var, P, eps=1e-5):
    """Pure-JAX f32 reference matching the PyTorch BasicConv (eval-mode BN)."""
    x = jnp.transpose(x_nchw, (0, 2, 3, 1))
    y = jax.lax.conv_general_dilated(
        x, w_hwio, window_strides=(1, 1), padding=((1, 1), (1, 1)),
        dimension_numbers=("NHWC", "HWIO", "NHWC"),
        precision=jax.lax.Precision.HIGHEST)
    n, h, w, c = y.shape
    kk = h // P
    y = y.reshape(n, P, kk, P, kk, c).mean(axis=(2, 4))
    y = (y - mean) / jnp.sqrt(var + eps) * gamma + beta
    y = jnp.maximum(y, 0.0)
    return jnp.transpose(y, (0, 3, 1, 2))


if __name__ == "__main__":
    key = jax.random.PRNGKey(0)
    ks = jax.random.split(key, 14)

    # Small shapes consistent with the module: channels scaled down from
    # (1024, 2048) to (128, 256); spatial sizes divisible by the pool outputs.
    N = 2
    C2, C3 = 128, 256
    H2 = W2 = 48          # pools to 24 (AdaptiveAvgPool2d(24)), k = 2
    H3 = W3 = 24          # pools to 12 (AdaptiveAvgPool2d(12)), k = 2
    P2, P3 = 24, 12

    def bf16r(a):
        # Round test values to the bf16 grid so the bf16-MXU kernel can be compared
        # tightly against the f32 reference (only weight folding + reassociation differ).
        return a.astype(jnp.bfloat16).astype(jnp.float32)

    # semantic_feat is a list (NCHW, PyTorch convention); only [2] and [3] change.
    feat0 = jax.random.normal(ks[0], (N, 32, 8, 8), jnp.float32)
    feat1 = jax.random.normal(ks[1], (N, 64, 8, 8), jnp.float32)
    feat2 = bf16r(jax.random.normal(ks[2], (N, C2, H2, W2), jnp.float32))
    feat3 = bf16r(jax.random.normal(ks[3], (N, C3, H3, W3), jnp.float32))
    semantic_feat = [feat0, feat1, feat2, feat3]

    # Deterministic parameters (conv weights in HWIO; eval-mode BN stats/affine).
    w2 = bf16r(jax.random.normal(ks[4], (3, 3, C2, C2), jnp.float32) * 0.05)
    g2 = 1.0 + 0.1 * jax.random.normal(ks[5], (C2,), jnp.float32)
    b2 = 0.1 * jax.random.normal(ks[6], (C2,), jnp.float32)
    m2 = 0.1 * jax.random.normal(ks[7], (C2,), jnp.float32)
    v2 = jax.random.uniform(ks[8], (C2,), jnp.float32, minval=0.5, maxval=1.5)

    w3 = bf16r(jax.random.normal(ks[9], (3, 3, C3, C3), jnp.float32) * 0.05)
    g3 = 1.0 + 0.1 * jax.random.normal(ks[10], (C3,), jnp.float32)
    b3 = 0.1 * jax.random.normal(ks[11], (C3,), jnp.float32)
    m3 = 0.1 * jax.random.normal(ks[12], (C3,), jnp.float32)
    v3 = jax.random.uniform(ks[13], (C3,), jnp.float32, minval=0.5, maxval=1.5)

    run2 = make_fused_basicconv(N, H2, W2, C2, C2, P2)   # conv_bn_relu1
    run3 = make_fused_basicconv(N, H3, W3, C3, C3, P3)   # conv_bn_relu2

    # ResNet_Proj.forward semantics: in-place replacement of entries 2 and 3 (NCHW out).
    semantic_feat[2] = run2(semantic_feat[2], w2, g2, b2, m2, v2)
    semantic_feat[3] = run3(semantic_feat[3], w3, g3, b3, m3, v3)

    jax.block_until_ready(semantic_feat[2])
    jax.block_until_ready(semantic_feat[3])

    # Correctness check against a pure-JAX f32 reference.  Tolerance accounts for the
    # bf16 MXU operands (folded weights are rounded to bf16); expected max |err| ~1e-2.
    ref2 = _basicconv_ref(feat2, w2, g2, b2, m2, v2, P2)
    ref3 = _basicconv_ref(feat3, w3, g3, b3, m3, v3, P3)
    assert semantic_feat[2].shape == (N, C2, P2, P2)
    assert semantic_feat[3].shape == (N, C3, P3, P3)
    assert jnp.allclose(semantic_feat[2], ref2, rtol=2e-2, atol=2e-2)
    assert jnp.allclose(semantic_feat[3], ref3, rtol=2e-2, atol=2e-2)

    print("KERNEL_OK")
</pallas_src>

<mosaic_0001>
module attributes {stable_mosaic.version = 11 : i64} {
  func.func @kernel(%arg0: i32, %arg1: i32, %arg2: memref<1x8x192x256xbf16, #tpu.memory_space<vmem>>, %arg3: memref<8x256x128xbf16, #tpu.memory_space<vmem>>, %arg4: memref<1x128xf32, #tpu.memory_space<vmem>>, %arg5: memref<1x128xf32, #tpu.memory_space<vmem>>, %arg6: memref<1x192x128xf32, #tpu.memory_space<vmem>>, %arg7: memref<192x128xf32, #tpu.memory_space<vmem>>) attributes {dimension_semantics = [#tpu.dimension_semantics<parallel>, #tpu.dimension_semantics<parallel>], iteration_bounds = array<i64: 2, 3>, scalar_prefetch = 0 : i64, scratch_operands = 1 : i64, tpu.core_type = #tpu.core_type<tc>, window_params = [{transform_indices = @transform_0, window_bounds = array<i64: 1, 8, 192, 256>}, {pipeline_mode = #tpu.pipeline_mode<synchronous>, transform_indices = @transform_1, window_bounds = array<i64: 8, 256, 128>}, {pipeline_mode = #tpu.pipeline_mode<synchronous>, transform_indices = @transform_2, window_bounds = array<i64: 1, 128>}, {pipeline_mode = #tpu.pipeline_mode<synchronous>, transform_indices = @transform_3, window_bounds = array<i64: 1, 128>}, {transform_indices = @transform_4, window_bounds = array<i64: 1, 192, 128>}]} {
    %c0 = arith.constant 0 : index
    %c0_0 = arith.constant 0 : index
    %c0_1 = arith.constant 0 : index
    %c0_2 = arith.constant 0 : index
    %0 = vector.load %arg2[%c0, %c0_0, %c0_1, %c0_2] : memref<1x8x192x256xbf16, #tpu.memory_space<vmem>>, vector<1x1x192x256xbf16>
    %1 = vector.shape_cast %0 : vector<1x1x192x256xbf16> to vector<192x256xbf16>
    %c0_3 = arith.constant 0 : index
    %c0_4 = arith.constant 0 : index
    %c0_5 = arith.constant 0 : index
    %2 = vector.load %arg3[%c0_3, %c0_4, %c0_5] : memref<8x256x128xbf16, #tpu.memory_space<vmem>>, vector<1x256x128xbf16>
    %3 = vector.shape_cast %2 : vector<1x256x128xbf16> to vector<256x128xbf16>
    %cst = arith.constant dense<0.000000e+00> : vector<192x128xf32>
    %4 = tpu.matmul %1, %3, %cst {dimension_numbers = #tpu.dot_dimension_numbers<[1], [0], [0], [1], [0, 0, 1, 1], [], []>} : vector<192x256xbf16>, vector<256x128xbf16>, vector<192x128xf32> -> vector<192x128xf32>
    %c0_6 = arith.constant 0 : index
    %c0_7 = arith.constant 0 : index
    %5 = vector.load %arg7[%c0_6, %c0_7] : memref<192x128xf32, #tpu.memory_space<vmem>>, vector<192x128xf32>
    tpu.vector_store %arg7[%c0_6, %c0_7], %4 {strides = array<i32>} : memref<192x128xf32, #tpu.memory_space<vmem>>, vector<192x128xf32>,
    %c0_8 = arith.constant 0 : index
    %c0_9 = arith.constant 0 : index
    %6 = vector.load %arg7[%c0_8, %c0_9] : memref<192x128xf32, #tpu.memory_space<vmem>>, vector<192x128xf32>
    %c0_10 = arith.constant 0 : index
    %c1 = arith.constant 1 : index
    %c0_11 = arith.constant 0 : index
    %c0_12 = arith.constant 0 : index
    %7 = vector.load %arg2[%c0_10, %c1, %c0_11, %c0_12] : memref<1x8x192x256xbf16, #tpu.memory_space<vmem>>, vector<1x1x192x256xbf16>
    %8 = vector.shape_cast %7 : vector<1x1x192x256xbf16> to vector<192x256xbf16>
    %c1_13 = arith.constant 1 : index
    %c0_14 = arith.constant 0 : index
    %c0_15 = arith.constant 0 : index
    %9 = vector.load %arg3[%c1_13, %c0_14, %c0_15] : memref<8x256x128xbf16, #tpu.memory_space<vmem>>, vector<1x256x128xbf16>
    %10 = vector.shape_cast %9 : vector<1x256x128xbf16> to vector<256x128xbf16>
    %cst_16 = arith.constant dense<0.000000e+00> : vector<192x128xf32>
    %11 = tpu.matmul %8, %10, %cst_16 {dimension_numbers = #tpu.dot_dimension_numbers<[1], [0], [0], [1], [0, 0, 1, 1], [], []>} : vector<192x256xbf16>, vector<256x128xbf16>, vector<192x128xf32> -> vector<192x128xf32>
    %12 = arith.addf %6, %11 : vector<192x128xf32>
    %c0_17 = arith.constant 0 : index
    %c0_18 = arith.constant 0 : index
    %13 = vector.load %arg7[%c0_17, %c0_18] : memref<192x128xf32, #tpu.memory_space<vmem>>, vector<192x128xf32>
    tpu.vector_store %arg7[%c0_17, %c0_18], %12 {strides = array<i32>} : memref<192x128xf32, #tpu.memory_space<vmem>>, vector<192x128xf32>,
    %c0_19 = arith.constant 0 : index
    %c0_20 = arith.constant 0 : index
    %14 = vector.load %arg7[%c0_19, %c0_20] : memref<192x128xf32, #tpu.memory_space<vmem>>, vector<192x128xf32>
    %c0_21 = arith.constant 0 : index
    %c2 = arith.constant 2 : index
    %c0_22 = arith.constant 0 : index
    %c0_23 = arith.constant 0 : index
    %15 = vector.load %arg2[%c0_21, %c2, %c0_22, %c0_23] : memref<1x8x192x256xbf16, #tpu.memory_space<vmem>>, vector<1x1x192x256xbf16>
    %16 = vector.shape_cast %15 : vector<1x1x192x256xbf16> to vector<192x256xbf16>
    %c2_24 = arith.constant 2 : index
    %c0_25 = arith.constant 0 : index
    %c0_26 = arith.constant 0 : index
    %17 = vector.load %arg3[%c2_24, %c0_25, %c0_26] : memref<8x256x128xbf16, #tpu.memory_space<vmem>>, vector<1x256x128xbf16>
    %18 = vector.shape_cast %17 : vector<1x256x128xbf16> to vector<256x128xbf16>
    %cst_27 = arith.constant dense<0.000000e+00> : vector<192x128xf32>
    %19 = tpu.matmul %16, %18, %cst_27 {dimension_numbers = #tpu.dot_dimension_numbers<[1], [0], [0], [1], [0, 0, 1, 1], [], []>} : vector<192x256xbf16>, vector<256x128xbf16>, vector<192x128xf32> -> vector<192x128xf32>
    %20 = arith.addf %14, %19 : vector<192x128xf32>
    %c0_28 = arith.constant 0 : index
    %c0_29 = arith.constant 0 : index
    %21 = vector.load %arg7[%c0_28, %c0_29] : memref<192x128xf32, #tpu.memory_space<vmem>>, vector<192x128xf32>
    tpu.vector_store %arg7[%c0_28, %c0_29], %20 {strides = array<i32>} : memref<192x128xf32, #tpu.memory_space<vmem>>, vector<192x128xf32>,
    %c0_30 = arith.constant 0 : index
    %c0_31 = arith.constant 0 : index
    %22 = vector.load %arg7[%c0_30, %c0_31] : memref<192x128xf32, #tpu.memory_space<vmem>>, vector<192x128xf32>
    %c0_32 = arith.constant 0 : index
    %c3 = arith.constant 3 : index
    %c0_33 = arith.constant 0 : index
    %c0_34 = arith.constant 0 : index
    %23 = vector.load %arg2[%c0_32, %c3, %c0_33, %c0_34] : memref<1x8x192x256xbf16, #tpu.memory_space<vmem>>, vector<1x1x192x256xbf16>
    %24 = vector.shape_cast %23 : vector<1x1x192x256xbf16> to vector<192x256xbf16>
    %c3_35 = arith.constant 3 : index
    %c0_36 = arith.constant 0 : index
    %c0_37 = arith.constant 0 : index
    %25 = vector.load %arg3[%c3_35, %c0_36, %c0_37] : memref<8x256x128xbf16, #tpu.memory_space<vmem>>, vector<1x256x128xbf16>
    %26 = vector.shape_cast %25 : vector<1x256x128xbf16> to vector<256x128xbf16>
    %cst_38 = arith.constant dense<0.000000e+00> : vector<192x128xf32>
    %27 = tpu.matmul %24, %26, %cst_38 {dimension_numbers = #tpu.dot_dimension_numbers<[1], [0], [0], [1], [0, 0, 1, 1], [], []>} : vector<192x256xbf16>, vector<256x128xbf16>, vector<192x128xf32> -> vector<192x128xf32>
    %28 = arith.addf %22, %27 : vector<192x128xf32>
    %c0_39 = arith.constant 0 : index
    %c0_40 = arith.constant 0 : index
    %29 = vector.load %arg7[%c0_39, %c0_40] : memref<192x128xf32, #tpu.memory_space<vmem>>, vector<192x128xf32>
    tpu.vector_store %arg7[%c0_39, %c0_40], %28 {strides = array<i32>} : memref<192x128xf32, #tpu.memory_space<vmem>>, vector<192x128xf32>,
    %c0_41 = arith.constant 0 : index
    %c0_42 = arith.constant 0 : index
    %30 = vector.load %arg7[%c0_41, %c0_42] : memref<192x128xf32, #tpu.memory_space<vmem>>, vector<192x128xf32>
    %c0_43 = arith.constant 0 : index
    %c4 = arith.constant 4 : index
    %c0_44 = arith.constant 0 : index
    %c0_45 = arith.constant 0 : index
    %31 = vector.load %arg2[%c0_43, %c4, %c0_44, %c0_45] : memref<1x8x192x256xbf16, #tpu.memory_space<vmem>>, vector<1x1x192x256xbf16>
    %32 = vector.shape_cast %31 : vector<1x1x192x256xbf16> to vector<192x256xbf16>
    %c4_46 = arith.constant 4 : index
    %c0_47 = arith.constant 0 : index
    %c0_48 = arith.constant 0 : index
    %33 = vector.load %arg3[%c4_46, %c0_47, %c0_48] : memref<8x256x128xbf16, #tpu.memory_space<vmem>>, vector<1x256x128xbf16>
    %34 = vector.shape_cast %33 : vector<1x256x128xbf16> to vector<256x128xbf16>
    %cst_49 = arith.constant dense<0.000000e+00> : vector<192x128xf32>
    %35 = tpu.matmul %32, %34, %cst_49 {dimension_numbers = #tpu.dot_dimension_numbers<[1], [0], [0], [1], [0, 0, 1, 1], [], []>} : vector<192x256xbf16>, vector<256x128xbf16>, vector<192x128xf32> -> vector<192x128xf32>
    %36 = arith.addf %30, %35 : vector<192x128xf32>
    %c0_50 = arith.constant 0 : index
    %c0_51 = arith.constant 0 : index
    %37 = vector.load %arg7[%c0_50, %c0_51] : memref<192x128xf32, #tpu.memory_space<vmem>>, vector<192x128xf32>
    tpu.vector_store %arg7[%c0_50, %c0_51], %36 {strides = array<i32>} : memref<192x128xf32, #tpu.memory_space<vmem>>, vector<192x128xf32>,
    %c0_52 = arith.constant 0 : index
    %c0_53 = arith.constant 0 : index
    %38 = vector.load %arg7[%c0_52, %c0_53] : memref<192x128xf32, #tpu.memory_space<vmem>>, vector<192x128xf32>
    %c0_54 = arith.constant 0 : index
    %c5 = arith.constant 5 : index
    %c0_55 = arith.constant 0 : index
    %c0_56 = arith.constant 0 : index
    %39 = vector.load %arg2[%c0_54, %c5, %c0_55, %c0_56] : memref<1x8x192x256xbf16, #tpu.memory_space<vmem>>, vector<1x1x192x256xbf16>
    %40 = vector.shape_cast %39 : vector<1x1x192x256xbf16> to vector<192x256xbf16>
    %c5_57 = arith.constant 5 : index
    %c0_58 = arith.constant 0 : index
    %c0_59 = arith.constant 0 : index
    %41 = vector.load %arg3[%c5_57, %c0_58, %c0_59] : memref<8x256x128xbf16, #tpu.memory_space<vmem>>, vector<1x256x128xbf16>
    %42 = vector.shape_cast %41 : vector<1x256x128xbf16> to vector<256x128xbf16>
    %cst_60 = arith.constant dense<0.000000e+00> : vector<192x128xf32>
    %43 = tpu.matmul %40, %42, %cst_60 {dimension_numbers = #tpu.dot_dimension_numbers<[1], [0], [0], [1], [0, 0, 1, 1], [], []>} : vector<192x256xbf16>, vector<256x128xbf16>, vector<192x128xf32> -> vector<192x128xf32>
    %44 = arith.addf %38, %43 : vector<192x128xf32>
    %c0_61 = arith.constant 0 : index
    %c0_62 = arith.constant 0 : index
    %45 = vector.load %arg7[%c0_61, %c0_62] : memref<192x128xf32, #tpu.memory_space<vmem>>, vector<192x128xf32>
    tpu.vector_store %arg7[%c0_61, %c0_62], %44 {strides = array<i32>} : memref<192x128xf32, #tpu.memory_space<vmem>>, vector<192x128xf32>,
    %c0_63 = arith.constant 0 : index
    %c0_64 = arith.constant 0 : index
    %46 = vector.load %arg7[%c0_63, %c0_64] : memref<192x128xf32, #tpu.memory_space<vmem>>, vector<192x128xf32>
    %c0_65 = arith.constant 0 : index
    %c6 = arith.constant 6 : index
    %c0_66 = arith.constant 0 : index
    %c0_67 = arith.constant 0 : index
    %47 = vector.load %arg2[%c0_65, %c6, %c0_66, %c0_67] : memref<1x8x192x256xbf16, #tpu.memory_space<vmem>>, vector<1x1x192x256xbf16>
    %48 = vector.shape_cast %47 : vector<1x1x192x256xbf16> to vector<192x256xbf16>
    %c6_68 = arith.constant 6 : index
    %c0_69 = arith.constant 0 : index
    %c0_70 = arith.constant 0 : index
    %49 = vector.load %arg3[%c6_68, %c0_69, %c0_70] : memref<8x256x128xbf16, #tpu.memory_space<vmem>>, vector<1x256x128xbf16>
    %50 = vector.shape_cast %49 : vector<1x256x128xbf16> to vector<256x128xbf16>
    %cst_71 = arith.constant dense<0.000000e+00> : vector<192x128xf32>
    %51 = tpu.matmul %48, %50, %cst_71 {dimension_numbers = #tpu.dot_dimension_numbers<[1], [0], [0], [1], [0, 0, 1, 1], [], []>} : vector<192x256xbf16>, vector<256x128xbf16>, vector<192x128xf32> -> vector<192x128xf32>
    %52 = arith.addf %46, %51 : vector<192x128xf32>
    %c0_72 = arith.constant 0 : index
    %c0_73 = arith.constant 0 : index
    %53 = vector.load %arg7[%c0_72, %c0_73] : memref<192x128xf32, #tpu.memory_space<vmem>>, vector<192x128xf32>
    tpu.vector_store %arg7[%c0_72, %c0_73], %52 {strides = array<i32>} : memref<192x128xf32, #tpu.memory_space<vmem>>, vector<192x128xf32>,
    %c0_74 = arith.constant 0 : index
    %c0_75 = arith.constant 0 : index
    %54 = vector.load %arg7[%c0_74, %c0_75] : memref<192x128xf32, #tpu.memory_space<vmem>>, vector<192x128xf32>
    %c0_76 = arith.constant 0 : index
    %c7 = arith.constant 7 : index
    %c0_77 = arith.constant 0 : index
    %c0_78 = arith.constant 0 : index
    %55 = vector.load %arg2[%c0_76, %c7, %c0_77, %c0_78] : memref<1x8x192x256xbf16, #tpu.memory_space<vmem>>, vector<1x1x192x256xbf16>
    %56 = vector.shape_cast %55 : vector<1x1x192x256xbf16> to vector<192x256xbf16>
    %c7_79 = arith.constant 7 : index
    %c0_80 = arith.constant 0 : index
    %c0_81 = arith.constant 0 : index
    %57 = vector.load %arg3[%c7_79, %c0_80, %c0_81] : memref<8x256x128xbf16, #tpu.memory_space<vmem>>, vector<1x256x128xbf16>
    %58 = vector.shape_cast %57 : vector<1x256x128xbf16> to vector<256x128xbf16>
    %cst_82 = arith.constant dense<0.000000e+00> : vector<192x128xf32>
    %59 = tpu.matmul %56, %58, %cst_82 {dimension_numbers = #tpu.dot_dimension_numbers<[1], [0], [0], [1], [0, 0, 1, 1], [], []>} : vector<192x256xbf16>, vector<256x128xbf16>, vector<192x128xf32> -> vector<192x128xf32>
    %60 = arith.addf %54, %59 : vector<192x128xf32>
    %c0_83 = arith.constant 0 : index
    %c0_84 = arith.constant 0 : index
    %61 = vector.load %arg7[%c0_83, %c0_84] : memref<192x128xf32, #tpu.memory_space<vmem>>, vector<192x128xf32>
    tpu.vector_store %arg7[%c0_83, %c0_84], %60 {strides = array<i32>} : memref<192x128xf32, #tpu.memory_space<vmem>>, vector<192x128xf32>,
    %c0_85 = arith.constant 0 : index
    %c0_86 = arith.constant 0 : index
    %62 = vector.load %arg7[%c0_85, %c0_86] : memref<192x128xf32, #tpu.memory_space<vmem>>, vector<192x128xf32>
    %c0_87 = arith.constant 0 : index
    %c0_88 = arith.constant 0 : index
    %63 = vector.load %arg4[%c0_87, %c0_88] : memref<1x128xf32, #tpu.memory_space<vmem>>, vector<1x128xf32>
    %64 = vector.broadcast %63 : vector<1x128xf32> to vector<192x128xf32>
    %65 = arith.mulf %62, %64 : vector<192x128xf32>
    %c0_89 = arith.constant 0 : index
    %c0_90 = arith.constant 0 : index
    %66 = vector.load %arg5[%c0_89, %c0_90] : memref<1x128xf32, #tpu.memory_space<vmem>>, vector<1x128xf32>
    %67 = vector.broadcast %66 : vector<1x128xf32> to vector<192x128xf32>
    %68 = arith.addf %65, %67 : vector<192x128xf32>
    %cst_91 = arith.constant 0.000000e+00 : f32
    %69 = vector.broadcast %cst_91 : f32 to vector<192x128xf32>
    %70 = arith.maximumf %68, %69 : vector<192x128xf32>
    %c0_92 = arith.constant 0 : index
    %c0_93 = arith.constant 0 : index
    %c0_94 = arith.constant 0 : index
    %71 = vector.load %arg6[%c0_92, %c0_93, %c0_94] : memref<1x192x128xf32, #tpu.memory_space<vmem>>, vector<1x192x128xf32>
    %72 = vector.shape_cast %71 : vector<1x192x128xf32> to vector<192x128xf32>
    %73 = vector.shape_cast %70 : vector<192x128xf32> to vector<1x192x128xf32>
    tpu.vector_store %arg6[%c0_92, %c0_93, %c0_94], %73 {strides = array<i32>} : memref<1x192x128xf32, #tpu.memory_space<vmem>>, vector<1x192x128xf32>,
    return
  }
  func.func @transform_0(%arg0: i32, %arg1: i32) -> (i32, i32, i32, i32) {
    %c0_i32 = arith.constant 0 : i32
    %c0_i32_0 = arith.constant 0 : i32
    %c0_i32_1 = arith.constant 0 : i32
    return %arg0, %c0_i32, %arg1, %c0_i32_0 : i32, i32, i32, i32
  }
  func.func @transform_1(%arg0: i32, %arg1: i32) -> (i32, i32, i32) {
    %c0_i32 = arith.constant 0 : i32
    %c0_i32_0 = arith.constant 0 : i32
    %c0_i32_1 = arith.constant 0 : i32
    %c0_i32_2 = arith.constant 0 : i32
    return %c0_i32, %c0_i32_0, %c0_i32_1 : i32, i32, i32
  }
  func.func @transform_2(%arg0: i32, %arg1: i32) -> (i32, i32) {
    %c0_i32 = arith.constant 0 : i32
    %c0_i32_0 = arith.constant 0 : i32
    %c0_i32_1 = arith.constant 0 : i32
    return %c0_i32, %c0_i32_0 : i32, i32
  }
  func.func @transform_3(%arg0: i32, %arg1: i32) -> (i32, i32) {
    %c0_i32 = arith.constant 0 : i32
    %c0_i32_0 = arith.constant 0 : i32
    %c0_i32_1 = arith.constant 0 : i32
    return %c0_i32, %c0_i32_0 : i32, i32
  }
  func.func @transform_4(%arg0: i32, %arg1: i32) -> (i32, i32, i32) {
    %c0_i32 = arith.constant 0 : i32
    %c0_i32_0 = arith.constant 0 : i32
    return %arg0, %arg1, %c0_i32 : i32, i32, i32
  }
}

</mosaic_0001>

<llo_original>
// kernel: run.1
$region0: #{run.1}
  #allocation0 [shape = 'u32[]', space=smem, size = 0x4, offset = 0x4, fixed_abs, tag = 'smem constant byte address 0x4 - core index']
  #allocation1 [shape = 'u32[144,128]{1,0:T(1,128)}', space=vmem, size = 0x12000, scoped, tag = 'internal scratch']
  #allocation2 [shape = 'f32[192,128]{1,0:T(8,128)}', space=vmem, size = 0x18000, scoped, tag = 'scratch operand']
  %s0 = inlined_call_operand.vmem [shape: bf16[2,8,576,256], index: 0, kind: input, shape index: {}]
  %s1 = inlined_call_operand.vmem [shape: bf16[8,256,128], index: 1, kind: input, shape index: {}]
  %s2 = inlined_call_operand.vmem [shape: f32[1,128], index: 2, kind: input, shape index: {}]
  %s3 = inlined_call_operand.vmem [shape: f32[1,128], index: 3, kind: input, shape index: {}]
  %s4 = inlined_call_operand.hbm [shape: f32[2,576,128], index: 4, kind: output, shape index: {}]
  %s5 = sld [smem:[#allocation0]]
  $region87: #{run.1} parent=0
    _
  %s7 = ssub.s32 1, %s5
  %s8 = scalar_select 0, %s7, %s5
  $region1: #{run.1} parent=0
    #allocation3 [shape = 'u8[1572864]{0}', space=vmem, size = 0x180000, scoped, tag = 'input window, operand 0']
    #allocation4 [shape = 'u8[196608]{0}', space=vmem, size = 0x30000, scoped, tag = 'output window, operand 0']
    #allocation5 [shape = 's32[2]{0}', space=sflag, size = 0x8, scoped, tag = 'scoped memory for run.1']
    %9 = vsyncpa [#allocation5], 0
    %s10 = scalar_lea.sflag [#allocation5], 1
    %11 = vsyncpa %s10, 0
    loop: start=0, step=1, limit=8
    $region2: #{run.1} parent=1 // loop_pre_header
      _
    $region3: #{run.1} parent=1 // loop_header
      %s13 = sphi 0, %s17
      %p14 = scmp.ge.s32.totalorder %s13, 8
      %s20 = sphi 0, %s32
      %s21 = sphi 0, %s28
      %s22 = sphi 0, %s20
      %s23 = sphi 0, %s21
      %s24 = sphi 0, %s22
      %s25 = sphi 0, %s23
      %s37 = sphi 0, %s39
      %s40 = sphi 0, %s37
      %s41 = sphi 0, %s40
      %s57 = sphi 0, %s41
      %s61 = sphi 0, %s61
      %s63 = sphi 0, %s61
      %s64 = sphi 0, %s63
      %s78 = sphi 0, %s64
      %s82 = sphi 0, %s82
      %s84 = sphi 0, %s82
      %s85 = sphi 0, %s84
      %s99 = sphi 0, %s85
      %s103 = sphi 0, %s103
      %s105 = sphi 0, %s103
      %s106 = sphi 0, %s105
      %s120 = sphi 0, %s106
      %s128 = sphi 0, %s130
      %s131 = sphi 0, %s128
      %s132 = sphi 0, %s131
      %s148 = sphi 0, %s132
    $region4: #{run.1} parent=1 // loop_header_branch
      %16 = sbr.rel (%p14) target = $region8
    $region5: #{run.1} parent=1 // loop_body
      %s18 = ssub.s32 %s13, 1
      %s19 = ssub.s32 %s13, 2
      %s26 = sadd.s32 1, %s21
      %p27 = scmp.ge.s32.totalorder %s26, 3
      %s28 = scalar_select %p27, 0, %s26
      %s29 = sadd.s32 1, %s20
      %s30 = scalar_select %p27, %s29, %s20
      %p31 = scmp.ge.s32.totalorder %s30, 2
      %s32 = scalar_select %p31, 0, %s30
      %s33 = ssub.s32 %s20, %s32
      %s34 = ssub.s32 %s21, %s28
      %s35 = sor.u32 %s33, %s34
      %p36 = scmp.eq.s32.totalorder %s35, 0
      %s38 = sadd.s32 %s37, 1
      %s39 = scalar_select %p36, %s37, %s38
      %p42 = pneg %p36
      %p43 = scmp.eq.s32.totalorder %s13, 5
      %p44 = por %p42, %p43
      %p45 = scmp.ne.s32.totalorder %s37, %s40
      %p46 = scmp.eq.s32.totalorder %s13, 0
      %p47 = por %p45, %p46
      %p48 = scmp.ne.s32.totalorder %s37, %s40
      %p49 = scmp.eq.s32.totalorder %s18, 5
      %p50 = por %p48, %p49
      %p51 = scmp.ne.s32.totalorder %s40, %s41
      %p52 = scmp.eq.s32.totalorder %s18, 0
      %p53 = por %p51, %p52
      %p54 = scmp.ne.s32.totalorder %s40, %s41
      %p55 = scmp.eq.s32.totalorder %s19, 5
      %p56 = por %p54, %p55
      %p58 = scmp.ne.s32.totalorder %s41, %s57
      %p59 = scmp.eq.s32.totalorder %s19, 0
      %p60 = por %p58, %p59
      %s62 = sadd.s32 %s61, 1
      %p65 = scmp.eq.s32.totalorder %s13, 5
      %p66 = scmp.ne.s32.totalorder %s61, %s63
      %p67 = scmp.eq.s32.totalorder %s13, 0
      %p68 = por %p66, %p67
      %p69 = scmp.ne.s32.totalorder %s61, %s63
      %p70 = scmp.eq.s32.totalorder %s18, 5
      %p71 = por %p69, %p70
      %p72 = scmp.ne.s32.totalorder %s63, %s64
      %p73 = scmp.eq.s32.totalorder %s18, 0
      %p74 = por %p72, %p73
      %p75 = scmp.ne.s32.totalorder %s63, %s64
      %p76 = scmp.eq.s32.totalorder %s19, 5
      %p77 = por %p75, %p76
      %p79 = scmp.ne.s32.totalorder %s64, %s78
      %p80 = scmp.eq.s32.totalorder %s19, 0
      %p81 = por %p79, %p80
      %s83 = sadd.s32 %s82, 1
      %p86 = scmp.eq.s32.totalorder %s13, 5
      %p87 = scmp.ne.s32.totalorder %s82, %s84
      %p88 = scmp.eq.s32.totalorder %s13, 0
      %p89 = por %p87, %p88
      %p90 = scmp.ne.s32.totalorder %s82, %s84
      %p91 = scmp.eq.s32.totalorder %s18, 5
      %p92 = por %p90, %p91
      %p93 = scmp.ne.s32.totalorder %s84, %s85
      %p94 = scmp.eq.s32.totalorder %s18, 0
      %p95 = por %p93, %p94
      %p96 = scmp.ne.s32.totalorder %s84, %s85
      %p97 = scmp.eq.s32.totalorder %s19, 5
      %p98 = por %p96, %p97
      %p100 = scmp.ne.s32.totalorder %s85, %s99
      %p101 = scmp.eq.s32.totalorder %s19, 0
      %p102 = por %p100, %p101
      %s104 = sadd.s32 %s103, 1
      %p107 = scmp.eq.s32.totalorder %s13, 5
      %p108 = scmp.ne.s32.totalorder %s103, %s105
      %p109 = scmp.eq.s32.totalorder %s13, 0
      %p110 = por %p108, %p109
      %p111 = scmp.ne.s32.totalorder %s103, %s105
      %p112 = scmp.eq.s32.totalorder %s18, 5
      %p113 = por %p111, %p112
      %p114 = scmp.ne.s32.totalorder %s105, %s106
      %p115 = scmp.eq.s32.totalorder %s18, 0
      %p116 = por %p114, %p115
      %p117 = scmp.ne.s32.totalorder %s105, %s106
      %p118 = scmp.eq.s32.totalorder %s19, 5
      %p119 = por %p117, %p118
      %p121 = scmp.ne.s32.totalorder %s106, %s120
      %p122 = scmp.eq.s32.totalorder %s19, 0
      %p123 = por %p121, %p122
      %s124 = ssub.s32 %s20, %s32
      %s125 = ssub.s32 %s21, %s28
      %s126 = sor.u32 %s124, %s125
      %p127 = scmp.eq.s32.totalorder %s126, 0
      %s129 = sadd.s32 %s128, 1
      %s130 = scalar_select %p127, %s128, %s129
      %p133 = pneg %p127
      %p134 = scmp.eq.s32.totalorder %s13, 5
      %p135 = por %p133, %p134
      %p136 = scmp.ne.s32.totalorder %s128, %s131
      %p137 = scmp.eq.s32.totalorder %s13, 0
      %p138 = por %p136, %p137
      %p139 = scmp.ne.s32.totalorder %s128, %s131
      %p140 = scmp.eq.s32.totalorder %s18, 5
      %p141 = por %p139, %p140
      %p142 = scmp.ne.s32.totalorder %s131, %s132
      %p143 = scmp.eq.s32.totalorder %s18, 0
      %p144 = por %p142, %p143
      %p145 = scmp.ne.s32.totalorder %s131, %s132
      %p146 = scmp.eq.s32.totalorder %s19, 5
      %p147 = por %p145, %p146
      %p149 = scmp.ne.s32.totalorder %s132, %s148
      %p150 = scmp.eq.s32.totalorder %s19, 0
      %p151 = por %p149, %p150
      %p152 = scmp.le.s32.totalorder 1, %s13
      %p153 = scmp.lt.s32.totalorder %s13, 7
      %p154 = pnand %p152, %p153
      %p155 = pneg %p154
      // Predicated region
      $region9: #{run.1} parent=5 // pred_check
        _
      $region10: #{run.1} parent=5 // pred_check_branch
        %157 = sbr.rel (%p154) target = $region12
      $region11: #{run.1} parent=5 // pred_region
        %s158 = ssub.s32 %s13, 1
        // Predicated region
        $region13: #{run.1} parent=11 // pred_check
          %p159 = pneg %p74
        $region14: #{run.1} parent=11 // pred_check_branch
          %161 = sbr.rel (%p159) target = $region16
        $region15: #{run.1} parent=11 // pred_region
          _
        $region16: #{run.1} parent=11 // pred_fallthru
          _
        // Predicated region
        $region17: #{run.1} parent=11 // pred_check
          %p162 = pneg %p95
        $region18: #{run.1} parent=11 // pred_check_branch
          %164 = sbr.rel (%p162) target = $region20
        $region19: #{run.1} parent=11 // pred_region
          _
        $region20: #{run.1} parent=11 // pred_fallthru
          _
        // Predicated region
        $region21: #{run.1} parent=11 // pred_check
          %p165 = pneg %p116
        $region22: #{run.1} parent=11 // pred_check_branch
          %167 = sbr.rel (%p165) target = $region24
        $region23: #{run.1} parent=11 // pred_region
          _
        $region24: #{run.1} parent=11 // pred_fallthru
          _
      $region12: #{run.1} parent=5 // pred_fallthru
        _
      %p168 = scmp.lt.s32.totalorder %s13, 6
      // Predicated region
      $region25: #{run.1} parent=5 // pred_check
        %p169 = pneg %p168
      $region26: #{run.1} parent=5 // pred_check_branch
        %171 = sbr.rel (%p169) target = $region28
      $region27: #{run.1} parent=5 // pred_region
        // Predicated region
        $region29: #{run.1} parent=27 // pred_check
          %p172 = pneg %p47
        $region30: #{run.1} parent=27 // pred_check_branch
          %174 = sbr.rel (%p172) target = $region32
        $region31: #{run.1} parent=27 // pred_region
          %s175 = sand.u32 %s37, 1
          %s176 = sand.u32 %s37, 1
          %s177 = smul.addr %s176, 1536
          %s178 = scalar_lea.vmem [#allocation3], %s177
          %s179 = smul.u32 24, %s21
          %s180 = smul.addr %s179, 2
          %s181 = smul.addr %s20, 1152
          %s182 = sadd.s32 %s180, %s181
          %s183 = smul.addr %s182, 4
          %s184 = scalar_lea.vmem %s0, %s183
          // Predicated region
          $region33: #{run.1} parent=31 // pred_check
            _
          $region34: #{run.1} parent=31 // pred_check_branch
            %186 = sbr.rel (0) target = $region36
          $region35: #{run.1} parent=31 // pred_region
            // Predicated region
            $region37: #{run.1} parent=35 // pred_check
              _
            $region38: #{run.1} parent=35 // pred_check_branch
              %188 = sbr.rel (0) target = $region40
            $region39: #{run.1} parent=35 // pred_region
              // Predicated region
              $region52: #{run.1} parent=39 // pred_check
                _
              $region53: #{run.1} parent=39 // pred_check_branch
                %585 = sbr.rel (0) target = $region55
              $region54: #{run.1} parent=39 // pred_region
                loop: start=0, step=1, limit=1
                $region56: #{run.1} parent=54 // loop_pre_header
                  _
                $region57: #{run.1} parent=54 // loop_header
                  %s587 = sphi 0, %s591
                  %p588 = scmp.ge.s32.totalorder %s587, 1
                  %s592 = sphi %s184, %s184
                  %s593 = sphi %s178, %s178
                $region58: #{run.1} parent=54 // loop_header_branch
                  %590 = sbr.rel (%p588) target = $region62
                $region59: #{run.1} parent=54 // loop_body
                  %v594 = vld [vmem:[%s592] sm:$0xff]
                  %595 = vst [vmem:[%s593] sm:$0xff] %v594
                  %v596 = vld [vmem:[%s592 + $0x8] sm:$0xff]
                  %597 = vst [vmem:[%s593 + $0x8] sm:$0xff] %v596
                  %v598 = vld [vmem:[%s592 + $0x10] sm:$0xff]
                  %599 = vst [vmem:[%s593 + $0x10] sm:$0xff] %v598
                  %v600 = vld [vmem:[%s592 + $0x18] sm:$0xff]
                  %601 = vst [vmem:[%s593 + $0x18] sm:$0xff] %v600
                  %v602 = vld [vmem:[%s592 + $0x20] sm:$0xff]
                  %603 = vst [vmem:[%s593 + $0x20] sm:$0xff] %v602
                  %v604 = vld [vmem:[%s592 + $0x28] sm:$0xff]
                  %605 = vst [vmem:[%s593 + $0x28] sm:$0xff] %v604
                  %v606 = vld [vmem:[%s592 + $0x30] sm:$0xff]
                  %607 = vst [vmem:[%s593 + $0x30] sm:$0xff] %v606
                  %v608 = vld [vmem:[%s592 + $0x38] sm:$0xff]
                  %609 = vst [vmem:[%s593 + $0x38] sm:$0xff] %v608
                  %v610 = vld [vmem:[%s592 + $0x40] sm:$0xff]
                  %611 = vst [vmem:[%s593 + $0x40] sm:$0xff] %v610
                  %v612 = vld [vmem:[%s592 + $0x48] sm:$0xff]
                  %613 = vst [vmem:[%s593 + $0x48] sm:$0xff] %v612
                  %v614 = vld [vmem:[%s592 + $0x50] sm:$0xff]
                  %615 = vst [vmem:[%s593 + $0x50] sm:$0xff] %v614
                  %v616 = vld [vmem:[%s592 + $0x58] sm:$0xff]
                  %617 = vst [vmem:[%s593 + $0x58] sm:$0xff] %v616
                  %v618 = vld [vmem:[%s592 + $0x60] sm:$0xff]
                  %619 = vst [vmem:[%s593 + $0x60] sm:$0xff] %v618
                  %v620 = vld [vmem:[%s592 + $0x68] sm:$0xff]
                  %621 = vst [vmem:[%s593 + $0x68] sm:$0xff] %v620
                  %v622 = vld [vmem:[%s592 + $0x70] sm:$0xff]
                  %623 = vst [vmem:[%s593 + $0x70] sm:$0xff] %v622
                  %v624 = vld [vmem:[%s592 + $0x78] sm:$0xff]
                  %625 = vst [vmem:[%s593 + $0x78] sm:$0xff] %v624
                  %v626 = vld [vmem:[%s592 + $0x80] sm:$0xff]
                  %627 = vst [vmem:[%s593 + $0x80] sm:$0xff] %v626
                  %v628 = vld [vmem:[%s592 + $0x88] sm:$0xff]
                  %629 = vst [vmem:[%s593 + $0x88] sm:$0xff] %v628
                  %v630 = vld [vmem:[%s592 + $0x90] sm:$0xff]
                  %631 = vst [vmem:[%s593 + $0x90] sm:$0xff] %v630
                  %v632 = vld [vmem:[%s592 + $0x98] sm:$0xff]
                  %633 = vst [vmem:[%s593 + $0x98] sm:$0xff] %v632
                  %v634 = vld [vmem:[%s592 + $0xa0] sm:$0xff]
                  %635 = vst [vmem:[%s593 + $0xa0] sm:$0xff] %v634
                  %v636 = vld [vmem:[%s592 + $0xa8] sm:$0xff]
                  %637 = vst [vmem:[%s593 + $0xa8] sm:$0xff] %v636
                  %v638 = vld [vmem:[%s592 + $0xb0] sm:$0xff]
                  %639 = vst [vmem:[%s593 + $0xb0] sm:$0xff] %v638
                  %v640 = vld [vmem:[%s592 + $0xb8] sm:$0xff]
                  %641 = vst [vmem:[%s593 + $0xb8] sm:$0xff] %v640
                  %v642 = vld [vmem:[%s592 + $0x240] sm:$0xff]
                  %643 = vst [vmem:[%s593 + $0xc0] sm:$0xff] %v642
                  %v644 = vld [vmem:[%s592 + $0x248] sm:$0xff]
                  %645 = vst [vmem:[%s593 + $0xc8] sm:$0xff] %v644
                  %v646 = vld [vmem:[%s592 + $0x250] sm:$0xff]
                  %647 = vst [vmem:[%s593 + $0xd0] sm:$0xff] %v646
                  %v648 = vld [vmem:[%s592 + $0x258] sm:$0xff]
                  %649 = vst [vmem:[%s593 + $0xd8] sm:$0xff] %v648
                  %v650 = vld [vmem:[%s592 + $0x260] sm:$0xff]
                  %651 = vst [vmem:[%s593 + $0xe0] sm:$0xff] %v650
                  %v652 = vld [vmem:[%s592 + $0x268] sm:$0xff]
                  %653 = vst [vmem:[%s593 + $0xe8] sm:$0xff] %v652
                  %v654 = vld [vmem:[%s592 + $0x270] sm:$0xff]
                  %655 = vst [vmem:[%s593 + $0xf0] sm:$0xff] %v654
                  %v656 = vld [vmem:[%s592 + $0x278] sm:$0xff]
                  %657 = vst [vmem:[%s593 + $0xf8] sm:$0xff] %v656
                  %v658 = vld [vmem:[%s592 + $0x280] sm:$0xff]
                  %659 = vst [vmem:[%s593 + $0x100] sm:$0xff] %v658
                  %v660 = vld [vmem:[%s592 + $0x288] sm:$0xff]
                  %661 = vst [vmem:[%s593 + $0x108] sm:$0xff] %v660
                  %v662 = vld [vmem:[%s592 + $0x290] sm:$0xff]
                  %663 = vst [vmem:[%s593 + $0x110] sm:$0xff] %v662
                  %v664 = vld [vmem:[%s592 + $0x298] sm:$0xff]
                  %665 = vst [vmem:[%s593 + $0x118] sm:$0xff] %v664
                  %v666 = vld [vmem:[%s592 + $0x2a0] sm:$0xff]
                  %667 = vst [vmem:[%s593 + $0x120] sm:$0xff] %v666
                  %v668 = vld [vmem:[%s592 + $0x2a8] sm:$0xff]
                  %669 = vst [vmem:[%s593 + $0x128] sm:$0xff] %v668
                  %v670 = vld [vmem:[%s592 + $0x2b0] sm:$0xff]
                  %671 = vst [vmem:[%s593 + $0x130] sm:$0xff] %v670
                  %v672 = vld [vmem:[%s592 + $0x2b8] sm:$0xff]
                  %673 = vst [vmem:[%s593 + $0x138] sm:$0xff] %v672
                  %v674 = vld [vmem:[%s592 + $0x2c0] sm:$0xff]
                  %675 = vst [vmem:[%s593 + $0x140] sm:$0xff] %v674
                  %v676 = vld [vmem:[%s592 + $0x2c8] sm:$0xff]
                  %677 = vst [vmem:[%s593 + $0x148] sm:$0xff] %v676
                  %v678 = vld [vmem:[%s592 + $0x2d0] sm:$0xff]
                  %679 = vst [vmem:[%s593 + $0x150] sm:$0xff] %v678
                  %v680 = vld [vmem:[%s592 + $0x2d8] sm:$0xff]
                  %681 = vst [vmem:[%s593 + $0x158] sm:$0xff] %v680
                  %v682 = vld [vmem:[%s592 + $0x2e0] sm:$0xff]
                  %683 = vst [vmem:[%s593 + $0x160] sm:$0xff] %v682
                  %v684 = vld [vmem:[%s592 + $0x2e8] sm:$0xff]
                  %685 = vst [vmem:[%s593 + $0x168] sm:$0xff] %v684
                  %v686 = vld [vmem:[%s592 + $0x2f0] sm:$0xff]
                  %687 = vst [vmem:[%s593 + $0x170] sm:$0xff] %v686
                  %v688 = vld [vmem:[%s592 + $0x2f8] sm:$0xff]
                  %689 = vst [vmem:[%s593 + $0x178] sm:$0xff] %v688
                  %v690 = vld [vmem:[%s592 + $0x480] sm:$0xff]
                  %691 = vst [vmem:[%s593 + $0x180] sm:$0xff] %v690
                  %v692 = vld [vmem:[%s592 + $0x488] sm:$0xff]
                  %693 = vst [vmem:[%s593 + $0x188] sm:$0xff] %v692
                  %v694 = vld [vmem:[%s592 + $0x490] sm:$0xff]
                  %695 = vst [vmem:[%s593 + $0x190] sm:$0xff] %v694
                  %v696 = vld [vmem:[%s592 + $0x498] sm:$0xff]
                  %697 = vst [vmem:[%s593 + $0x198] sm:$0xff] %v696
                  %v698 = vld [vmem:[%s592 + $0x4a0] sm:$0xff]
                  %699 = vst [vmem:[%s593 + $0x1a0] sm:$0xff] %v698
                  %v700 = vld [vmem:[%s592 + $0x4a8] sm:$0xff]
                  %701 = vst [vmem:[%s593 + $0x1a8] sm:$0xff] %v700
                  %v702 = vld [vmem:[%s592 + $0x4b0] sm:$0xff]
                  %703 = vst [vmem:[%s593 + $0x1b0] sm:$0xff] %v702
                  %v704 = vld [vmem:[%s592 + $0x4b8] sm:$0xff]
                  %705 = vst [vmem:[%s593 + $0x1b8] sm:$0xff] %v704
                  %v706 = vld [vmem:[%s592 + $0x4c0] sm:$0xff]
                  %707 = vst [vmem:[%s593 + $0x1c0] sm:$0xff] %v706
                  %v708 = vld [vmem:[%s592 + $0x4c8] sm:$0xff]
                  %709 = vst [vmem:[%s593 + $0x1c8] sm:$0xff] %v708
                  %v710 = vld [vmem:[%s592 + $0x4d0] sm:$0xff]
                  %711 = vst [vmem:[%s593 + $0x1d0] sm:$0xff] %v710
                  %v712 = vld [vmem:[%s592 + $0x4d8] sm:$0xff]
                  %713 = vst [vmem:[%s593 + $0x1d8] sm:$0xff] %v712
                  %v714 = vld [vmem:[%s592 + $0x4e0] sm:$0xff]
                  %715 = vst [vmem:[%s593 + $0x1e0] sm:$0xff] %v714
                  %v716 = vld [vmem:[%s592 + $0x4e8] sm:$0xff]
                  %717 = vst [vmem:[%s593 + $0x1e8] sm:$0xff] %v716
                  %v718 = vld [vmem:[%s592 + $0x4f0] sm:$0xff]
                  %719 = vst [vmem:[%s593 + $0x1f0] sm:$0xff] %v718
                  %v720 = vld [vmem:[%s592 + $0x4f8] sm:$0xff]
                  %721 = vst [vmem:[%s593 + $0x1f8] sm:$0xff] %v720
                  %v722 = vld [vmem:[%s592 + $0x500] sm:$0xff]
                  %723 = vst [vmem:[%s593 + $0x200] sm:$0xff] %v722
                  %v724 = vld [vmem:[%s592 + $0x508] sm:$0xff]
                  %725 = vst [vmem:[%s593 + $0x208] sm:$0xff] %v724
                  %v726 = vld [vmem:[%s592 + $0x510] sm:$0xff]
                  %727 = vst [vmem:[%s593 + $0x210] sm:$0xff] %v726
                  %v728 = vld [vmem:[%s592 + $0x518] sm:$0xff]
                  %729 = vst [vmem:[%s593 + $0x218] sm:$0xff] %v728
                  %v730 = vld [vmem:[%s592 + $0x520] sm:$0xff]
                  %731 = vst [vmem:[%s593 + $0x220] sm:$0xff] %v730
                  %v732 = vld [vmem:[%s592 + $0x528] sm:$0xff]
                  %733 = vst [vmem:[%s593 + $0x228] sm:$0xff] %v732
                  %v734 = vld [vmem:[%s592 + $0x530] sm:$0xff]
                  %735 = vst [vmem:[%s593 + $0x230] sm:$0xff] %v734
                  %v736 = vld [vmem:[%s592 + $0x538] sm:$0xff]
                  %737 = vst [vmem:[%s593 + $0x238] sm:$0xff] %v736
                  %v738 = vld [vmem:[%s592 + $0x6c0] sm:$0xff]
                  %739 = vst [vmem:[%s593 + $0x240] sm:$0xff] %v738
                  %v740 = vld [vmem:[%s592 + $0x6c8] sm:$0xff]
                  %741 = vst [vmem:[%s593 + $0x248] sm:$0xff] %v740
                  %v742 = vld [vmem:[%s592 + $0x6d0] sm:$0xff]
                  %743 = vst [vmem:[%s593 + $0x250] sm:$0xff] %v742
                  %v744 = vld [vmem:[%s592 + $0x6d8] sm:$0xff]
                  %745 = vst [vmem:[%s593 + $0x258] sm:$0xff] %v744
                  %v746 = vld [vmem:[%s592 + $0x6e0] sm:$0xff]
                  %747 = vst [vmem:[%s593 + $0x260] sm:$0xff] %v746
                  %v748 = vld [vmem:[%s592 + $0x6e8] sm:$0xff]
                  %749 = vst [vmem:[%s593 + $0x268] sm:$0xff] %v748
                  %v750 = vld [vmem:[%s592 + $0x6f0] sm:$0xff]
                  %751 = vst [vmem:[%s593 + $0x270] sm:$0xff] %v750
                  %v752 = vld [vmem:[%s592 + $0x6f8] sm:$0xff]
                  %753 = vst [vmem:[%s593 + $0x278] sm:$0xff] %v752
                  %v754 = vld [vmem:[%s592 + $0x700] sm:$0xff]
                  %755 = vst [vmem:[%s593 + $0x280] sm:$0xff] %v754
                  %v756 = vld [vmem:[%s592 + $0x708] sm:$0xff]
                  %757 = vst [vmem:[%s593 + $0x288] sm:$0xff] %v756
                  %v758 = vld [vmem:[%s592 + $0x710] sm:$0xff]
                  %759 = vst [vmem:[%s593 + $0x290] sm:$0xff] %v758
                  %v760 = vld [vmem:[%s592 + $0x718] sm:$0xff]
                  %761 = vst [vmem:[%s593 + $0x298] sm:$0xff] %v760
                  %v762 = vld [vmem:[%s592 + $0x720] sm:$0xff]
                  %763 = vst [vmem:[%s593 + $0x2a0] sm:$0xff] %v762
                  %v764 = vld [vmem:[%s592 + $0x728] sm:$0xff]
                  %765 = vst [vmem:[%s593 + $0x2a8] sm:$0xff] %v764
                  %v766 = vld [vmem:[%s592 + $0x730] sm:$0xff]
                  %767 = vst [vmem:[%s593 + $0x2b0] sm:$0xff] %v766
                  %v768 = vld [vmem:[%s592 + $0x738] sm:$0xff]
                  %769 = vst [vmem:[%s593 + $0x2b8] sm:$0xff] %v768
                  %v770 = vld [vmem:[%s592 + $0x740] sm:$0xff]
                  %771 = vst [vmem:[%s593 + $0x2c0] sm:$0xff] %v770
                  %v772 = vld [vmem:[%s592 + $0x748] sm:$0xff]
                  %773 = vst [vmem:[%s593 + $0x2c8] sm:$0xff] %v772
                  %v774 = vld [vmem:[%s592 + $0x750] sm:$0xff]
                  %775 = vst [vmem:[%s593 + $0x2d0] sm:$0xff] %v774
                  %v776 = vld [vmem:[%s592 + $0x758] sm:$0xff]
                  %777 = vst [vmem:[%s593 + $0x2d8] sm:$0xff] %v776
                  %v778 = vld [vmem:[%s592 + $0x760] sm:$0xff]
                  %779 = vst [vmem:[%s593 + $0x2e0] sm:$0xff] %v778
                  %v780 = vld [vmem:[%s592 + $0x768] sm:$0xff]
                  %781 = vst [vmem:[%s593 + $0x2e8] sm:$0xff] %v780
                  %v782 = vld [vmem:[%s592 + $0x770] sm:$0xff]
                  %783 = vst [vmem:[%s593 + $0x2f0] sm:$0xff] %v782
                  %v784 = vld [vmem:[%s592 + $0x778] sm:$0xff]
                  %785 = vst [vmem:[%s593 + $0x2f8] sm:$0xff] %v784
                  %v786 = vld [vmem:[%s592 + $0x900] sm:$0xff]
                  %787 = vst [vmem:[%s593 + $0x300] sm:$0xff] %v786
                  %v788 = vld [vmem:[%s592 + $0x908] sm:$0xff]
                  %789 = vst [vmem:[%s593 + $0x308] sm:$0xff] %v788
                  %v790 = vld [vmem:[%s592 + $0x910] sm:$0xff]
                  %791 = vst [vmem:[%s593 + $0x310] sm:$0xff] %v790
                  %v792 = vld [vmem:[%s592 + $0x918] sm:$0xff]
                  %793 = vst [vmem:[%s593 + $0x318] sm:$0xff] %v792
                  %v794 = vld [vmem:[%s592 + $0x920] sm:$0xff]
                  %795 = vst [vmem:[%s593 + $0x320] sm:$0xff] %v794
                  %v796 = vld [vmem:[%s592 + $0x928] sm:$0xff]
                  %797 = vst [vmem:[%s593 + $0x328] sm:$0xff] %v796
                  %v798 = vld [vmem:[%s592 + $0x930] sm:$0xff]
                  %799 = vst [vmem:[%s593 + $0x330] sm:$0xff] %v798
                  %v800 = vld [vmem:[%s592 + $0x938] sm:$0xff]
                  %801 = vst [vmem:[%s593 + $0x338] sm:$0xff] %v800
                  %v802 = vld [vmem:[%s592 + $0x940] sm:$0xff]
                  %803 = vst [vmem:[%s593 + $0x340] sm:$0xff] %v802
                  %v804 = vld [vmem:[%s592 + $0x948] sm:$0xff]
                  %805 = vst [vmem:[%s593 + $0x348] sm:$0xff] %v804
                  %v806 = vld [vmem:[%s592 + $0x950] sm:$0xff]
                  %807 = vst [vmem:[%s593 + $0x350] sm:$0xff] %v806
                  %v808 = vld [vmem:[%s592 + $0x958] sm:$0xff]
                  %809 = vst [vmem:[%s593 + $0x358] sm:$0xff] %v808
                  %v810 = vld [vmem:[%s592 + $0x960] sm:$0xff]
                  %811 = vst [vmem:[%s593 + $0x360] sm:$0xff] %v810
                  %v812 = vld [vmem:[%s592 + $0x968] sm:$0xff]
                  %813 = vst [vmem:[%s593 + $0x368] sm:$0xff] %v812
                  %v814 = vld [vmem:[%s592 + $0x970] sm:$0xff]
                  %815 = vst [vmem:[%s593 + $0x370] sm:$0xff] %v814
                  %v816 = vld [vmem:[%s592 + $0x978] sm:$0xff]
                  %817 = vst [vmem:[%s593 + $0x378] sm:$0xff] %v816
                  %v818 = vld [vmem:[%s592 + $0x980] sm:$0xff]
                  %819 = vst [vmem:[%s593 + $0x380] sm:$0xff] %v818
                  %v820 = vld [vmem:[%s592 + $0x988] sm:$0xff]
                  %821 = vst [vmem:[%s593 + $0x388] sm:$0xff] %v820
                  %v822 = vld [vmem:[%s592 + $0x990] sm:$0xff]
                  %823 = vst [vmem:[%s593 + $0x390] sm:$0xff] %v822
                  %v824 = vld [vmem:[%s592 + $0x998] sm:$0xff]
                  %825 = vst [vmem:[%s593 + $0x398] sm:$0xff] %v824
                  %v826 = vld [vmem:[%s592 + $0x9a0] sm:$0xff]
                  %827 = vst [vmem:[%s593 + $0x3a0] sm:$0xff] %v826
                  %v828 = vld [vmem:[%s592 + $0x9a8] sm:$0xff]
                  %829 = vst [vmem:[%s593 + $0x3a8] sm:$0xff] %v828
                  %v830 = vld [vmem:[%s592 + $0x9b0] sm:$0xff]
                  %831 = vst [vmem:[%s593 + $0x3b0] sm:$0xff] %v830
                  %v832 = vld [vmem:[%s592 + $0x9b8] sm:$0xff]
                  %833 = vst [vmem:[%s593 + $0x3b8] sm:$0xff] %v832
                  %v834 = vld [vmem:[%s592 + $0xb40] sm:$0xff]
                  %835 = vst [vmem:[%s593 + $0x3c0] sm:$0xff] %v834
                  %v836 = vld [vmem:[%s592 + $0xb48] sm:$0xff]
                  %837 = vst [vmem:[%s593 + $0x3c8] sm:$0xff] %v836
                  %v838 = vld [vmem:[%s592 + $0xb50] sm:$0xff]
                  %839 = vst [vmem:[%s593 + $0x3d0] sm:$0xff] %v838
                  %v840 = vld [vmem:[%s592 + $0xb58] sm:$0xff]
                  %841 = vst [vmem:[%s593 + $0x3d8] sm:$0xff] %v840
                  %v842 = vld [vmem:[%s592 + $0xb60] sm:$0xff]
                  %843 = vst [vmem:[%s593 + $0x3e0] sm:$0xff] %v842
                  %v844 = vld [vmem:[%s592 + $0xb68] sm:$0xff]
                  %845 = vst [vmem:[%s593 + $0x3e8] sm:$0xff] %v844
                  %v846 = vld [vmem:[%s592 + $0xb70] sm:$0xff]
                  %847 = vst [vmem:[%s593 + $0x3f0] sm:$0xff] %v846
                  %v848 = vld [vmem:[%s592 + $0xb78] sm:$0xff]
                  %849 = vst [vmem:[%s593 + $0x3f8] sm:$0xff] %v848
                  %v850 = vld [vmem:[%s592 + $0xb80] sm:$0xff]
                  %851 = vst [vmem:[%s593 + $0x400] sm:$0xff] %v850
                  %v852 = vld [vmem:[%s592 + $0xb88] sm:$0xff]
                  %853 = vst [vmem:[%s593 + $0x408] sm:$0xff] %v852
                  %v854 = vld [vmem:[%s592 + $0xb90] sm:$0xff]
                  %855 = vst [vmem:[%s593 + $0x410] sm:$0xff] %v854
                  %v856 = vld [vmem:[%s592 + $0xb98] sm:$0xff]
                  %857 = vst [vmem:[%s593 + $0x418] sm:$0xff] %v856
                  %v858 = vld [vmem:[%s592 + $0xba0] sm:$0xff]
                  %859 = vst [vmem:[%s593 + $0x420] sm:$0xff] %v858
                  %v860 = vld [vmem:[%s592 + $0xba8] sm:$0xff]
                  %861 = vst [vmem:[%s593 + $0x428] sm:$0xff] %v860
                  %v862 = vld [vmem:[%s592 + $0xbb0] sm:$0xff]
                  %863 = vst [vmem:[%s593 + $0x430] sm:$0xff] %v862
                  %v864 = vld [vmem:[%s592 + $0xbb8] sm:$0xff]
                  %865 = vst [vmem:[%s593 + $0x438] sm:$0xff] %v864
                  %v866 = vld [vmem:[%s592 + $0xbc0] sm:$0xff]
                  %867 = vst [vmem:[%s593 + $0x440] sm:$0xff] %v866
                  %v868 = vld [vmem:[%s592 + $0xbc8] sm:$0xff]
                  %869 = vst [vmem:[%s593 + $0x448] sm:$0xff] %v868
                  %v870 = vld [vmem:[%s592 + $0xbd0] sm:$0xff]
                  %871 = vst [vmem:[%s593 + $0x450] sm:$0xff] %v870
                  %v872 = vld [vmem:[%s592 + $0xbd8] sm:$0xff]
                  %873 = vst [vmem:[%s593 + $0x458] sm:$0xff] %v872
                  %v874 = vld [vmem:[%s592 + $0xbe0] sm:$0xff]
                  %875 = vst [vmem:[%s593 + $0x460] sm:$0xff] %v874
                  %v876 = vld [vmem:[%s592 + $0xbe8] sm:$0xff]
                  %877 = vst [vmem:[%s593 + $0x468] sm:$0xff] %v876
                  %v878 = vld [vmem:[%s592 + $0xbf0] sm:$0xff]
                  %879 = vst [vmem:[%s593 + $0x470] sm:$0xff] %v878
                  %v880 = vld [vmem:[%s592 + $0xbf8] sm:$0xff]
                  %881 = vst [vmem:[%s593 + $0x478] sm:$0xff] %v880
                  %v882 = vld [vmem:[%s592 + $0xd80] sm:$0xff]
                  %883 = vst [vmem:[%s593 + $0x480] sm:$0xff] %v882
                  %v884 = vld [vmem:[%s592 + $0xd88] sm:$0xff]
                  %885 = vst [vmem:[%s593 + $0x488] sm:$0xff] %v884
                  %v886 = vld [vmem:[%s592 + $0xd90] sm:$0xff]
                  %887 = vst [vmem:[%s593 + $0x490] sm:$0xff] %v886
                  %v888 = vld [vmem:[%s592 + $0xd98] sm:$0xff]
                  %889 = vst [vmem:[%s593 + $0x498] sm:$0xff] %v888
                  %v890 = vld [vmem:[%s592 + $0xda0] sm:$0xff]
                  %891 = vst [vmem:[%s593 + $0x4a0] sm:$0xff] %v890
                  %v892 = vld [vmem:[%s592 + $0xda8] sm:$0xff]
                  %893 = vst [vmem:[%s593 + $0x4a8] sm:$0xff] %v892
                  %v894 = vld [vmem:[%s592 + $0xdb0] sm:$0xff]
                  %895 = vst [vmem:[%s593 + $0x4b0] sm:$0xff] %v894
                  %v896 = vld [vmem:[%s592 + $0xdb8] sm:$0xff]
                  %897 = vst [vmem:[%s593 + $0x4b8] sm:$0xff] %v896
                  %v898 = vld [vmem:[%s592 + $0xdc0] sm:$0xff]
                  %899 = vst [vmem:[%s593 + $0x4c0] sm:$0xff] %v898
                  %v900 = vld [vmem:[%s592 + $0xdc8] sm:$0xff]
                  %901 = vst [vmem:[%s593 + $0x4c8] sm:$0xff] %v900
                  %v902 = vld [vmem:[%s592 + $0xdd0] sm:$0xff]
                  %903 = vst [vmem:[%s593 + $0x4d0] sm:$0xff] %v902
                  %v904 = vld [vmem:[%s592 + $0xdd8] sm:$0xff]
                  %905 = vst [vmem:[%s593 + $0x4d8] sm:$0xff] %v904
                  %v906 = vld [vmem:[%s592 + $0xde0] sm:$0xff]
                  %907 = vst [vmem:[%s593 + $0x4e0] sm:$0xff] %v906
                  %v908 = vld [vmem:[%s592 + $0xde8] sm:$0xff]
                  %909 = vst [vmem:[%s593 + $0x4e8] sm:$0xff] %v908
                  %v910 = vld [vmem:[%s592 + $0xdf0] sm:$0xff]
                  %911 = vst [vmem:[%s593 + $0x4f0] sm:$0xff] %v910
                  %v912 = vld [vmem:[%s592 + $0xdf8] sm:$0xff]
                  %913 = vst [vmem:[%s593 + $0x4f8] sm:$0xff] %v912
                  %v914 = vld [vmem:[%s592 + $0xe00] sm:$0xff]
                  %915 = vst [vmem:[%s593 + $0x500] sm:$0xff] %v914
                  %v916 = vld [vmem:[%s592 + $0xe08] sm:$0xff]
                  %917 = vst [vmem:[%s593 + $0x508] sm:$0xff] %v916
                  %v918 = vld [vmem:[%s592 + $0xe10] sm:$0xff]
                  %919 = vst [vmem:[%s593 + $0x510] sm:$0xff] %v918
                  %v920 = vld [vmem:[%s592 + $0xe18] sm:$0xff]
                  %921 = vst [vmem:[%s593 + $0x518] sm:$0xff] %v920
                  %v922 = vld [vmem:[%s592 + $0xe20] sm:$0xff]
                  %923 = vst [vmem:[%s593 + $0x520] sm:$0xff] %v922
                  %v924 = vld [vmem:[%s592 + $0xe28] sm:$0xff]
                  %925 = vst [vmem:[%s593 + $0x528] sm:$0xff] %v924
                  %v926 = vld [vmem:[%s592 + $0xe30] sm:$0xff]
                  %927 = vst [vmem:[%s593 + $0x530] sm:$0xff] %v926
                  %v928 = vld [vmem:[%s592 + $0xe38] sm:$0xff]
                  %929 = vst [vmem:[%s593 + $0x538] sm:$0xff] %v928
                  %v930 = vld [vmem:[%s592 + $0xfc0] sm:$0xff]
                  %931 = vst [vmem:[%s593 + $0x540] sm:$0xff] %v930
                  %v932 = vld [vmem:[%s592 + $0xfc8] sm:$0xff]
                  %933 = vst [vmem:[%s593 + $0x548] sm:$0xff] %v932
                  %v934 = vld [vmem:[%s592 + $0xfd0] sm:$0xff]
                  %935 = vst [vmem:[%s593 + $0x550] sm:$0xff] %v934
                  %v936 = vld [vmem:[%s592 + $0xfd8] sm:$0xff]
                  %937 = vst [vmem:[%s593 + $0x558] sm:$0xff] %v936
                  %v938 = vld [vmem:[%s592 + $0xfe0] sm:$0xff]
                  %939 = vst [vmem:[%s593 + $0x560] sm:$0xff] %v938
                  %v940 = vld [vmem:[%s592 + $0xfe8] sm:$0xff]
                  %941 = vst [vmem:[%s593 + $0x568] sm:$0xff] %v940
                  %v942 = vld [vmem:[%s592 + $0xff0] sm:$0xff]
                  %943 = vst [vmem:[%s593 + $0x570] sm:$0xff] %v942
                  %v944 = vld [vmem:[%s592 + $0xff8] sm:$0xff]
                  %945 = vst [vmem:[%s593 + $0x578] sm:$0xff] %v944
                  %v946 = vld [vmem:[%s592 + $0x1000] sm:$0xff]
                  %947 = vst [vmem:[%s593 + $0x580] sm:$0xff] %v946
                  %v948 = vld [vmem:[%s592 + $0x1008] sm:$0xff]
                  %949 = vst [vmem:[%s593 + $0x588] sm:$0xff] %v948
                  %v950 = vld [vmem:[%s592 + $0x1010] sm:$0xff]
                  %951 = vst [vmem:[%s593 + $0x590] sm:$0xff] %v950
                  %v952 = vld [vmem:[%s592 + $0x1018] sm:$0xff]
                  %953 = vst [vmem:[%s593 + $0x598] sm:$0xff] %v952
                  %v954 = vld [vmem:[%s592 + $0x1020] sm:$0xff]
                  %955 = vst [vmem:[%s593 + $0x5a0] sm:$0xff] %v954
                  %v956 = vld [vmem:[%s592 + $0x1028] sm:$0xff]
                  %957 = vst [vmem:[%s593 + $0x5a8] sm:$0xff] %v956
                  %v958 = vld [vmem:[%s592 + $0x1030] sm:$0xff]
                  %959 = vst [vmem:[%s593 + $0x5b0] sm:$0xff] %v958
                  %v960 = vld [vmem:[%s592 + $0x1038] sm:$0xff]
                  %961 = vst [vmem:[%s593 + $0x5b8] sm:$0xff] %v960
                  %v962 = vld [vmem:[%s592 + $0x1040] sm:$0xff]
                  %963 = vst [vmem:[%s593 + $0x5c0] sm:$0xff] %v962
                  %v964 = vld [vmem:[%s592 + $0x1048] sm:$0xff]
                  %965 = vst [vmem:[%s593 + $0x5c8] sm:$0xff] %v964
                  %v966 = vld [vmem:[%s592 + $0x1050] sm:$0xff]
                  %967 = vst [vmem:[%s593 + $0x5d0] sm:$0xff] %v966
                  %v968 = vld [vmem:[%s592 + $0x1058] sm:$0xff]
                  %969 = vst [vmem:[%s593 + $0x5d8] sm:$0xff] %v968
                  %v970 = vld [vmem:[%s592 + $0x1060] sm:$0xff]
                  %971 = vst [vmem:[%s593 + $0x5e0] sm:$0xff] %v970
                  %v972 = vld [vmem:[%s592 + $0x1068] sm:$0xff]
                  %973 = vst [vmem:[%s593 + $0x5e8] sm:$0xff] %v972
                  %v974 = vld [vmem:[%s592 + $0x1070] sm:$0xff]
                  %975 = vst [vmem:[%s593 + $0x5f0] sm:$0xff] %v974
                  %v976 = vld [vmem:[%s592 + $0x1078] sm:$0xff]
                  %977 = vst [vmem:[%s593 + $0x5f8] sm:$0xff] %v976
                $region60: #{run.1} parent=54 // loop_footer
                  %s591 = sadd.s32 1, %s587
                $region61: #{run.1} parent=54 // loop_footer_branch
                  %586 = sbr.rel target = $region57
                $region62: #{run.1} parent=54 // loop_exit
                  _
              $region55: #{run.1} parent=39 // pred_fallthru
                _
              // Predicated region
              $region63: #{run.1} parent=39 // pred_check
                _
              $region64: #{run.1} parent=39 // pred_check_branch
                %979 = sbr.rel target = $region66
              $region65: #{run.1} parent=39 // pred_region
                _
              $region66: #{run.1} parent=39 // pred_fallthru
                _
            $region40: #{run.1} parent=35 // pred_fallthru
              _
            // Predicated region
            $region41: #{run.1} parent=35 // pred_check
              _
            $region42: #{run.1} parent=35 // pred_check_branch
              %190 = sbr.rel target = $region44
            $region43: #{run.1} parent=35 // pred_region
              loop: start=0, step=1, limit=1
              $region45: #{run.1} parent=43 // loop_pre_header
                _
              $region46: #{run.1} parent=43 // loop_header
                %s193 = sphi 0, %s197
                %p194 = scmp.ge.s32.totalorder %s193, 1
                %s198 = sphi %s184, %s184
                %s199 = sphi %s178, %s178
              $region47: #{run.1} parent=43 // loop_header_branch
                %196 = sbr.rel (%p194) target = $region51
              $region48: #{run.1} parent=43 // loop_body
                %v200 = vld [vmem:[%s198] sm:$0xff]
                %201 = vst [vmem:[%s199] sm:$0xff] %v200
                %v202 = vld [vmem:[%s198 + $0x8] sm:$0xff]
                %203 = vst [vmem:[%s199 + $0x8] sm:$0xff] %v202
                %v204 = vld [vmem:[%s198 + $0x10] sm:$0xff]
                %205 = vst [vmem:[%s199 + $0x10] sm:$0xff] %v204
                %v206 = vld [vmem:[%s198 + $0x18] sm:$0xff]
                %207 = vst [vmem:[%s199 + $0x18] sm:$0xff] %v206
                %v208 = vld [vmem:[%s198 + $0x20] sm:$0xff]
                %209 = vst [vmem:[%s199 + $0x20] sm:$0xff] %v208
                %v210 = vld [vmem:[%s198 + $0x28] sm:$0xff]
                %211 = vst [vmem:[%s199 + $0x28] sm:$0xff] %v210
                %v212 = vld [vmem:[%s198 + $0x30] sm:$0xff]
                %213 = vst [vmem:[%s199 + $0x30] sm:$0xff] %v212
                %v214 = vld [vmem:[%s198 + $0x38] sm:$0xff]
                %215 = vst [vmem:[%s199 + $0x38] sm:$0xff] %v214
                %v216 = vld [vmem:[%s198 + $0x40] sm:$0xff]
                %217 = vst [vmem:[%s199 + $0x40] sm:$0xff] %v216
                %v218 = vld [vmem:[%s198 + $0x48] sm:$0xff]
                %219 = vst [vmem:[%s199 + $0x48] sm:$0xff] %v218
                %v220 = vld [vmem:[%s198 + $0x50] sm:$0xff]
                %221 = vst [vmem:[%s199 + $0x50] sm:$0xff] %v220
                %v222 = vld [vmem:[%s198 + $0x58] sm:$0xff]
                %223 = vst [vmem:[%s199 + $0x58] sm:$0xff] %v222
                %v224 = vld [vmem:[%s198 + $0x60] sm:$0xff]
                %225 = vst [vmem:[%s199 + $0x60] sm:$0xff] %v224
                %v226 = vld [vmem:[%s198 + $0x68] sm:$0xff]
                %227 = vst [vmem:[%s199 + $0x68] sm:$0xff] %v226
                %v228 = vld [vmem:[%s198 + $0x70] sm:$0xff]
                %229 = vst [vmem:[%s199 + $0x70] sm:$0xff] %v228
                %v230 = vld [vmem:[%s198 + $0x78] sm:$0xff]
                %231 = vst [vmem:[%s199 + $0x78] sm:$0xff] %v230
                %v232 = vld [vmem:[%s198 + $0x80] sm:$0xff]
                %233 = vst [vmem:[%s199 + $0x80] sm:$0xff] %v232
                %v234 = vld [vmem:[%s198 + $0x88] sm:$0xff]
                %235 = vst [vmem:[%s199 + $0x88] sm:$0xff] %v234
                %v236 = vld [vmem:[%s198 + $0x90] sm:$0xff]
                %237 = vst [vmem:[%s199 + $0x90] sm:$0xff] %v236
                %v238 = vld [vmem:[%s198 + $0x98] sm:$0xff]
                %239 = vst [vmem:[%s199 + $0x98] sm:$0xff] %v238
                %v240 = vld [vmem:[%s198 + $0xa0] sm:$0xff]
                %241 = vst [vmem:[%s199 + $0xa0] sm:$0xff] %v240
                %v242 = vld [vmem:[%s198 + $0xa8] sm:$0xff]
                %243 = vst [vmem:[%s199 + $0xa8] sm:$0xff] %v242
                %v244 = vld [vmem:[%s198 + $0xb0] sm:$0xff]
                %245 = vst [vmem:[%s199 + $0xb0] sm:$0xff] %v244
                %v246 = vld [vmem:[%s198 + $0xb8] sm:$0xff]
                %247 = vst [vmem:[%s199 + $0xb8] sm:$0xff] %v246
                %v248 = vld [vmem:[%s198 + $0x240] sm:$0xff]
                %249 = vst [vmem:[%s199 + $0xc0] sm:$0xff] %v248
                %v250 = vld [vmem:[%s198 + $0x248] sm:$0xff]
                %251 = vst [vmem:[%s199 + $0xc8] sm:$0xff] %v250
                %v252 = vld [vmem:[%s198 + $0x250] sm:$0xff]
                %253 = vst [vmem:[%s199 + $0xd0] sm:$0xff] %v252
                %v254 = vld [vmem:[%s198 + $0x258] sm:$0xff]
                %255 = vst [vmem:[%s199 + $0xd8] sm:$0xff] %v254
                %v256 = vld [vmem:[%s198 + $0x260] sm:$0xff]
                %257 = vst [vmem:[%s199 + $0xe0] sm:$0xff] %v256
                %v258 = vld [vmem:[%s198 + $0x268] sm:$0xff]
                %259 = vst [vmem:[%s199 + $0xe8] sm:$0xff] %v258
                %v260 = vld [vmem:[%s198 + $0x270] sm:$0xff]
                %261 = vst [vmem:[%s199 + $0xf0] sm:$0xff] %v260
                %v262 = vld [vmem:[%s198 + $0x278] sm:$0xff]
                %263 = vst [vmem:[%s199 + $0xf8] sm:$0xff] %v262
                %v264 = vld [vmem:[%s198 + $0x280] sm:$0xff]
                %265 = vst [vmem:[%s199 + $0x100] sm:$0xff] %v264
                %v266 = vld [vmem:[%s198 + $0x288] sm:$0xff]
                %267 = vst [vmem:[%s199 + $0x108] sm:$0xff] %v266
                %v268 = vld [vmem:[%s198 + $0x290] sm:$0xff]
                %269 = vst [vmem:[%s199 + $0x110] sm:$0xff] %v268
                %v270 = vld [vmem:[%s198 + $0x298] sm:$0xff]
                %271 = vst [vmem:[%s199 + $0x118] sm:$0xff] %v270
                %v272 = vld [vmem:[%s198 + $0x2a0] sm:$0xff]
                %273 = vst [vmem:[%s199 + $0x120] sm:$0xff] %v272
                %v274 = vld [vmem:[%s198 + $0x2a8] sm:$0xff]
                %275 = vst [vmem:[%s199 + $0x128] sm:$0xff] %v274
                %v276 = vld [vmem:[%s198 + $0x2b0] sm:$0xff]
                %277 = vst [vmem:[%s199 + $0x130] sm:$0xff] %v276
                %v278 = vld [vmem:[%s198 + $0x2b8] sm:$0xff]
                %279 = vst [vmem:[%s199 + $0x138] sm:$0xff] %v278
                %v280 = vld [vmem:[%s198 + $0x2c0] sm:$0xff]
                %281 = vst [vmem:[%s199 + $0x140] sm:$0xff] %v280
                %v282 = vld [vmem:[%s198 + $0x2c8] sm:$0xff]
                %283 = vst [vmem:[%s199 + $0x148] sm:$0xff] %v282
                %v284 = vld [vmem:[%s198 + $0x2d0] sm:$0xff]
                %285 = vst [vmem:[%s199 + $0x150] sm:$0xff] %v284
                %v286 = vld [vmem:[%s198 + $0x2d8] sm:$0xff]
                %287 = vst [vmem:[%s199 + $0x158] sm:$0xff] %v286
                %v288 = vld [vmem:[%s198 + $0x2e0] sm:$0xff]
                %289 = vst [vmem:[%s199 + $0x160] sm:$0xff] %v288
                %v290 = vld [vmem:[%s198 + $0x2e8] sm:$0xff]
                %291 = vst [vmem:[%s199 + $0x168] sm:$0xff] %v290
                %v292 = vld [vmem:[%s198 + $0x2f0] sm:$0xff]
                %293 = vst [vmem:[%s199 + $0x170] sm:$0xff] %v292
                %v294 = vld [vmem:[%s198 + $0x2f8] sm:$0xff]
                %295 = vst [vmem:[%s199 + $0x178] sm:$0xff] %v294
                %v296 = vld [vmem:[%s198 + $0x480] sm:$0xff]
                %297 = vst [vmem:[%s199 + $0x180] sm:$0xff] %v296
                %v298 = vld [vmem:[%s198 + $0x488] sm:$0xff]
                %299 = vst [vmem:[%s199 + $0x188] sm:$0xff] %v298
                %v300 = vld [vmem:[%s198 + $0x490] sm:$0xff]
                %301 = vst [vmem:[%s199 + $0x190] sm:$0xff] %v300
                %v302 = vld [vmem:[%s198 + $0x498] sm:$0xff]
                %303 = vst [vmem:[%s199 + $0x198] sm:$0xff] %v302
                %v304 = vld [vmem:[%s198 + $0x4a0] sm:$0xff]
                %305 = vst [vmem:[%s199 + $0x1a0] sm:$0xff] %v304
                %v306 = vld [vmem:[%s198 + $0x4a8] sm:$0xff]
                %307 = vst [vmem:[%s199 + $0x1a8] sm:$0xff] %v306
                %v308 = vld [vmem:[%s198 + $0x4b0] sm:$0xff]
                %309 = vst [vmem:[%s199 + $0x1b0] sm:$0xff] %v308
                %v310 = vld [vmem:[%s198 + $0x4b8] sm:$0xff]
                %311 = vst [vmem:[%s199 + $0x1b8] sm:$0xff] %v310
                %v312 = vld [vmem:[%s198 + $0x4c0] sm:$0xff]
                %313 = vst [vmem:[%s199 + $0x1c0] sm:$0xff] %v312
                %v314 = vld [vmem:[%s198 + $0x4c8] sm:$0xff]
                %315 = vst [vmem:[%s199 + $0x1c8] sm:$0xff] %v314
                %v316 = vld [vmem:[%s198 + $0x4d0] sm:$0xff]
                %317 = vst [vmem:[%s199 + $0x1d0] sm:$0xff] %v316
                %v318 = vld [vmem:[%s198 + $0x4d8] sm:$0xff]
                %319 = vst [vmem:[%s199 + $0x1d8] sm:$0xff] %v318
                %v320 = vld [vmem:[%s198 + $0x4e0] sm:$0xff]
                %321 = vst [vmem:[%s199 + $0x1e0] sm:$0xff] %v320
                %v322 = vld [vmem:[%s198 + $0x4e8] sm:$0xff]
                %323 = vst [vmem:[%s199 + $0x1e8] sm:$0xff] %v322
                %v324 = vld [vmem:[%s198 + $0x4f0] sm:$0xff]
                %325 = vst [vmem:[%s199 + $0x1f0] sm:$0xff] %v324
                %v326 = vld [vmem:[%s198 + $0x4f8] sm:$0xff]
                %327 = vst [vmem:[%s199 + $0x1f8] sm:$0xff] %v326
                %v328 = vld [vmem:[%s198 + $0x500] sm:$0xff]
                %329 = vst [vmem:[%s199 + $0x200] sm:$0xff] %v328
                %v330 = vld [vmem:[%s198 + $0x508] sm:$0xff]
                %331 = vst [vmem:[%s199 + $0x208] sm:$0xff] %v330
                %v332 = vld [vmem:[%s198 + $0x510] sm:$0xff]
                %333 = vst [vmem:[%s199 + $0x210] sm:$0xff] %v332
                %v334 = vld [vmem:[%s198 + $0x518] sm:$0xff]
                %335 = vst [vmem:[%s199 + $0x218] sm:$0xff] %v334
                %v336 = vld [vmem:[%s198 + $0x520] sm:$0xff]
                %337 = vst [vmem:[%s199 + $0x220] sm:$0xff] %v336
                %v338 = vld [vmem:[%s198 + $0x528] sm:$0xff]
                %339 = vst [vmem:[%s199 + $0x228] sm:$0xff] %v338
                %v340 = vld [vmem:[%s198 + $0x530] sm:$0xff]
                %341 = vst [vmem:[%s199 + $0x230] sm:$0xff] %v340
                %v342 = vld [vmem:[%s198 + $0x538] sm:$0xff]
                %343 = vst [vmem:[%s199 + $0x238] sm:$0xff] %v342
                %v344 = vld [vmem:[%s198 + $0x6c0] sm:$0xff]
                %345 = vst [vmem:[%s199 + $0x240] sm:$0xff] %v344
                %v346 = vld [vmem:[%s198 + $0x6c8] sm:$0xff]
                %347 = vst [vmem:[%s199 + $0x248] sm:$0xff] %v346
                %v348 = vld [vmem:[%s198 + $0x6d0] sm:$0xff]
                %349 = vst [vmem:[%s199 + $0x250] sm:$0xff] %v348
                %v350 = vld [vmem:[%s198 + $0x6d8] sm:$0xff]
                %351 = vst [vmem:[%s199 + $0x258] sm:$0xff] %v350
                %v352 = vld [vmem:[%s198 + $0x6e0] sm:$0xff]
                %353 = vst [vmem:[%s199 + $0x260] sm:$0xff] %v352
                %v354 = vld [vmem:[%s198 + $0x6e8] sm:$0xff]
                %355 = vst [vmem:[%s199 + $0x268] sm:$0xff] %v354
                %v356 = vld [vmem:[%s198 + $0x6f0] sm:$0xff]
                %357 = vst [vmem:[%s199 + $0x270] sm:$0xff] %v356
                %v358 = vld [vmem:[%s198 + $0x6f8] sm:$0xff]
                %359 = vst [vmem:[%s199 + $0x278] sm:$0xff] %v358
                %v360 = vld [vmem:[%s198 + $0x700] sm:$0xff]
                %361 = vst [vmem:[%s199 + $0x280] sm:$0xff] %v360
                %v362 = vld [vmem:[%s198 + $0x708] sm:$0xff]
                %363 = vst [vmem:[%s199 + $0x288] sm:$0xff] %v362
                %v364 = vld [vmem:[%s198 + $0x710] sm:$0xff]
                %365 = vst [vmem:[%s199 + $0x290] sm:$0xff] %v364
                %v366 = vld [vmem:[%s198 + $0x718] sm:$0xff]
                %367 = vst [vmem:[%s199 + $0x298] sm:$0xff] %v366
                %v368 = vld [vmem:[%s198 + $0x720] sm:$0xff]
                %369 = vst [vmem:[%s199 + $0x2a0] sm:$0xff] %v368
                %v370 = vld [vmem:[%s198 + $0x728] sm:$0xff]
                %371 = vst [vmem:[%s199 + $0x2a8] sm:$0xff] %v370
                %v372 = vld [vmem:[%s198 + $0x730] sm:$0xff]
                %373 = vst [vmem:[%s199 + $0x2b0] sm:$0xff] %v372
                %v374 = vld [vmem:[%s198 + $0x738] sm:$0xff]
                %375 = vst [vmem:[%s199 + $0x2b8] sm:$0xff] %v374
                %v376 = vld [vmem:[%s198 + $0x740] sm:$0xff]
                %377 = vst [vmem:[%s199 + $0x2c0] sm:$0xff] %v376
                %v378 = vld [vmem:[%s198 + $0x748] sm:$0xff]
                %379 = vst [vmem:[%s199 + $0x2c8] sm:$0xff] %v378
                %v380 = vld [vmem:[%s198 + $0x750] sm:$0xff]
                %381 = vst [vmem:[%s199 + $0x2d0] sm:$0xff] %v380
                %v382 = vld [vmem:[%s198 + $0x758] sm:$0xff]
                %383 = vst [vmem:[%s199 + $0x2d8] sm:$0xff] %v382
                %v384 = vld [vmem:[%s198 + $0x760] sm:$0xff]
                %385 = vst [vmem:[%s199 + $0x2e0] sm:$0xff] %v384
                %v386 = vld [vmem:[%s198 + $0x768] sm:$0xff]
                %387 = vst [vmem:[%s199 + $0x2e8] sm:$0xff] %v386
                %v388 = vld [vmem:[%s198 + $0x770] sm:$0xff]
                %389 = vst [vmem:[%s199 + $0x2f0] sm:$0xff] %v388
                %v390 = vld [vmem:[%s198 + $0x778] sm:$0xff]
                %391 = vst [vmem:[%s199 + $0x2f8] sm:$0xff] %v390
                %v392 = vld [vmem:[%s198 + $0x900] sm:$0xff]
                %393 = vst [vmem:[%s199 + $0x300] sm:$0xff] %v392
                %v394 = vld [vmem:[%s198 + $0x908] sm:$0xff]
                %395 = vst [vmem:[%s199 + $0x308] sm:$0xff] %v394
                %v396 = vld [vmem:[%s198 + $0x910] sm:$0xff]
                %397 = vst [vmem:[%s199 + $0x310] sm:$0xff] %v396
                %v398 = vld [vmem:[%s198 + $0x918] sm:$0xff]
                %399 = vst [vmem:[%s199 + $0x318] sm:$0xff] %v398
                %v400 = vld [vmem:[%s198 + $0x920] sm:$0xff]
                %401 = vst [vmem:[%s199 + $0x320] sm:$0xff] %v400
                %v402 = vld [vmem:[%s198 + $0x928] sm:$0xff]
                %403 = vst [vmem:[%s199 + $0x328] sm:$0xff] %v402
                %v404 = vld [vmem:[%s198 + $0x930] sm:$0xff]
                %405 = vst [vmem:[%s199 + $0x330] sm:$0xff] %v404
                %v406 = vld [vmem:[%s198 + $0x938] sm:$0xff]
                %407 = vst [vmem:[%s199 + $0x338] sm:$0xff] %v406
                %v408 = vld [vmem:[%s198 + $0x940] sm:$0xff]
                %409 = vst [vmem:[%s199 + $0x340] sm:$0xff] %v408
                %v410 = vld [vmem:[%s198 + $0x948] sm:$0xff]
                %411 = vst [vmem:[%s199 + $0x348] sm:$0xff] %v410
                %v412 = vld [vmem:[%s198 + $0x950] sm:$0xff]
                %413 = vst [vmem:[%s199 + $0x350] sm:$0xff] %v412
                %v414 = vld [vmem:[%s198 + $0x958] sm:$0xff]
                %415 = vst [vmem:[%s199 + $0x358] sm:$0xff] %v414
                %v416 = vld [vmem:[%s198 + $0x960] sm:$0xff]
                %417 = vst [vmem:[%s199 + $0x360] sm:$0xff] %v416
                %v418 = vld [vmem:[%s198 + $0x968] sm:$0xff]
                %419 = vst [vmem:[%s199 + $0x368] sm:$0xff] %v418
                %v420 = vld [vmem:[%s198 + $0x970] sm:$0xff]
                %421 = vst [vmem:[%s199 + $0x370] sm:$0xff] %v420
                %v422 = vld [vmem:[%s198 + $0x978] sm:$0xff]
                %423 = vst [vmem:[%s199 + $0x378] sm:$0xff] %v422
                %v424 = vld [vmem:[%s198 + $0x980] sm:$0xff]
                %425 = vst [vmem:[%s199 + $0x380] sm:$0xff] %v424
                %v426 = vld [vmem:[%s198 + $0x988] sm:$0xff]
                %427 = vst [vmem:[%s199 + $0x388] sm:$0xff] %v426
                %v428 = vld [vmem:[%s198 + $0x990] sm:$0xff]
                %429 = vst [vmem:[%s199 + $0x390] sm:$0xff] %v428
                %v430 = vld [vmem:[%s198 + $0x998] sm:$0xff]
                %431 = vst [vmem:[%s199 + $0x398] sm:$0xff] %v430
                %v432 = vld [vmem:[%s198 + $0x9a0] sm:$0xff]
                %433 = vst [vmem:[%s199 + $0x3a0] sm:$0xff] %v432
                %v434 = vld [vmem:[%s198 + $0x9a8] sm:$0xff]
                %435 = vst [vmem:[%s199 + $0x3a8] sm:$0xff] %v434
                %v436 = vld [vmem:[%s198 + $0x9b0] sm:$0xff]
                %437 = vst [vmem:[%s199 + $0x3b0] sm:$0xff] %v436
                %v438 = vld [vmem:[%s198 + $0x9b8] sm:$0xff]
                %439 = vst [vmem:[%s199 + $0x3b8] sm:$0xff] %v438
                %v440 = vld [vmem:[%s198 + $0xb40] sm:$0xff]
                %441 = vst [vmem:[%s199 + $0x3c0] sm:$0xff] %v440
                %v442 = vld [vmem:[%s198 + $0xb48] sm:$0xff]
                %443 = vst [vmem:[%s199 + $0x3c8] sm:$0xff] %v442
                %v444 = vld [vmem:[%s198 + $0xb50] sm:$0xff]
                %445 = vst [vmem:[%s199 + $0x3d0] sm:$0xff] %v444
                %v446 = vld [vmem:[%s198 + $0xb58] sm:$0xff]
                %447 = vst [vmem:[%s199 + $0x3d8] sm:$0xff] %v446
                %v448 = vld [vmem:[%s198 + $0xb60] sm:$0xff]
                %449 = vst [vmem:[%s199 + $0x3e0] sm:$0xff] %v448
                %v450 = vld [vmem:[%s198 + $0xb68] sm:$0xff]
                %451 = vst [vmem:[%s199 + $0x3e8] sm:$0xff] %v450
                %v452 = vld [vmem:[%s198 + $0xb70] sm:$0xff]
                %453 = vst [vmem:[%s199 + $0x3f0] sm:$0xff] %v452
                %v454 = vld [vmem:[%s198 + $0xb78] sm:$0xff]
                %455 = vst [vmem:[%s199 + $0x3f8] sm:$0xff] %v454
                %v456 = vld [vmem:[%s198 + $0xb80] sm:$0xff]
                %457 = vst [vmem:[%s199 + $0x400] sm:$0xff] %v456
                %v458 = vld [vmem:[%s198 + $0xb88] sm:$0xff]
                %459 = vst [vmem:[%s199 + $0x408] sm:$0xff] %v458
                %v460 = vld [vmem:[%s198 + $0xb90] sm:$0xff]
                %461 = vst [vmem:[%s199 + $0x410] sm:$0xff] %v460
                %v462 = vld [vmem:[%s198 + $0xb98] sm:$0xff]
                %463 = vst [vmem:[%s199 + $0x418] sm:$0xff] %v462
                %v464 = vld [vmem:[%s198 + $0xba0] sm:$0xff]
                %465 = vst [vmem:[%s199 + $0x420] sm:$0xff] %v464
                %v466 = vld [vmem:[%s198 + $0xba8] sm:$0xff]
                %467 = vst [vmem:[%s199 + $0x428] sm:$0xff] %v466
                %v468 = vld [vmem:[%s198 + $0xbb0] sm:$0xff]
                %469 = vst [vmem:[%s199 + $0x430] sm:$0xff] %v468
                %v470 = vld [vmem:[%s198 + $0xbb8] sm:$0xff]
                %471 = vst [vmem:[%s199 + $0x438] sm:$0xff] %v470
                %v472 = vld [vmem:[%s198 + $0xbc0] sm:$0xff]
                %473 = vst [vmem:[%s199 + $0x440] sm:$0xff] %v472
                %v474 = vld [vmem:[%s198 + $0xbc8] sm:$0xff]
                %475 = vst [vmem:[%s199 + $0x448] sm:$0xff] %v474
                %v476 = vld [vmem:[%s198 + $0xbd0] sm:$0xff]
                %477 = vst [vmem:[%s199 + $0x450] sm:$0xff] %v476
                %v478 = vld [vmem:[%s198 + $0xbd8] sm:$0xff]
                %479 = vst [vmem:[%s199 + $0x458] sm:$0xff] %v478
                %v480 = vld [vmem:[%s198 + $0xbe0] sm:$0xff]
                %481 = vst [vmem:[%s199 + $0x460] sm:$0xff] %v480
                %v482 = vld [vmem:[%s198 + $0xbe8] sm:$0xff]
                %483 = vst [vmem:[%s199 + $0x468] sm:$0xff] %v482
                %v484 = vld [vmem:[%s198 + $0xbf0] sm:$0xff]
                %485 = vst [vmem:[%s199 + $0x470] sm:$0xff] %v484
                %v486 = vld [vmem:[%s198 + $0xbf8] sm:$0xff]
                %487 = vst [vmem:[%s199 + $0x478] sm:$0xff] %v486
                %v488 = vld [vmem:[%s198 + $0xd80] sm:$0xff]
                %489 = vst [vmem:[%s199 + $0x480] sm:$0xff] %v488
                %v490 = vld [vmem:[%s198 + $0xd88] sm:$0xff]
                %491 = vst [vmem:[%s199 + $0x488] sm:$0xff] %v490
                %v492 = vld [vmem:[%s198 + $0xd90] sm:$0xff]
                %493 = vst [vmem:[%s199 + $0x490] sm:$0xff] %v492
                %v494 = vld [vmem:[%s198 + $0xd98] sm:$0xff]
                %495 = vst [vmem:[%s199 + $0x498] sm:$0xff] %v494
                %v496 = vld [vmem:[%s198 + $0xda0] sm:$0xff]
                %497 = vst [vmem:[%s199 + $0x4a0] sm:$0xff] %v496
                %v498 = vld [vmem:[%s198 + $0xda8] sm:$0xff]
                %499 = vst [vmem:[%s199 + $0x4a8] sm:$0xff] %v498
                %v500 = vld [vmem:[%s198 + $0xdb0] sm:$0xff]
                %501 = vst [vmem:[%s199 + $0x4b0] sm:$0xff] %v500
                %v502 = vld [vmem:[%s198 + $0xdb8] sm:$0xff]
                %503 = vst [vmem:[%s199 + $0x4b8] sm:$0xff] %v502
                %v504 = vld [vmem:[%s198 + $0xdc0] sm:$0xff]
                %505 = vst [vmem:[%s199 + $0x4c0] sm:$0xff] %v504
                %v506 = vld [vmem:[%s198 + $0xdc8] sm:$0xff]
                %507 = vst [vmem:[%s199 + $0x4c8] sm:$0xff] %v506
                %v508 = vld [vmem:[%s198 + $0xdd0] sm:$0xff]
                %509 = vst [vmem:[%s199 + $0x4d0] sm:$0xff] %v508
                %v510 = vld [vmem:[%s198 + $0xdd8] sm:$0xff]
                %511 = vst [vmem:[%s199 + $0x4d8] sm:$0xff] %v510
                %v512 = vld [vmem:[%s198 + $0xde0] sm:$0xff]
                %513 = vst [vmem:[%s199 + $0x4e0] sm:$0xff] %v512
                %v514 = vld [vmem:[%s198 + $0xde8] sm:$0xff]
                %515 = vst [vmem:[%s199 + $0x4e8] sm:$0xff] %v514
                %v516 = vld [vmem:[%s198 + $0xdf0] sm:$0xff]
                %517 = vst [vmem:[%s199 + $0x4f0] sm:$0xff] %v516
                %v518 = vld [vmem:[%s198 + $0xdf8] sm:$0xff]
                %519 = vst [vmem:[%s199 + $0x4f8] sm:$0xff] %v518
                %v520 = vld [vmem:[%s198 + $0xe00] sm:$0xff]
                %521 = vst [vmem:[%s199 + $0x500] sm:$0xff] %v520
                %v522 = vld [vmem:[%s198 + $0xe08] sm:$0xff]
                %523 = vst [vmem:[%s199 + $0x508] sm:$0xff] %v522
                %v524 = vld [vmem:[%s198 + $0xe10] sm:$0xff]
                %525 = vst [vmem:[%s199 + $0x510] sm:$0xff] %v524
                %v526 = vld [vmem:[%s198 + $0xe18] sm:$0xff]
                %527 = vst [vmem:[%s199 + $0x518] sm:$0xff] %v526
                %v528 = vld [vmem:[%s198 + $0xe20] sm:$0xff]
                %529 = vst [vmem:[%s199 + $0x520] sm:$0xff] %v528
                %v530 = vld [vmem:[%s198 + $0xe28] sm:$0xff]
                %531 = vst [vmem:[%s199 + $0x528] sm:$0xff] %v530
                %v532 = vld [vmem:[%s198 + $0xe30] sm:$0xff]
                %533 = vst [vmem:[%s199 + $0x530] sm:$0xff] %v532
                %v534 = vld [vmem:[%s198 + $0xe38] sm:$0xff]
                %535 = vst [vmem:[%s199 + $0x538] sm:$0xff] %v534
                %v536 = vld [vmem:[%s198 + $0xfc0] sm:$0xff]
                %537 = vst [vmem:[%s199 + $0x540] sm:$0xff] %v536
                %v538 = vld [vmem:[%s198 + $0xfc8] sm:$0xff]
                %539 = vst [vmem:[%s199 + $0x548] sm:$0xff] %v538
                %v540 = vld [vmem:[%s198 + $0xfd0] sm:$0xff]
                %541 = vst [vmem:[%s199 + $0x550] sm:$0xff] %v540
                %v542 = vld [vmem:[%s198 + $0xfd8] sm:$0xff]
                %543 = vst [vmem:[%s199 + $0x558] sm:$0xff] %v542
                %v544 = vld [vmem:[%s198 + $0xfe0] sm:$0xff]
                %545 = vst [vmem:[%s199 + $0x560] sm:$0xff] %v544
                %v546 = vld [vmem:[%s198 + $0xfe8] sm:$0xff]
                %547 = vst [vmem:[%s199 + $0x568] sm:$0xff] %v546
                %v548 = vld [vmem:[%s198 + $0xff0] sm:$0xff]
                %549 = vst [vmem:[%s199 + $0x570] sm:$0xff] %v548
                %v550 = vld [vmem:[%s198 + $0xff8] sm:$0xff]
                %551 = vst [vmem:[%s199 + $0x578] sm:$0xff] %v550
                %v552 = vld [vmem:[%s198 + $0x1000] sm:$0xff]
                %553 = vst [vmem:[%s199 + $0x580] sm:$0xff] %v552
                %v554 = vld [vmem:[%s198 + $0x1008] sm:$0xff]
                %555 = vst [vmem:[%s199 + $0x588] sm:$0xff] %v554
                %v556 = vld [vmem:[%s198 + $0x1010] sm:$0xff]
                %557 = vst [vmem:[%s199 + $0x590] sm:$0xff] %v556
                %v558 = vld [vmem:[%s198 + $0x1018] sm:$0xff]
                %559 = vst [vmem:[%s199 + $0x598] sm:$0xff] %v558
                %v560 = vld [vmem:[%s198 + $0x1020] sm:$0xff]
                %561 = vst [vmem:[%s199 + $0x5a0] sm:$0xff] %v560
                %v562 = vld [vmem:[%s198 + $0x1028] sm:$0xff]
                %563 = vst [vmem:[%s199 + $0x5a8] sm:$0xff] %v562
                %v564 = vld [vmem:[%s198 + $0x1030] sm:$0xff]
                %565 = vst [vmem:[%s199 + $0x5b0] sm:$0xff] %v564
                %v566 = vld [vmem:[%s198 + $0x1038] sm:$0xff]
                %567 = vst [vmem:[%s199 + $0x5b8] sm:$0xff] %v566
                %v568 = vld [vmem:[%s198 + $0x1040] sm:$0xff]
                %569 = vst [vmem:[%s199 + $0x5c0] sm:$0xff] %v568
                %v570 = vld [vmem:[%s198 + $0x1048] sm:$0xff]
                %571 = vst [vmem:[%s199 + $0x5c8] sm:$0xff] %v570
                %v572 = vld [vmem:[%s198 + $0x1050] sm:$0xff]
                %573 = vst [vmem:[%s199 + $0x5d0] sm:$0xff] %v572
                %v574 = vld [vmem:[%s198 + $0x1058] sm:$0xff]
                %575 = vst [vmem:[%s199 + $0x5d8] sm:$0xff] %v574
                %v576 = vld [vmem:[%s198 + $0x1060] sm:$0xff]
                %577 = vst [vmem:[%s199 + $0x5e0] sm:$0xff] %v576
                %v578 = vld [vmem:[%s198 + $0x1068] sm:$0xff]
                %579 = vst [vmem:[%s199 + $0x5e8] sm:$0xff] %v578
                %v580 = vld [vmem:[%s198 + $0x1070] sm:$0xff]
                %581 = vst [vmem:[%s199 + $0x5f0] sm:$0xff] %v580
                %v582 = vld [vmem:[%s198 + $0x1078] sm:$0xff]
                %583 = vst [vmem:[%s199 + $0x5f8] sm:$0xff] %v582
              $region49: #{run.1} parent=43 // loop_footer
                %s197 = sadd.s32 1, %s193
              $region50: #{run.1} parent=43 // loop_footer_branch
                %192 = sbr.rel target = $region46
              $region51: #{run.1} parent=43 // loop_exit
                _
            $region44: #{run.1} parent=35 // pred_fallthru
              _
          $region36: #{run.1} parent=31 // pred_fallthru
            _
          %980 = vnop
        $region32: #{run.1} parent=27 // pred_fallthru
          _
      $region28: #{run.1} parent=5 // pred_fallthru
        _
      %p981 = scmp.le.s32.totalorder 1, %s13
      %p982 = scmp.lt.s32.totalorder %s13, 7
      %p983 = pnand %p981, %p982
      %p984 = pneg %p983
      // Predicated region
      $region67: #{run.1} parent=5 // pred_check
        _
      $region68: #{run.1} parent=5 // pred_check_branch
        %986 = sbr.rel (%p983) target = $region70
      $region69: #{run.1} parent=5 // pred_region
        %s987 = ssub.s32 %s13, 1
        %s988 = sand.u32 %s40, 1
        %s989 = sand.u32 %s40, 1
        %s990 = smul.addr %s989, 1536
        %s991 = scalar_lea.vmem [#allocation3], %s990
        // Predicated region
        $region71: #{run.1} parent=69 // pred_check
          %p992 = pneg %p53
        $region72: #{run.1} parent=69 // pred_check_branch
          %994 = sbr.rel (%p992) target = $region74
        $region73: #{run.1} parent=69 // pred_region
          _
        $region74: #{run.1} parent=69 // pred_fallthru
          _
        %s995 = sand.u32 %s40, 1
        %s996 = sand.u32 %s40, 1
        %s997 = smul.addr %s996, 1536
        %s998 = scalar_lea.vmem [#allocation3], %s997
        %p999 = pneg %p53
        %p1000 = pneg %p50
        %p1001 = pneg %p74
        %p1002 = pneg %p71
        %p1003 = pneg %p95
        %p1004 = pneg %p92
        %p1005 = pneg %p116
        %p1006 = pneg %p113
        %p1007 = pneg %p144
        %p1008 = pneg %p141
        %s1009 = sand.u32 %s131, 1
        %s1010 = scalar_lea.sflag [#allocation5], %s1009
        %s1011 = sand.u32 %s131, 1
        %s1012 = smul.addr %s1011, 192
        %s1013 = scalar_lea.vmem [#allocation4], %s1012
        %s1014 = smul.u32 24, %s23
        %s1015 = smul.u32 24, %s23
        %v1017 = vld [vmem:[%s991] sm:$0xff]
        %v1018 = vld [vmem:[%s991 + $0x8] sm:$0xff]
        %v1019 = vld [vmem:[%s991 + $0x10] sm:$0xff]
        %v1020 = vld [vmem:[%s991 + $0x18] sm:$0xff]
        %v1021 = vld [vmem:[%s991 + $0x20] sm:$0xff]
        %v1022 = vld [vmem:[%s991 + $0x28] sm:$0xff]
        %v1023 = vld [vmem:[%s991 + $0x30] sm:$0xff]
        %v1024 = vld [vmem:[%s991 + $0x38] sm:$0xff]
        %v1025 = vld [vmem:[%s991 + $0x40] sm:$0xff]
        %v1026 = vld [vmem:[%s991 + $0x48] sm:$0xff]
        %v1027 = vld [vmem:[%s991 + $0x50] sm:$0xff]
        %v1028 = vld [vmem:[%s991 + $0x58] sm:$0xff]
        %v1029 = vld [vmem:[%s991 + $0x60] sm:$0xff]
        %v1030 = vld [vmem:[%s991 + $0x68] sm:$0xff]
        %v1031 = vld [vmem:[%s991 + $0x70] sm:$0xff]
        %v1032 = vld [vmem:[%s991 + $0x78] sm:$0xff]
        %v1033 = vld [vmem:[%s991 + $0x80] sm:$0xff]
        %v1034 = vld [vmem:[%s991 + $0x88] sm:$0xff]
        %v1035 = vld [vmem:[%s991 + $0x90] sm:$0xff]
        %v1036 = vld [vmem:[%s991 + $0x98] sm:$0xff]
        %v1037 = vld [vmem:[%s991 + $0xa0] sm:$0xff]
        %v1038 = vld [vmem:[%s991 + $0xa8] sm:$0xff]
        %v1039 = vld [vmem:[%s991 + $0xb0] sm:$0xff]
        %v1040 = vld [vmem:[%s991 + $0xb8] sm:$0xff]
        %v1041 = vld [vmem:[%s1] sm:$0xf]
        %v1042 = vld [vmem:[%s1 + $0x4] sm:$0xf]
        %v1043 = vld [vmem:[%s1 + $0x8] sm:$0xf]
        %v1044 = vld [vmem:[%s1 + $0xc] sm:$0xf]
        %v1045 = vld [vmem:[%s1 + $0x10] sm:$0xf]
        %v1046 = vld [vmem:[%s1 + $0x14] sm:$0xf]
        %v1047 = vld [vmem:[%s1 + $0x18] sm:$0xf]
        %v1048 = vld [vmem:[%s1 + $0x1c] sm:$0xf]
        %v1049 = vld [vmem:[%s1 + $0x20] sm:$0xf]
        %v1050 = vld [vmem:[%s1 + $0x24] sm:$0xf]
        %v1051 = vld [vmem:[%s1 + $0x28] sm:$0xf]
        %v1052 = vld [vmem:[%s1 + $0x2c] sm:$0xf]
        %v1053 = vld [vmem:[%s1 + $0x30] sm:$0xf]
        %v1054 = vld [vmem:[%s1 + $0x34] sm:$0xf]
        %v1055 = vld [vmem:[%s1 + $0x38] sm:$0xf]
        %v1056 = vld [vmem:[%s1 + $0x3c] sm:$0xf]
        %v1057 = vld [vmem:[%s1 + $0x40] sm:$0xf]
        %v1058 = vld [vmem:[%s1 + $0x44] sm:$0xf]
        %v1059 = vld [vmem:[%s1 + $0x48] sm:$0xf]
        %v1060 = vld [vmem:[%s1 + $0x4c] sm:$0xf]
        %v1061 = vld [vmem:[%s1 + $0x50] sm:$0xf]
        %v1062 = vld [vmem:[%s1 + $0x54] sm:$0xf]
        %v1063 = vld [vmem:[%s1 + $0x58] sm:$0xf]
        %v1064 = vld [vmem:[%s1 + $0x5c] sm:$0xf]
        %v1065 = vld [vmem:[%s1 + $0x60] sm:$0xf]
        %v1066 = vld [vmem:[%s1 + $0x64] sm:$0xf]
        %v1067 = vld [vmem:[%s1 + $0x68] sm:$0xf]
        %v1068 = vld [vmem:[%s1 + $0x6c] sm:$0xf]
        %v1069 = vld [vmem:[%s1 + $0x70] sm:$0xf]
        %v1070 = vld [vmem:[%s1 + $0x74] sm:$0xf]
        %v1071 = vld [vmem:[%s1 + $0x78] sm:$0xf]
        %v1072 = vld [vmem:[%s1 + $0x7c] sm:$0xf]
        %v1097 = vunpack.c.l.b16 %v1017
        %v1098 = vunpack.c.h.b16 %v1017
        %v1099 = vunpack.c.l.b16 %v1018
        %v1100 = vunpack.c.h.b16 %v1018
        %v1101 = vunpack.c.l.b16 %v1019
        %v1102 = vunpack.c.h.b16 %v1019
        %v1103 = vunpack.c.l.b16 %v1020
        %v1104 = vunpack.c.h.b16 %v1020
        %v1105 = vunpack.c.l.b16 %v1021
        %v1106 = vunpack.c.h.b16 %v1021
        %v1107 = vunpack.c.l.b16 %v1022
        %v1108 = vunpack.c.h.b16 %v1022
        %v1109 = vunpack.c.l.b16 %v1023
        %v1110 = vunpack.c.h.b16 %v1023
        %v1111 = vunpack.c.l.b16 %v1024
        %v1112 = vunpack.c.h.b16 %v1024
        %v1113 = vunpack.c.l.b16 %v1025
        %v1114 = vunpack.c.h.b16 %v1025
        %v1115 = vunpack.c.l.b16 %v1026
        %v1116 = vunpack.c.h.b16 %v1026
        %v1117 = vunpack.c.l.b16 %v1027
        %v1118 = vunpack.c.h.b16 %v1027
        %v1119 = vunpack.c.l.b16 %v1028
        %v1120 = vunpack.c.h.b16 %v1028
        %v1121 = vunpack.c.l.b16 %v1029
        %v1122 = vunpack.c.h.b16 %v1029
        %v1123 = vunpack.c.l.b16 %v1030
        %v1124 = vunpack.c.h.b16 %v1030
        %v1125 = vunpack.c.l.b16 %v1031
        %v1126 = vunpack.c.h.b16 %v1031
        %v1127 = vunpack.c.l.b16 %v1032
        %v1128 = vunpack.c.h.b16 %v1032
        %v1129 = vunpack.c.l.b16 %v1033
        %v1130 = vunpack.c.h.b16 %v1033
        %v1131 = vunpack.c.l.b16 %v1034
        %v1132 = vunpack.c.h.b16 %v1034
        %v1133 = vunpack.c.l.b16 %v1035
        %v1134 = vunpack.c.h.b16 %v1035
        %v1135 = vunpack.c.l.b16 %v1036
        %v1136 = vunpack.c.h.b16 %v1036
        %v1137 = vunpack.c.l.b16 %v1037
        %v1138 = vunpack.c.h.b16 %v1037
        %v1139 = vunpack.c.l.b16 %v1038
        %v1140 = vunpack.c.h.b16 %v1038
        %v1141 = vunpack.c.l.b16 %v1039
        %v1142 = vunpack.c.h.b16 %v1039
        %v1143 = vunpack.c.l.b16 %v1040
        %v1144 = vunpack.c.h.b16 %v1040
        %v1145 = vpack.c.b16 %v1099, %v1097
        %v1146 = vpack.c.b16 %v1100, %v1098
        %v1147 = vpack.c.b16 %v1103, %v1101
        %v1148 = vpack.c.b16 %v1104, %v1102
        %v1149 = vpack.c.b16 %v1107, %v1105
        %v1150 = vpack.c.b16 %v1108, %v1106
        %v1151 = vpack.c.b16 %v1111, %v1109
        %v1152 = vpack.c.b16 %v1112, %v1110
        %v1153 = vpack.c.b16 %v1115, %v1113
        %v1154 = vpack.c.b16 %v1116, %v1114
        %v1155 = vpack.c.b16 %v1119, %v1117
        %v1156 = vpack.c.b16 %v1120, %v1118
        %v1157 = vpack.c.b16 %v1123, %v1121
        %v1158 = vpack.c.b16 %v1124, %v1122
        %v1159 = vpack.c.b16 %v1127, %v1125
        %v1160 = vpack.c.b16 %v1128, %v1126
        %v1161 = vpack.c.b16 %v1131, %v1129
        %v1162 = vpack.c.b16 %v1132, %v1130
        %v1163 = vpack.c.b16 %v1135, %v1133
        %v1164 = vpack.c.b16 %v1136, %v1134
        %v1165 = vpack.c.b16 %v1139, %v1137
        %v1166 = vpack.c.b16 %v1140, %v1138
        %v1167 = vpack.c.b16 %v1143, %v1141
        %v1168 = vpack.c.b16 %v1144, %v1142
        %v1225 = vunpack.c.l.b16 %v1041
        %v1226 = vunpack.c.l.b16 %v1042
        %v1227 = vunpack.c.l.b16 %v1043
        %v1228 = vunpack.c.l.b16 %v1044
        %v1229 = vunpack.c.l.b16 %v1045
        %v1230 = vunpack.c.l.b16 %v1046
        %v1231 = vunpack.c.l.b16 %v1047
        %v1232 = vunpack.c.l.b16 %v1048
        %v1233 = vunpack.c.l.b16 %v1049
        %v1234 = vunpack.c.l.b16 %v1050
        %v1235 = vunpack.c.l.b16 %v1051
        %v1236 = vunpack.c.l.b16 %v1052
        %v1237 = vunpack.c.l.b16 %v1053
        %v1238 = vunpack.c.l.b16 %v1054
        %v1239 = vunpack.c.l.b16 %v1055
        %v1240 = vunpack.c.l.b16 %v1056
        %v1241 = vunpack.c.l.b16 %v1057
        %v1242 = vunpack.c.l.b16 %v1058
        %v1243 = vunpack.c.l.b16 %v1059
        %v1244 = vunpack.c.l.b16 %v1060
        %v1245 = vunpack.c.l.b16 %v1061
        %v1246 = vunpack.c.l.b16 %v1062
        %v1247 = vunpack.c.l.b16 %v1063
        %v1248 = vunpack.c.l.b16 %v1064
        %v1249 = vunpack.c.l.b16 %v1065
        %v1250 = vunpack.c.l.b16 %v1066
        %v1251 = vunpack.c.l.b16 %v1067
        %v1252 = vunpack.c.l.b16 %v1068
        %v1253 = vunpack.c.l.b16 %v1069
        %v1254 = vunpack.c.l.b16 %v1070
        %v1255 = vunpack.c.l.b16 %v1071
        %v1256 = vunpack.c.l.b16 %v1072
        %v1257 = vpack.c.b16 %v1226, %v1225
        %v1258 = vpack.c.b16 %v1228, %v1227
        %v1259 = vpack.c.b16 %v1230, %v1229
        %v1260 = vpack.c.b16 %v1232, %v1231
        %v1261 = vpack.c.b16 %v1234, %v1233
        %v1262 = vpack.c.b16 %v1236, %v1235
        %v1263 = vpack.c.b16 %v1238, %v1237
        %v1264 = vpack.c.b16 %v1240, %v1239
        %v1265 = vpack.c.b16 %v1242, %v1241
        %v1266 = vpack.c.b16 %v1244, %v1243
        %v1267 = vpack.c.b16 %v1246, %v1245
        %v1268 = vpack.c.b16 %v1248, %v1247
        %v1269 = vpack.c.b16 %v1250, %v1249
        %v1270 = vpack.c.b16 %v1252, %v1251
        %v1271 = vpack.c.b16 %v1254, %v1253
        %v1272 = vpack.c.b16 %v1256, %v1255
        %1289 = vmatprep.subr.bf16.mxu0 0
        %1290 = vmatpush1.bf16.msra.mxu0 %v1257
        %1291 = vmatprep.subr.bf16.mxu0 0
        %1292 = vmatpush1.bf16.msra.mxu0 %v1258
        %1293 = vmatprep.subr.bf16.mxu0 0
        %1294 = vmatpush1.bf16.msra.mxu0 %v1259
        %1295 = vmatprep.subr.bf16.mxu0 0
        %1296 = vmatpush1.bf16.msra.mxu0 %v1260
        %1297 = vmatprep.subr.bf16.mxu0 0
        %1298 = vmatpush1.bf16.msra.mxu0 %v1261
        %1299 = vmatprep.subr.bf16.mxu0 0
        %1300 = vmatpush1.bf16.msra.mxu0 %v1262
        %1301 = vmatprep.subr.bf16.mxu0 0
        %1302 = vmatpush1.bf16.msra.mxu0 %v1263
        %1303 = vmatprep.subr.bf16.mxu0 0
        %1304 = vmatpush1.bf16.msra.mxu0 %v1264
        %1305 = vmatprep.subr.bf16.mxu0 0
        %1306 = vmatpush1.bf16.msra.mxu0 %v1265
        %1307 = vmatprep.subr.bf16.mxu0 0
        %1308 = vmatpush1.bf16.msra.mxu0 %v1266
        %1309 = vmatprep.subr.bf16.mxu0 0
        %1310 = vmatpush1.bf16.msra.mxu0 %v1267
        %1311 = vmatprep.subr.bf16.mxu0 0
        %1312 = vmatpush1.bf16.msra.mxu0 %v1268
        %1313 = vmatprep.subr.bf16.mxu0 0
        %1314 = vmatpush1.bf16.msra.mxu0 %v1269
        %1315 = vmatprep.subr.bf16.mxu0 0
        %1316 = vmatpush1.bf16.msra.mxu0 %v1270
        %1317 = vmatprep.subr.bf16.mxu0 0
        %1318 = vmatpush1.bf16.msra.mxu0 %v1271
        %1319 = vmatprep.subr.bf16.mxu0 0
        %1320 = vmatpush1.bf16.msra.mxu0 %v1272
        %1321 = vmatprep.mubr.bf16.mxu0 %v1146
        %1322 = vmatmul.mubr.bf16.gmra.mrb[0].mxu0 %v1145
        %v1323 = vpop.f32.mrb[0].mxu0
        %v1324 = vadd.f32 0.0, %v1323
        %v1325 = vpop.f32.mrb[0].mxu0
        %v1326 = vpop.f32.mrb[0].mxu0
        %v1327 = vadd.f32 0.0, %v1326
        %v1328 = vpop.f32.mrb[0].mxu0
        %1329 = vmatprep.mubr.bf16.mxu0 %v1148
        %1330 = vmatmul.mubr.bf16.gmra.mrb[0].mxu0 %v1147
        %v1331 = vpop.f32.mrb[0].mxu0
        %v1332 = vadd.f32 0.0, %v1331
        %v1333 = vpop.f32.mrb[0].mxu0
        %v1334 = vpop.f32.mrb[0].mxu0
        %v1335 = vadd.f32 0.0, %v1334
        %v1336 = vpop.f32.mrb[0].mxu0
        %1337 = vmatprep.mubr.bf16.mxu0 %v1150
        %1338 = vmatmul.mubr.bf16.gmra.mrb[0].mxu0 %v1149
        %v1339 = vpop.f32.mrb[0].mxu0
        %v1340 = vadd.f32 0.0, %v1339
        %v1341 = vpop.f32.mrb[0].mxu0
        %v1342 = vpop.f32.mrb[0].mxu0
        %v1343 = vadd.f32 0.0, %v1342
        %v1344 = vpop.f32.mrb[0].mxu0
        %1345 = vmatprep.mubr.bf16.mxu0 %v1152
        %1346 = vmatmul.mubr.bf16.gmra.mrb[0].mxu0 %v1151
        %v1347 = vpop.f32.mrb[0].mxu0
        %v1348 = vadd.f32 0.0, %v1347
        %v1349 = vpop.f32.mrb[0].mxu0
        %v1350 = vpop.f32.mrb[0].mxu0
        %v1351 = vadd.f32 0.0, %v1350
        %v1352 = vpop.f32.mrb[0].mxu0
        %1353 = vmatprep.mubr.bf16.mxu0 %v1154
        %1354 = vmatmul.mubr.bf16.gmra.mrb[0].mxu0 %v1153
        %v1355 = vpop.f32.mrb[0].mxu0
        %v1356 = vadd.f32 0.0, %v1355
        %v1357 = vpop.f32.mrb[0].mxu0
        %v1358 = vpop.f32.mrb[0].mxu0
        %v1359 = vadd.f32 0.0, %v1358
        %v1360 = vpop.f32.mrb[0].mxu0
        %1361 = vmatprep.mubr.bf16.mxu0 %v1156
        %1362 = vmatmul.mubr.bf16.gmra.mrb[0].mxu0 %v1155
        %v1363 = vpop.f32.mrb[0].mxu0
        %v1364 = vadd.f32 0.0, %v1363
        %v1365 = vpop.f32.mrb[0].mxu0
        %v1366 = vpop.f32.mrb[0].mxu0
        %v1367 = vadd.f32 0.0, %v1366
        %v1368 = vpop.f32.mrb[0].mxu0
        %1369 = vmatprep.mubr.bf16.mxu0 %v1158
        %1370 = vmatmul.mubr.bf16.gmra.mrb[0].mxu0 %v1157
        %v1371 = vpop.f32.mrb[0].mxu0
        %v1372 = vadd.f32 0.0, %v1371
        %v1373 = vpop.f32.mrb[0].mxu0
        %v1374 = vpop.f32.mrb[0].mxu0
        %v1375 = vadd.f32 0.0, %v1374
        %v1376 = vpop.f32.mrb[0].mxu0
        %1377 = vmatprep.mubr.bf16.mxu0 %v1160
        %1378 = vmatmul.mubr.bf16.gmra.mrb[0].mxu0 %v1159
        %v1379 = vpop.f32.mrb[0].mxu0
        %v1380 = vadd.f32 0.0, %v1379
        %v1381 = vpop.f32.mrb[0].mxu0
        %v1382 = vpop.f32.mrb[0].mxu0
        %v1383 = vadd.f32 0.0, %v1382
        %v1384 = vpop.f32.mrb[0].mxu0
        %1385 = vmatprep.mubr.bf16.mxu0 %v1162
        %1386 = vmatmul.mubr.bf16.gmra.mrb[0].mxu0 %v1161
        %v1387 = vpop.f32.mrb[0].mxu0
        %v1388 = vadd.f32 0.0, %v1387
        %v1389 = vpop.f32.mrb[0].mxu0
        %v1390 = vpop.f32.mrb[0].mxu0
        %v1391 = vadd.f32 0.0, %v1390
        %v1392 = vpop.f32.mrb[0].mxu0
        %1393 = vmatprep.mubr.bf16.mxu0 %v1164
        %1394 = vmatmul.mubr.bf16.gmra.mrb[0].mxu0 %v1163
        %v1395 = vpop.f32.mrb[0].mxu0
        %v1396 = vadd.f32 0.0, %v1395
        %v1397 = vpop.f32.mrb[0].mxu0
        %v1398 = vpop.f32.mrb[0].mxu0
        %v1399 = vadd.f32 0.0, %v1398
        %v1400 = vpop.f32.mrb[0].mxu0
        %1401 = vmatprep.mubr.bf16.mxu0 %v1166
        %1402 = vmatmul.mubr.bf16.gmra.mrb[0].mxu0 %v1165
        %v1403 = vpop.f32.mrb[0].mxu0
        %v1404 = vadd.f32 0.0, %v1403
        %v1405 = vpop.f32.mrb[0].mxu0
        %v1406 = vpop.f32.mrb[0].mxu0
        %v1407 = vadd.f32 0.0, %v1406
        %v1408 = vpop.f32.mrb[0].mxu0
        %1409 = vmatprep.mubr.bf16.mxu0 %v1168
        %1410 = vmatmul.mubr.bf16.gmra.mrb[0].mxu0 %v1167
        %v1411 = vpop.f32.mrb[0].mxu0
        %v1412 = vadd.f32 0.0, %v1411
        %v1413 = vpop.f32.mrb[0].mxu0
        %v1414 = vpop.f32.mrb[0].mxu0
        %v1415 = vadd.f32 0.0, %v1414
        %v1416 = vpop.f32.mrb[0].mxu0
        %1417 = vdwg.mxu0
        %1418 = vst [vmem:[#allocation2] sm:$0xff] %v1324
        %1419 = vst [vmem:[#allocation2 + $0x8] sm:$0xff] %v1327
        %1420 = vst [vmem:[#allocation2 + $0x10] sm:$0xff] %v1332
        %1421 = vst [vmem:[#allocation2 + $0x18] sm:$0xff] %v1335
        %1422 = vst [vmem:[#allocation2 + $0x20] sm:$0xff] %v1340
        %1423 = vst [vmem:[#allocation2 + $0x28] sm:$0xff] %v1343
        %1424 = vst [vmem:[#allocation2 + $0x30] sm:$0xff] %v1348
        %1425 = vst [vmem:[#allocation2 + $0x38] sm:$0xff] %v1351
        %1426 = vst [vmem:[#allocation2 + $0x40] sm:$0xff] %v1356
        %1427 = vst [vmem:[#allocation2 + $0x48] sm:$0xff] %v1359
        %1428 = vst [vmem:[#allocation2 + $0x50] sm:$0xff] %v1364
        %1429 = vst [vmem:[#allocation2 + $0x58] sm:$0xff] %v1367
        %1430 = vst [vmem:[#allocation2 + $0x60] sm:$0xff] %v1372
        %1431 = vst [vmem:[#allocation2 + $0x68] sm:$0xff] %v1375
        %1432 = vst [vmem:[#allocation2 + $0x70] sm:$0xff] %v1380
        %1433 = vst [vmem:[#allocation2 + $0x78] sm:$0xff] %v1383
        %1434 = vst [vmem:[#allocation2 + $0x80] sm:$0xff] %v1388
        %1435 = vst [vmem:[#allocation2 + $0x88] sm:$0xff] %v1391
        %1436 = vst [vmem:[#allocation2 + $0x90] sm:$0xff] %v1396
        %1437 = vst [vmem:[#allocation2 + $0x98] sm:$0xff] %v1399
        %1438 = vst [vmem:[#allocation2 + $0xa0] sm:$0xff] %v1404
        %1439 = vst [vmem:[#allocation2 + $0xa8] sm:$0xff] %v1407
        %1440 = vst [vmem:[#allocation2 + $0xb0] sm:$0xff] %v1412
        %1441 = vst [vmem:[#allocation2 + $0xb8] sm:$0xff] %v1415
        %v1442 = vld [vmem:[#allocation2] sm:$0xff]
        %v1443 = vld [vmem:[#allocation2 + $0x8] sm:$0xff]
        %v1444 = vld [vmem:[#allocation2 + $0x10] sm:$0xff]
        %v1445 = vld [vmem:[#allocation2 + $0x18] sm:$0xff]
        %v1446 = vld [vmem:[#allocation2 + $0x20] sm:$0xff]
        %v1447 = vld [vmem:[#allocation2 + $0x28] sm:$0xff]
        %v1448 = vld [vmem:[#allocation2 + $0x30] sm:$0xff]
        %v1449 = vld [vmem:[#allocation2 + $0x38] sm:$0xff]
        %v1450 = vld [vmem:[#allocation2 + $0x40] sm:$0xff]
        %v1451 = vld [vmem:[#allocation2 + $0x48] sm:$0xff]
        %v1452 = vld [vmem:[#allocation2 + $0x50] sm:$0xff]
        %v1453 = vld [vmem:[#allocation2 + $0x58] sm:$0xff]
        %v1454 = vld [vmem:[#allocation2 + $0x60] sm:$0xff]
        %v1455 = vld [vmem:[#allocation2 + $0x68] sm:$0xff]
        %v1456 = vld [vmem:[#allocation2 + $0x70] sm:$0xff]
        %v1457 = vld [vmem:[#allocation2 + $0x78] sm:$0xff]
        %v1458 = vld [vmem:[#allocation2 + $0x80] sm:$0xff]
        %v1459 = vld [vmem:[#allocation2 + $0x88] sm:$0xff]
        %v1460 = vld [vmem:[#allocation2 + $0x90] sm:$0xff]
        %v1461 = vld [vmem:[#allocation2 + $0x98] sm:$0xff]
        %v1462 = vld [vmem:[#allocation2 + $0xa0] sm:$0xff]
        %v1463 = vld [vmem:[#allocation2 + $0xa8] sm:$0xff]
        %v1464 = vld [vmem:[#allocation2 + $0xb0] sm:$0xff]
        %v1465 = vld [vmem:[#allocation2 + $0xb8] sm:$0xff]
        %s1466 = scalar_lea.vmem %s991, 192 [#allocation3]
        %v1467 = vld [vmem:[%s1466] sm:$0xff]
        %v1468 = vld [vmem:[%s1466 + $0x8] sm:$0xff]
        %v1469 = vld [vmem:[%s1466 + $0x10] sm:$0xff]
        %v1470 = vld [vmem:[%s1466 + $0x18] sm:$0xff]
        %v1471 = vld [vmem:[%s1466 + $0x20] sm:$0xff]
        %v1472 = vld [vmem:[%s1466 + $0x28] sm:$0xff]
        %v1473 = vld [vmem:[%s1466 + $0x30] sm:$0xff]
        %v1474 = vld [vmem:[%s1466 + $0x38] sm:$0xff]
        %v1475 = vld [vmem:[%s1466 + $0x40] sm:$0xff]
        %v1476 = vld [vmem:[%s1466 + $0x48] sm:$0xff]
        %v1477 = vld [vmem:[%s1466 + $0x50] sm:$0xff]
        %v1478 = vld [vmem:[%s1466 + $0x58] sm:$0xff]
        %v1479 = vld [vmem:[%s1466 + $0x60] sm:$0xff]
        %v1480 = vld [vmem:[%s1466 + $0x68] sm:$0xff]
        %v1481 = vld [vmem:[%s1466 + $0x70] sm:$0xff]
        %v1482 = vld [vmem:[%s1466 + $0x78] sm:$0xff]
        %v1483 = vld [vmem:[%s1466 + $0x80] sm:$0xff]
        %v1484 = vld [vmem:[%s1466 + $0x88] sm:$0xff]
        %v1485 = vld [vmem:[%s1466 + $0x90] sm:$0xff]
        %v1486 = vld [vmem:[%s1466 + $0x98] sm:$0xff]
        %v1487 = vld [vmem:[%s1466 + $0xa0] sm:$0xff]
        %v1488 = vld [vmem:[%s1466 + $0xa8] sm:$0xff]
        %v1489 = vld [vmem:[%s1466 + $0xb0] sm:$0xff]
        %v1490 = vld [vmem:[%s1466 + $0xb8] sm:$0xff]
        %s1491 = scalar_lea.vmem %s1, 128
        %v1492 = vld [vmem:[%s1491] sm:$0xf]
        %v1493 = vld [vmem:[%s1491 + $0x4] sm:$0xf]
        %v1494 = vld [vmem:[%s1491 + $0x8] sm:$0xf]
        %v1495 = vld [vmem:[%s1491 + $0xc] sm:$0xf]
        %v1496 = vld [vmem:[%s1491 + $0x10] sm:$0xf]
        %v1497 = vld [vmem:[%s1491 + $0x14] sm:$0xf]
        %v1498 = vld [vmem:[%s1491 + $0x18] sm:$0xf]
        %v1499 = vld [vmem:[%s1491 + $0x1c] sm:$0xf]
        %v1500 = vld [vmem:[%s1491 + $0x20] sm:$0xf]
        %v1501 = vld [vmem:[%s1491 + $0x24] sm:$0xf]
        %v1502 = vld [vmem:[%s1491 + $0x28] sm:$0xf]
        %v1503 = vld [vmem:[%s1491 + $0x2c] sm:$0xf]
        %v1504 = vld [vmem:[%s1491 + $0x30] sm:$0xf]
        %v1505 = vld [vmem:[%s1491 + $0x34] sm:$0xf]
        %v1506 = vld [vmem:[%s1491 + $0x38] sm:$0xf]
        %v1507 = vld [vmem:[%s1491 + $0x3c] sm:$0xf]
        %v1508 = vld [vmem:[%s1491 + $0x40] sm:$0xf]
        %v1509 = vld [vmem:[%s1491 + $0x44] sm:$0xf]
        %v1510 = vld [vmem:[%s1491 + $0x48] sm:$0xf]
        %v1511 = vld [vmem:[%s1491 + $0x4c] sm:$0xf]
        %v1512 = vld [vmem:[%s1491 + $0x50] sm:$0xf]
        %v1513 = vld [vmem:[%s1491 + $0x54] sm:$0xf]
        %v1514 = vld [vmem:[%s1491 + $0x58] sm:$0xf]
        %v1515 = vld [vmem:[%s1491 + $0x5c] sm:$0xf]
        %v1516 = vld [vmem:[%s1491 + $0x60] sm:$0xf]
        %v1517 = vld [vmem:[%s1491 + $0x64] sm:$0xf]
        %v1518 = vld [vmem:[%s1491 + $0x68] sm:$0xf]
        %v1519 = vld [vmem:[%s1491 + $0x6c] sm:$0xf]
        %v1520 = vld [vmem:[%s1491 + $0x70] sm:$0xf]
        %v1521 = vld [vmem:[%s1491 + $0x74] sm:$0xf]
        %v1522 = vld [vmem:[%s1491 + $0x78] sm:$0xf]
        %v1523 = vld [vmem:[%s1491 + $0x7c] sm:$0xf]
        %v1548 = vunpack.c.l.b16 %v1467
        %v1549 = vunpack.c.h.b16 %v1467
        %v1550 = vunpack.c.l.b16 %v1468
        %v1551 = vunpack.c.h.b16 %v1468
        %v1552 = vunpack.c.l.b16 %v1469
        %v1553 = vunpack.c.h.b16 %v1469
        %v1554 = vunpack.c.l.b16 %v1470
        %v1555 = vunpack.c.h.b16 %v1470
        %v1556 = vunpack.c.l.b16 %v1471
        %v1557 = vunpack.c.h.b16 %v1471
        %v1558 = vunpack.c.l.b16 %v1472
        %v1559 = vunpack.c.h.b16 %v1472
        %v1560 = vunpack.c.l.b16 %v1473
        %v1561 = vunpack.c.h.b16 %v1473
        %v1562 = vunpack.c.l.b16 %v1474
        %v1563 = vunpack.c.h.b16 %v1474
        %v1564 = vunpack.c.l.b16 %v1475
        %v1565 = vunpack.c.h.b16 %v1475
        %v1566 = vunpack.c.l.b16 %v1476
        %v1567 = vunpack.c.h.b16 %v1476
        %v1568 = vunpack.c.l.b16 %v1477
        %v1569 = vunpack.c.h.b16 %v1477
        %v1570 = vunpack.c.l.b16 %v1478
        %v1571 = vunpack.c.h.b16 %v1478
        %v1572 = vunpack.c.l.b16 %v1479
        %v1573 = vunpack.c.h.b16 %v1479
        %v1574 = vunpack.c.l.b16 %v1480
        %v1575 = vunpack.c.h.b16 %v1480
        %v1576 = vunpack.c.l.b16 %v1481
        %v1577 = vunpack.c.h.b16 %v1481
        %v1578 = vunpack.c.l.b16 %v1482
        %v1579 = vunpack.c.h.b16 %v1482
        %v1580 = vunpack.c.l.b16 %v1483
        %v1581 = vunpack.c.h.b16 %v1483
        %v1582 = vunpack.c.l.b16 %v1484
        %v1583 = vunpack.c.h.b16 %v1484
        %v1584 = vunpack.c.l.b16 %v1485
        %v1585 = vunpack.c.h.b16 %v1485
        %v1586 = vunpack.c.l.b16 %v1486
        %v1587 = vunpack.c.h.b16 %v1486
        %v1588 = vunpack.c.l.b16 %v1487
        %v1589 = vunpack.c.h.b16 %v1487
        %v1590 = vunpack.c.l.b16 %v1488
        %v1591 = vunpack.c.h.b16 %v1488
        %v1592 = vunpack.c.l.b16 %v1489
        %v1593 = vunpack.c.h.b16 %v1489
        %v1594 = vunpack.c.l.b16 %v1490
        %v1595 = vunpack.c.h.b16 %v1490
        %v1596 = vpack.c.b16 %v1550, %v1548
        %v1597 = vpack.c.b16 %v1551, %v1549
        %v1598 = vpack.c.b16 %v1554, %v1552
        %v1599 = vpack.c.b16 %v1555, %v1553
        %v1600 = vpack.c.b16 %v1558, %v1556
        %v1601 = vpack.c.b16 %v1559, %v1557
        %v1602 = vpack.c.b16 %v1562, %v1560
        %v1603 = vpack.c.b16 %v1563, %v1561
        %v1604 = vpack.c.b16 %v1566, %v1564
        %v1605 = vpack.c.b16 %v1567, %v1565
        %v1606 = vpack.c.b16 %v1570, %v1568
        %v1607 = vpack.c.b16 %v1571, %v1569
        %v1608 = vpack.c.b16 %v1574, %v1572
        %v1609 = vpack.c.b16 %v1575, %v1573
        %v1610 = vpack.c.b16 %v1578, %v1576
        %v1611 = vpack.c.b16 %v1579, %v1577
        %v1612 = vpack.c.b16 %v1582, %v1580
        %v1613 = vpack.c.b16 %v1583, %v1581
        %v1614 = vpack.c.b16 %v1586, %v1584
        %v1615 = vpack.c.b16 %v1587, %v1585
        %v1616 = vpack.c.b16 %v1590, %v1588
        %v1617 = vpack.c.b16 %v1591, %v1589
        %v1618 = vpack.c.b16 %v1594, %v1592
        %v1619 = vpack.c.b16 %v1595, %v1593
        %v1676 = vunpack.c.l.b16 %v1492
        %v1677 = vunpack.c.l.b16 %v1493
        %v1678 = vunpack.c.l.b16 %v1494
        %v1679 = vunpack.c.l.b16 %v1495
        %v1680 = vunpack.c.l.b16 %v1496
        %v1681 = vunpack.c.l.b16 %v1497
        %v1682 = vunpack.c.l.b16 %v1498
        %v1683 = vunpack.c.l.b16 %v1499
        %v1684 = vunpack.c.l.b16 %v1500
        %v1685 = vunpack.c.l.b16 %v1501
        %v1686 = vunpack.c.l.b16 %v1502
        %v1687 = vunpack.c.l.b16 %v1503
        %v1688 = vunpack.c.l.b16 %v1504
        %v1689 = vunpack.c.l.b16 %v1505
        %v1690 = vunpack.c.l.b16 %v1506
        %v1691 = vunpack.c.l.b16 %v1507
        %v1692 = vunpack.c.l.b16 %v1508
        %v1693 = vunpack.c.l.b16 %v1509
        %v1694 = vunpack.c.l.b16 %v1510
        %v1695 = vunpack.c.l.b16 %v1511
        %v1696 = vunpack.c.l.b16 %v1512
        %v1697 = vunpack.c.l.b16 %v1513
        %v1698 = vunpack.c.l.b16 %v1514
        %v1699 = vunpack.c.l.b16 %v1515
        %v1700 = vunpack.c.l.b16 %v1516
        %v1701 = vunpack.c.l.b16 %v1517
        %v1702 = vunpack.c.l.b16 %v1518
        %v1703 = vunpack.c.l.b16 %v1519
        %v1704 = vunpack.c.l.b16 %v1520
        %v1705 = vunpack.c.l.b16 %v1521
        %v1706 = vunpack.c.l.b16 %v1522
        %v1707 = vunpack.c.l.b16 %v1523
        %v1708 = vpack.c.b16 %v1677, %v1676
        %v1709 = vpack.c.b16 %v1679, %v1678
        %v1710 = vpack.c.b16 %v1681, %v1680
        %v1711 = vpack.c.b16 %v1683, %v1682
        %v1712 = vpack.c.b16 %v1685, %v1684
        %v1713 = vpack.c.b16 %v1687, %v1686
        %v1714 = vpack.c.b16 %v1689, %v1688
        %v1715 = vpack.c.b16 %v1691, %v1690
        %v1716 = vpack.c.b16 %v1693, %v1692
        %v1717 = vpack.c.b16 %v1695, %v1694
        %v1718 = vpack.c.b16 %v1697, %v1696
        %v1719 = vpack.c.b16 %v1699, %v1698
        %v1720 = vpack.c.b16 %v1701, %v1700
        %v1721 = vpack.c.b16 %v1703, %v1702
        %v1722 = vpack.c.b16 %v1705, %v1704
        %v1723 = vpack.c.b16 %v1707, %v1706
        %1740 = vmatprep.subr.bf16.mxu0 0
        %1741 = vmatpush1.bf16.msra.mxu0 %v1708
        %1742 = vmatprep.subr.bf16.mxu0 0
        %1743 = vmatpush1.bf16.msra.mxu0 %v1709
        %1744 = vmatprep.subr.bf16.mxu0 0
        %1745 = vmatpush1.bf16.msra.mxu0 %v1710
        %1746 = vmatprep.subr.bf16.mxu0 0
        %1747 = vmatpush1.bf16.msra.mxu0 %v1711
        %1748 = vmatprep.subr.bf16.mxu0 0
        %1749 = vmatpush1.bf16.msra.mxu0 %v1712
        %1750 = vmatprep.subr.bf16.mxu0 0
        %1751 = vmatpush1.bf16.msra.mxu0 %v1713
        %1752 = vmatprep.subr.bf16.mxu0 0
        %1753 = vmatpush1.bf16.msra.mxu0 %v1714
        %1754 = vmatprep.subr.bf16.mxu0 0
        %1755 = vmatpush1.bf16.msra.mxu0 %v1715
        %1756 = vmatprep.subr.bf16.mxu0 0
        %1757 = vmatpush1.bf16.msra.mxu0 %v1716
        %1758 = vmatprep.subr.bf16.mxu0 0
        %1759 = vmatpush1.bf16.msra.mxu0 %v1717
        %1760 = vmatprep.subr.bf16.mxu0 0
        %1761 = vmatpush1.bf16.msra.mxu0 %v1718
        %1762 = vmatprep.subr.bf16.mxu0 0
        %1763 = vmatpush1.bf16.msra.mxu0 %v1719
        %1764 = vmatprep.subr.bf16.mxu0 0
        %1765 = vmatpush1.bf16.msra.mxu0 %v1720
        %1766 = vmatprep.subr.bf16.mxu0 0
        %1767 = vmatpush1.bf16.msra.mxu0 %v1721
        %1768 = vmatprep.subr.bf16.mxu0 0
        %1769 = vmatpush1.bf16.msra.mxu0 %v1722
        %1770 = vmatprep.subr.bf16.mxu0 0
        %1771 = vmatpush1.bf16.msra.mxu0 %v1723
        %1772 = vmatprep.mubr.bf16.mxu0 %v1597
        %1773 = vmatmul.mubr.bf16.gmra.mrb[0].mxu0 %v1596
        %v1774 = vpop.f32.mrb[0].mxu0
        %v1775 = vadd.f32 0.0, %v1774
        %v1776 = vpop.f32.mrb[0].mxu0
        %v1777 = vpop.f32.mrb[0].mxu0
        %v1778 = vadd.f32 0.0, %v1777
        %v1779 = vpop.f32.mrb[0].mxu0
        %1780 = vmatprep.mubr.bf16.mxu0 %v1599
        %1781 = vmatmul.mubr.bf16.gmra.mrb[0].mxu0 %v1598
        %v1782 = vpop.f32.mrb[0].mxu0
        %v1783 = vadd.f32 0.0, %v1782
        %v1784 = vpop.f32.mrb[0].mxu0
        %v1785 = vpop.f32.mrb[0].mxu0
        %v1786 = vadd.f32 0.0, %v1785
        %v1787 = vpop.f32.mrb[0].mxu0
        %1788 = vmatprep.mubr.bf16.mxu0 %v1601
        %1789 = vmatmul.mubr.bf16.gmra.mrb[0].mxu0 %v1600
        %v1790 = vpop.f32.mrb[0].mxu0
        %v1791 = vadd.f32 0.0, %v1790
        %v1792 = vpop.f32.mrb[0].mxu0
        %v1793 = vpop.f32.mrb[0].mxu0
        %v1794 = vadd.f32 0.0, %v1793
        %v1795 = vpop.f32.mrb[0].mxu0
        %1796 = vmatprep.mubr.bf16.mxu0 %v1603
        %1797 = vmatmul.mubr.bf16.gmra.mrb[0].mxu0 %v1602
        %v1798 = vpop.f32.mrb[0].mxu0
        %v1799 = vadd.f32 0.0, %v1798
        %v1800 = vpop.f32.mrb[0].mxu0
        %v1801 = vpop.f32.mrb[0].mxu0
        %v1802 = vadd.f32 0.0, %v1801
        %v1803 = vpop.f32.mrb[0].mxu0
        %1804 = vmatprep.mubr.bf16.mxu0 %v1605
        %1805 = vmatmul.mubr.bf16.gmra.mrb[0].mxu0 %v1604
        %v1806 = vpop.f32.mrb[0].mxu0
        %v1807 = vadd.f32 0.0, %v1806
        %v1808 = vpop.f32.mrb[0].mxu0
        %v1809 = vpop.f32.mrb[0].mxu0
        %v1810 = vadd.f32 0.0, %v1809
        %v1811 = vpop.f32.mrb[0].mxu0
        %1812 = vmatprep.mubr.bf16.mxu0 %v1607
        %1813 = vmatmul.mubr.bf16.gmra.mrb[0].mxu0 %v1606
        %v1814 = vpop.f32.mrb[0].mxu0
        %v1815 = vadd.f32 0.0, %v1814
        %v1816 = vpop.f32.mrb[0].mxu0
        %v1817 = vpop.f32.mrb[0].mxu0
        %v1818 = vadd.f32 0.0, %v1817
        %v1819 = vpop.f32.mrb[0].mxu0
        %1820 = vmatprep.mubr.bf16.mxu0 %v1609
        %1821 = vmatmul.mubr.bf16.gmra.mrb[0].mxu0 %v1608
        %v1822 = vpop.f32.mrb[0].mxu0
        %v1823 = vadd.f32 0.0, %v1822
        %v1824 = vpop.f32.mrb[0].mxu0
        %v1825 = vpop.f32.mrb[0].mxu0
        %v1826 = vadd.f32 0.0, %v1825
        %v1827 = vpop.f32.mrb[0].mxu0
        %1828 = vmatprep.mubr.bf16.mxu0 %v1611
        %1829 = vmatmul.mubr.bf16.gmra.mrb[0].mxu0 %v1610
        %v1830 = vpop.f32.mrb[0].mxu0
        %v1831 = vadd.f32 0.0, %v1830
        %v1832 = vpop.f32.mrb[0].mxu0
        %v1833 = vpop.f32.mrb[0].mxu0
        %v1834 = vadd.f32 0.0, %v1833
        %v1835 = vpop.f32.mrb[0].mxu0
        %1836 = vmatprep.mubr.bf16.mxu0 %v1613
        %1837 = vmatmul.mubr.bf16.gmra.mrb[0].mxu0 %v1612
        %v1838 = vpop.f32.mrb[0].mxu0
        %v1839 = vadd.f32 0.0, %v1838
        %v1840 = vpop.f32.mrb[0].mxu0
        %v1841 = vpop.f32.mrb[0].mxu0
        %v1842 = vadd.f32 0.0, %v1841
        %v1843 = vpop.f32.mrb[0].mxu0
        %1844 = vmatprep.mubr.bf16.mxu0 %v1615
        %1845 = vmatmul.mubr.bf16.gmra.mrb[0].mxu0 %v1614
        %v1846 = vpop.f32.mrb[0].mxu0
        %v1847 = vadd.f32 0.0, %v1846
        %v1848 = vpop.f32.mrb[0].mxu0
        %v1849 = vpop.f32.mrb[0].mxu0
        %v1850 = vadd.f32 0.0, %v1849
        %v1851 = vpop.f32.mrb[0].mxu0
        %1852 = vmatprep.mubr.bf16.mxu0 %v1617
        %1853 = vmatmul.mubr.bf16.gmra.mrb[0].mxu0 %v1616
        %v1854 = vpop.f32.mrb[0].mxu0
        %v1855 = vadd.f32 0.0, %v1854
        %v1856 = vpop.f32.mrb[0].mxu0
        %v1857 = vpop.f32.mrb[0].mxu0
        %v1858 = vadd.f32 0.0, %v1857
        %v1859 = vpop.f32.mrb[0].mxu0
        %1860 = vmatprep.mubr.bf16.mxu0 %v1619
        %1861 = vmatmul.mubr.bf16.gmra.mrb[0].mxu0 %v1618
        %v1862 = vpop.f32.mrb[0].mxu0
        %v1863 = vadd.f32 0.0, %v1862
        %v1864 = vpop.f32.mrb[0].mxu0
        %v1865 = vpop.f32.mrb[0].mxu0
        %v1866 = vadd.f32 0.0, %v1865
        %v1867 = vpop.f32.mrb[0].mxu0
        %1868 = vdwg.mxu0
        %v1869 = vadd.f32 %v1442, %v1775
        %v1870 = vadd.f32 %v1443, %v1778
        %v1871 = vadd.f32 %v1444, %v1783
        %v1872 = vadd.f32 %v1445, %v1786
        %v1873 = vadd.f32 %v1446, %v1791
        %v1874 = vadd.f32 %v1447, %v1794
        %v1875 = vadd.f32 %v1448, %v1799
        %v1876 = vadd.f32 %v1449, %v1802
        %v1877 = vadd.f32 %v1450, %v1807
        %v1878 = vadd.f32 %v1451, %v1810
        %v1879 = vadd.f32 %v1452, %v1815
        %v1880 = vadd.f32 %v1453, %v1818
        %v1881 = vadd.f32 %v1454, %v1823
        %v1882 = vadd.f32 %v1455, %v1826
        %v1883 = vadd.f32 %v1456, %v1831
        %v1884 = vadd.f32 %v1457, %v1834
        %v1885 = vadd.f32 %v1458, %v1839
        %v1886 = vadd.f32 %v1459, %v1842
        %v1887 = vadd.f32 %v1460, %v1847
        %v1888 = vadd.f32 %v1461, %v1850
        %v1889 = vadd.f32 %v1462, %v1855
        %v1890 = vadd.f32 %v1463, %v1858
        %v1891 = vadd.f32 %v1464, %v1863
        %v1892 = vadd.f32 %v1465, %v1866
        %1893 = vst [vmem:[#allocation2] sm:$0xff] %v1869
        %1894 = vst [vmem:[#allocation2 + $0x8] sm:$0xff] %v1870
        %1895 = vst [vmem:[#allocation2 + $0x10] sm:$0xff] %v1871
        %1896 = vst [vmem:[#allocation2 + $0x18] sm:$0xff] %v1872
        %1897 = vst [vmem:[#allocation2 + $0x20] sm:$0xff] %v1873
        %1898 = vst [vmem:[#allocation2 + $0x28] sm:$0xff] %v1874
        %1899 = vst [vmem:[#allocation2 + $0x30] sm:$0xff] %v1875
        %1900 = vst [vmem:[#allocation2 + $0x38] sm:$0xff] %v1876
        %1901 = vst [vmem:[#allocation2 + $0x40] sm:$0xff] %v1877
        %1902 = vst [vmem:[#allocation2 + $0x48] sm:$0xff] %v1878
        %1903 = vst [vmem:[#allocation2 + $0x50] sm:$0xff] %v1879
        %1904 = vst [vmem:[#allocation2 + $0x58] sm:$0xff] %v1880
        %1905 = vst [vmem:[#allocation2 + $0x60] sm:$0xff] %v1881
        %1906 = vst [vmem:[#allocation2 + $0x68] sm:$0xff] %v1882
        %1907 = vst [vmem:[#allocation2 + $0x70] sm:$0xff] %v1883
        %1908 = vst [vmem:[#allocation2 + $0x78] sm:$0xff] %v1884
        %1909 = vst [vmem:[#allocation2 + $0x80] sm:$0xff] %v1885
        %1910 = vst [vmem:[#allocation2 + $0x88] sm:$0xff] %v1886
        %1911 = vst [vmem:[#allocation2 + $0x90] sm:$0xff] %v1887
        %1912 = vst [vmem:[#allocation2 + $0x98] sm:$0xff] %v1888
        %1913 = vst [vmem:[#allocation2 + $0xa0] sm:$0xff] %v1889
        %1914 = vst [vmem:[#allocation2 + $0xa8] sm:$0xff] %v1890
        %1915 = vst [vmem:[#allocation2 + $0xb0] sm:$0xff] %v1891
        %1916 = vst [vmem:[#allocation2 + $0xb8] sm:$0xff] %v1892
        %v1917 = vld [vmem:[#allocation2] sm:$0xff]
        %v1918 = vld [vmem:[#allocation2 + $0x8] sm:$0xff]
        %v1919 = vld [vmem:[#allocation2 + $0x10] sm:$0xff]
        %v1920 = vld [vmem:[#allocation2 + $0x18] sm:$0xff]
        %v1921 = vld [vmem:[#allocation2 + $0x20] sm:$0xff]
        %v1922 = vld [vmem:[#allocation2 + $0x28] sm:$0xff]
        %v1923 = vld [vmem:[#allocation2 + $0x30] sm:$0xff]
        %v1924 = vld [vmem:[#allocation2 + $0x38] sm:$0xff]
        %v1925 = vld [vmem:[#allocation2 + $0x40] sm:$0xff]
        %v1926 = vld [vmem:[#allocation2 + $0x48] sm:$0xff]
        %v1927 = vld [vmem:[#allocation2 + $0x50] sm:$0xff]
        %v1928 = vld [vmem:[#allocation2 + $0x58] sm:$0xff]
        %v1929 = vld [vmem:[#allocation2 + $0x60] sm:$0xff]
        %v1930 = vld [vmem:[#allocation2 + $0x68] sm:$0xff]
        %v1931 = vld [vmem:[#allocation2 + $0x70] sm:$0xff]
        %v1932 = vld [vmem:[#allocation2 + $0x78] sm:$0xff]
        %v1933 = vld [vmem:[#allocation2 + $0x80] sm:$0xff]
        %v1934 = vld [vmem:[#allocation2 + $0x88] sm:$0xff]
        %v1935 = vld [vmem:[#allocation2 + $0x90] sm:$0xff]
        %v1936 = vld [vmem:[#allocation2 + $0x98] sm:$0xff]
        %v1937 = vld [vmem:[#allocation2 + $0xa0] sm:$0xff]
        %v1938 = vld [vmem:[#allocation2 + $0xa8] sm:$0xff]
        %v1939 = vld [vmem:[#allocation2 + $0xb0] sm:$0xff]
        %v1940 = vld [vmem:[#allocation2 + $0xb8] sm:$0xff]
        %s1941 = scalar_lea.vmem %s991, 384 [#allocation3]
        %v1942 = vld [vmem:[%s1941] sm:$0xff]
        %v1943 = vld [vmem:[%s1941 + $0x8] sm:$0xff]
        %v1944 = vld [vmem:[%s1941 + $0x10] sm:$0xff]
        %v1945 = vld [vmem:[%s1941 + $0x18] sm:$0xff]
        %v1946 = vld [vmem:[%s1941 + $0x20] sm:$0xff]
        %v1947 = vld [vmem:[%s1941 + $0x28] sm:$0xff]
        %v1948 = vld [vmem:[%s1941 + $0x30] sm:$0xff]
        %v1949 = vld [vmem:[%s1941 + $0x38] sm:$0xff]
        %v1950 = vld [vmem:[%s1941 + $0x40] sm:$0xff]
        %v1951 = vld [vmem:[%s1941 + $0x48] sm:$0xff]
        %v1952 = vld [vmem:[%s1941 + $0x50] sm:$0xff]
        %v1953 = vld [vmem:[%s1941 + $0x58] sm:$0xff]
        %v1954 = vld [vmem:[%s1941 + $0x60] sm:$0xff]
        %v1955 = vld [vmem:[%s1941 + $0x68] sm:$0xff]
        %v1956 = vld [vmem:[%s1941 + $0x70] sm:$0xff]
        %v1957 = vld [vmem:[%s1941 + $0x78] sm:$0xff]
        %v1958 = vld [vmem:[%s1941 + $0x80] sm:$0xff]
        %v1959 = vld [vmem:[%s1941 + $0x88] sm:$0xff]
        %v1960 = vld [vmem:[%s1941 + $0x90] sm:$0xff]
        %v1961 = vld [vmem:[%s1941 + $0x98] sm:$0xff]
        %v1962 = vld [vmem:[%s1941 + $0xa0] sm:$0xff]
        %v1963 = vld [vmem:[%s1941 + $0xa8] sm:$0xff]
        %v1964 = vld [vmem:[%s1941 + $0xb0] sm:$0xff]
        %v1965 = vld [vmem:[%s1941 + $0xb8] sm:$0xff]
        %s1966 = scalar_lea.vmem %s1, 256
        %v1967 = vld [vmem:[%s1966] sm:$0xf]
        %v1968 = vld [vmem:[%s1966 + $0x4] sm:$0xf]
        %v1969 = vld [vmem:[%s1966 + $0x8] sm:$0xf]
        %v1970 = vld [vmem:[%s1966 + $0xc] sm:$0xf]
        %v1971 = vld [vmem:[%s1966 + $0x10] sm:$0xf]
        %v1972 = vld [vmem:[%s1966 + $0x14] sm:$0xf]
        %v1973 = vld [vmem:[%s1966 + $0x18] sm:$0xf]
        %v1974 = vld [vmem:[%s1966 + $0x1c] sm:$0xf]
        %v1975 = vld [vmem:[%s1966 + $0x20] sm:$0xf]
        %v1976 = vld [vmem:[%s1966 + $0x24] sm:$0xf]
        %v1977 = vld [vmem:[%s1966 + $0x28] sm:$0xf]
        %v1978 = vld [vmem:[%s1966 + $0x2c] sm:$0xf]
        %v1979 = vld [vmem:[%s1966 + $0x30] sm:$0xf]
        %v1980 = vld [vmem:[%s1966 + $0x34] sm:$0xf]
        %v1981 = vld [vmem:[%s1966 + $0x38] sm:$0xf]
        %v1982 = vld [vmem:[%s1966 + $0x3c] sm:$0xf]
        %v1983 = vld [vmem:[%s1966 + $0x40] sm:$0xf]
        %v1984 = vld [vmem:[%s1966 + $0x44] sm:$0xf]
        %v1985 = vld [vmem:[%s1966 + $0x48] sm:$0xf]
        %v1986 = vld [vmem:[%s1966 + $0x4c] sm:$0xf]
        %v1987 = vld [vmem:[%s1966 + $0x50] sm:$0xf]
        %v1988 = vld [vmem:[%s1966 + $0x54] sm:$0xf]
        %v1989 = vld [vmem:[%s1966 + $0x58] sm:$0xf]
        %v1990 = vld [vmem:[%s1966 + $0x5c] sm:$0xf]
        %v1991 = vld [vmem:[%s1966 + $0x60] sm:$0xf]
        %v1992 = vld [vmem:[%s1966 + $0x64] sm:$0xf]
        %v1993 = vld [vmem:[%s1966 + $0x68] sm:$0xf]
        %v1994 = vld [vmem:[%s1966 + $0x6c] sm:$0xf]
        %v1995 = vld [vmem:[%s1966 + $0x70] sm:$0xf]
        %v1996 = vld [vmem:[%s1966 + $0x74] sm:$0xf]
        %v1997 = vld [vmem:[%s1966 + $0x78] sm:$0xf]
        %v1998 = vld [vmem:[%s1966 + $0x7c] sm:$0xf]
        %v2023 = vunpack.c.l.b16 %v1942
        %v2024 = vunpack.c.h.b16 %v1942
        %v2025 = vunpack.c.l.b16 %v1943
        %v2026 = vunpack.c.h.b16 %v1943
        %v2027 = vunpack.c.l.b16 %v1944
        %v2028 = vunpack.c.h.b16 %v1944
        %v2029 = vunpack.c.l.b16 %v1945
        %v2030 = vunpack.c.h.b16 %v1945
        %v2031 = vunpack.c.l.b16 %v1946
        %v2032 = vunpack.c.h.b16 %v1946
        %v2033 = vunpack.c.l.b16 %v1947
        %v2034 = vunpack.c.h.b16 %v1947
        %v2035 = vunpack.c.l.b16 %v1948
        %v2036 = vunpack.c.h.b16 %v1948
        %v2037 = vunpack.c.l.b16 %v1949
        %v2038 = vunpack.c.h.b16 %v1949
        %v2039 = vunpack.c.l.b16 %v1950
        %v2040 = vunpack.c.h.b16 %v1950
        %v2041 = vunpack.c.l.b16 %v1951
        %v2042 = vunpack.c.h.b16 %v1951
        %v2043 = vunpack.c.l.b16 %v1952
        %v2044 = vunpack.c.h.b16 %v1952
        %v2045 = vunpack.c.l.b16 %v1953
        %v2046 = vunpack.c.h.b16 %v1953
        %v2047 = vunpack.c.l.b16 %v1954
        %v2048 = vunpack.c.h.b16 %v1954
        %v2049 = vunpack.c.l.b16 %v1955
        %v2050 = vunpack.c.h.b16 %v1955
        %v2051 = vunpack.c.l.b16 %v1956
        %v2052 = vunpack.c.h.b16 %v1956
        %v2053 = vunpack.c.l.b16 %v1957
        %v2054 = vunpack.c.h.b16 %v1957
        %v2055 = vunpack.c.l.b16 %v1958
        %v2056 = vunpack.c.h.b16 %v1958
        %v2057 = vunpack.c.l.b16 %v1959
        %v2058 = vunpack.c.h.b16 %v1959
        %v2059 = vunpack.c.l.b16 %v1960
        %v2060 = vunpack.c.h.b16 %v1960
        %v2061 = vunpack.c.l.b16 %v1961
        %v2062 = vunpack.c.h.b16 %v1961
        %v2063 = vunpack.c.l.b16 %v1962
        %v2064 = vunpack.c.h.b16 %v1962
        %v2065 = vunpack.c.l.b16 %v1963
        %v2066 = vunpack.c.h.b16 %v1963
        %v2067 = vunpack.c.l.b16 %v1964
        %v2068 = vunpack.c.h.b16 %v1964
        %v2069 = vunpack.c.l.b16 %v1965
        %v2070 = vunpack.c.h.b16 %v1965
        %v2071 = vpack.c.b16 %v2025, %v2023
        %v2072 = vpack.c.b16 %v2026, %v2024
        %v2073 = vpack.c.b16 %v2029, %v2027
        %v2074 = vpack.c.b16 %v2030, %v2028
        %v2075 = vpack.c.b16 %v2033, %v2031
        %v2076 = vpack.c.b16 %v2034, %v2032
        %v2077 = vpack.c.b16 %v2037, %v2035
        %v2078 = vpack.c.b16 %v2038, %v2036
        %v2079 = vpack.c.b16 %v2041, %v2039
        %v2080 = vpack.c.b16 %v2042, %v2040
        %v2081 = vpack.c.b16 %v2045, %v2043
        %v2082 = vpack.c.b16 %v2046, %v2044
        %v2083 = vpack.c.b16 %v2049, %v2047
        %v2084 = vpack.c.b16 %v2050, %v2048
        %v2085 = vpack.c.b16 %v2053, %v2051
        %v2086 = vpack.c.b16 %v2054, %v2052
        %v2087 = vpack.c.b16 %v2057, %v2055
        %v2088 = vpack.c.b16 %v2058, %v2056
        %v2089 = vpack.c.b16 %v2061, %v2059
        %v2090 = vpack.c.b16 %v2062, %v2060
        %v2091 = vpack.c.b16 %v2065, %v2063
        %v2092 = vpack.c.b16 %v2066, %v2064
        %v2093 = vpack.c.b16 %v2069, %v2067
        %v2094 = vpack.c.b16 %v2070, %v2068
        %v2151 = vunpack.c.l.b16 %v1967
        %v2152 = vunpack.c.l.b16 %v1968
        %v2153 = vunpack.c.l.b16 %v1969
        %v2154 = vunpack.c.l.b16 %v1970
        %v2155 = vunpack.c.l.b16 %v1971
        %v2156 = vunpack.c.l.b16 %v1972
        %v2157 = vunpack.c.l.b16 %v1973
        %v2158 = vunpack.c.l.b16 %v1974
        %v2159 = vunpack.c.l.b16 %v1975
        %v2160 = vunpack.c.l.b16 %v1976
        %v2161 = vunpack.c.l.b16 %v1977
        %v2162 = vunpack.c.l.b16 %v1978
        %v2163 = vunpack.c.l.b16 %v1979
        %v2164 = vunpack.c.l.b16 %v1980
        %v2165 = vunpack.c.l.b16 %v1981
        %v2166 = vunpack.c.l.b16 %v1982
        %v2167 = vunpack.c.l.b16 %v1983
        %v2168 = vunpack.c.l.b16 %v1984
        %v2169 = vunpack.c.l.b16 %v1985
        %v2170 = vunpack.c.l.b16 %v1986
        %v2171 = vunpack.c.l.b16 %v1987
        %v2172 = vunpack.c.l.b16 %v1988
        %v2173 = vunpack.c.l.b16 %v1989
        %v2174 = vunpack.c.l.b16 %v1990
        %v2175 = vunpack.c.l.b16 %v1991
        %v2176 = vunpack.c.l.b16 %v1992
        %v2177 = vunpack.c.l.b16 %v1993
        %v2178 = vunpack.c.l.b16 %v1994
        %v2179 = vunpack.c.l.b16 %v1995
        %v2180 = vunpack.c.l.b16 %v1996
        %v2181 = vunpack.c.l.b16 %v1997
        %v2182 = vunpack.c.l.b16 %v1998
        %v2183 = vpack.c.b16 %v2152, %v2151
        %v2184 = vpack.c.b16 %v2154, %v2153
        %v2185 = vpack.c.b16 %v2156, %v2155
        %v2186 = vpack.c.b16 %v2158, %v2157
        %v2187 = vpack.c.b16 %v2160, %v2159
        %v2188 = vpack.c.b16 %v2162, %v2161
        %v2189 = vpack.c.b16 %v2164, %v2163
        %v2190 = vpack.c.b16 %v2166, %v2165
        %v2191 = vpack.c.b16 %v2168, %v2167
        %v2192 = vpack.c.b16 %v2170, %v2169
        %v2193 = vpack.c.b16 %v2172, %v2171
        %v2194 = vpack.c.b16 %v2174, %v2173
        %v2195 = vpack.c.b16 %v2176, %v2175
        %v2196 = vpack.c.b16 %v2178, %v2177
        %v2197 = vpack.c.b16 %v2180, %v2179
        %v2198 = vpack.c.b16 %v2182, %v2181
        %2215 = vmatprep.subr.bf16.mxu0 0
        %2216 = vmatpush1.bf16.msra.mxu0 %v2183
        %2217 = vmatprep.subr.bf16.mxu0 0
        %2218 = vmatpush1.bf16.msra.mxu0 %v2184
        %2219 = vmatprep.subr.bf16.mxu0 0
        %2220 = vmatpush1.bf16.msra.mxu0 %v2185
        %2221 = vmatprep.subr.bf16.mxu0 0
        %2222 = vmatpush1.bf16.msra.mxu0 %v2186
        %2223 = vmatprep.subr.bf16.mxu0 0
        %2224 = vmatpush1.bf16.msra.mxu0 %v2187
        %2225 = vmatprep.subr.bf16.mxu0 0
        %2226 = vmatpush1.bf16.msra.mxu0 %v2188
        %2227 = vmatprep.subr.bf16.mxu0 0
        %2228 = vmatpush1.bf16.msra.mxu0 %v2189
        %2229 = vmatprep.subr.bf16.mxu0 0
        %2230 = vmatpush1.bf16.msra.mxu0 %v2190
        %2231 = vmatprep.subr.bf16.mxu0 0
        %2232 = vmatpush1.bf16.msra.mxu0 %v2191
        %2233 = vmatprep.subr.bf16.mxu0 0
        %2234 = vmatpush1.bf16.msra.mxu0 %v2192
        %2235 = vmatprep.subr.bf16.mxu0 0
        %2236 = vmatpush1.bf16.msra.mxu0 %v2193
        %2237 = vmatprep.subr.bf16.mxu0 0
        %2238 = vmatpush1.bf16.msra.mxu0 %v2194
        %2239 = vmatprep.subr.bf16.mxu0 0
        %2240 = vmatpush1.bf16.msra.mxu0 %v2195
        %2241 = vmatprep.subr.bf16.mxu0 0
        %2242 = vmatpush1.bf16.msra.mxu0 %v2196
        %2243 = vmatprep.subr.bf16.mxu0 0
        %2244 = vmatpush1.bf16.msra.mxu0 %v2197
        %2245 = vmatprep.subr.bf16.mxu0 0
        %2246 = vmatpush1.bf16.msra.mxu0 %v2198
        %2247 = vmatprep.mubr.bf16.mxu0 %v2072
        %2248 = vmatmul.mubr.bf16.gmra.mrb[0].mxu0 %v2071
        %v2249 = vpop.f32.mrb[0].mxu0
        %v2250 = vadd.f32 0.0, %v2249
        %v2251 = vpop.f32.mrb[0].mxu0
        %v2252 = vpop.f32.mrb[0].mxu0
        %v2253 = vadd.f32 0.0, %v2252
        %v2254 = vpop.f32.mrb[0].mxu0
        %2255 = vmatprep.mubr.bf16.mxu0 %v2074
        %2256 = vmatmul.mubr.bf16.gmra.mrb[0].mxu0 %v2073
        %v2257 = vpop.f32.mrb[0].mxu0
        %v2258 = vadd.f32 0.0, %v2257
        %v2259 = vpop.f32.mrb[0].mxu0
        %v2260 = vpop.f32.mrb[0].mxu0
        %v2261 = vadd.f32 0.0, %v2260
        %v2262 = vpop.f32.mrb[0].mxu0
        %2263 = vmatprep.mubr.bf16.mxu0 %v2076
        %2264 = vmatmul.mubr.bf16.gmra.mrb[0].mxu0 %v2075
        %v2265 = vpop.f32.mrb[0].mxu0
        %v2266 = vadd.f32 0.0, %v2265
        %v2267 = vpop.f32.mrb[0].mxu0
        %v2268 = vpop.f32.mrb[0].mxu0
        %v2269 = vadd.f32 0.0, %v2268
        %v2270 = vpop.f32.mrb[0].mxu0
        %2271 = vmatprep.mubr.bf16.mxu0 %v2078
        %2272 = vmatmul.mubr.bf16.gmra.mrb[0].mxu0 %v2077
        %v2273 = vpop.f32.mrb[0].mxu0
        %v2274 = vadd.f32 0.0, %v2273
        %v2275 = vpop.f32.mrb[0].mxu0
        %v2276 = vpop.f32.mrb[0].mxu0
        %v2277 = vadd.f32 0.0, %v2276
        %v2278 = vpop.f32.mrb[0].mxu0
        %2279 = vmatprep.mubr.bf16.mxu0 %v2080
        %2280 = vmatmul.mubr.bf16.gmra.mrb[0].mxu0 %v2079
        %v2281 = vpop.f32.mrb[0].mxu0
        %v2282 = vadd.f32 0.0, %v2281
        %v2283 = vpop.f32.mrb[0].mxu0
        %v2284 = vpop.f32.mrb[0].mxu0
        %v2285 = vadd.f32 0.0, %v2284
        %v2286 = vpop.f32.mrb[0].mxu0
        %2287 = vmatprep.mubr.bf16.mxu0 %v2082
        %2288 = vmatmul.mubr.bf16.gmra.mrb[0].mxu0 %v2081
        %v2289 = vpop.f32.mrb[0].mxu0
        %v2290 = vadd.f32 0.0, %v2289
        %v2291 = vpop.f32.mrb[0].mxu0
        %v2292 = vpop.f32.mrb[0].mxu0
        %v2293 = vadd.f32 0.0, %v2292
        %v2294 = vpop.f32.mrb[0].mxu0
        %2295 = vmatprep.mubr.bf16.mxu0 %v2084
        %2296 = vmatmul.mubr.bf16.gmra.mrb[0].mxu0 %v2083
        %v2297 = vpop.f32.mrb[0].mxu0
        %v2298 = vadd.f32 0.0, %v2297
        %v2299 = vpop.f32.mrb[0].mxu0
        %v2300 = vpop.f32.mrb[0].mxu0
        %v2301 = vadd.f32 0.0, %v2300
        %v2302 = vpop.f32.mrb[0].mxu0
        %2303 = vmatprep.mubr.bf16.mxu0 %v2086
        %2304 = vmatmul.mubr.bf16.gmra.mrb[0].mxu0 %v2085
        %v2305 = vpop.f32.mrb[0].mxu0
        %v2306 = vadd.f32 0.0, %v2305
        %v2307 = vpop.f32.mrb[0].mxu0
        %v2308 = vpop.f32.mrb[0].mxu0
        %v2309 = vadd.f32 0.0, %v2308
        %v2310 = vpop.f32.mrb[0].mxu0
        %2311 = vmatprep.mubr.bf16.mxu0 %v2088
        %2312 = vmatmul.mubr.bf16.gmra.mrb[0].mxu0 %v2087
        %v2313 = vpop.f32.mrb[0].mxu0
        %v2314 = vadd.f32 0.0, %v2313
        %v2315 = vpop.f32.mrb[0].mxu0
        %v2316 = vpop.f32.mrb[0].mxu0
        %v2317 = vadd.f32 0.0, %v2316
        %v2318 = vpop.f32.mrb[0].mxu0
        %2319 = vmatprep.mubr.bf16.mxu0 %v2090
        %2320 = vmatmul.mubr.bf16.gmra.mrb[0].mxu0 %v2089
        %v2321 = vpop.f32.mrb[0].mxu0
        %v2322 = vadd.f32 0.0, %v2321
        %v2323 = vpop.f32.mrb[0].mxu0
        %v2324 = vpop.f32.mrb[0].mxu0
        %v2325 = vadd.f32 0.0, %v2324
        %v2326 = vpop.f32.mrb[0].mxu0
        %2327 = vmatprep.mubr.bf16.mxu0 %v2092
        %2328 = vmatmul.mubr.bf16.gmra.mrb[0].mxu0 %v2091
        %v2329 = vpop.f32.mrb[0].mxu0
        %v2330 = vadd.f32 0.0, %v2329
        %v2331 = vpop.f32.mrb[0].mxu0
        %v2332 = vpop.f32.mrb[0].mxu0
        %v2333 = vadd.f32 0.0, %v2332
        %v2334 = vpop.f32.mrb[0].mxu0
        %2335 = vmatprep.mubr.bf16.mxu0 %v2094
        %2336 = vmatmul.mubr.bf16.gmra.mrb[0].mxu0 %v2093
        %v2337 = vpop.f32.mrb[0].mxu0
        %v2338 = vadd.f32 0.0, %v2337
        %v2339 = vpop.f32.mrb[0].mxu0
        %v2340 = vpop.f32.mrb[0].mxu0
        %v2341 = vadd.f32 0.0, %v2340
        %v2342 = vpop.f32.mrb[0].mxu0
        %2343 = vdwg.mxu0
        %v2344 = vadd.f32 %v1917, %v2250
        %v2345 = vadd.f32 %v1918, %v2253
        %v2346 = vadd.f32 %v1919, %v2258
        %v2347 = vadd.f32 %v1920, %v2261
        %v2348 = vadd.f32 %v1921, %v2266
        %v2349 = vadd.f32 %v1922, %v2269
        %v2350 = vadd.f32 %v1923, %v2274
        %v2351 = vadd.f32 %v1924, %v2277
        %v2352 = vadd.f32 %v1925, %v2282
        %v2353 = vadd.f32 %v1926, %v2285
        %v2354 = vadd.f32 %v1927, %v2290
        %v2355 = vadd.f32 %v1928, %v2293
        %v2356 = vadd.f32 %v1929, %v2298
        %v2357 = vadd.f32 %v1930, %v2301
        %v2358 = vadd.f32 %v1931, %v2306
        %v2359 = vadd.f32 %v1932, %v2309
        %v2360 = vadd.f32 %v1933, %v2314
        %v2361 = vadd.f32 %v1934, %v2317
        %v2362 = vadd.f32 %v1935, %v2322
        %v2363 = vadd.f32 %v1936, %v2325
        %v2364 = vadd.f32 %v1937, %v2330
        %v2365 = vadd.f32 %v1938, %v2333
        %v2366 = vadd.f32 %v1939, %v2338
        %v2367 = vadd.f32 %v1940, %v2341
        %2368 = vst [vmem:[#allocation2] sm:$0xff] %v2344
        %2369 = vst [vmem:[#allocation2 + $0x8] sm:$0xff] %v2345
        %2370 = vst [vmem:[#allocation2 + $0x10] sm:$0xff] %v2346
        %2371 = vst [vmem:[#allocation2 + $0x18] sm:$0xff] %v2347
        %2372 = vst [vmem:[#allocation2 + $0x20] sm:$0xff] %v2348
        %2373 = vst [vmem:[#allocation2 + $0x28] sm:$0xff] %v2349
        %2374 = vst [vmem:[#allocation2 + $0x30] sm:$0xff] %v2350
        %2375 = vst [vmem:[#allocation2 + $0x38] sm:$0xff] %v2351
        %2376 = vst [vmem:[#allocation2 + $0x40] sm:$0xff] %v2352
        %2377 = vst [vmem:[#allocation2 + $0x48] sm:$0xff] %v2353
        %2378 = vst [vmem:[#allocation2 + $0x50] sm:$0xff] %v2354
        %2379 = vst [vmem:[#allocation2 + $0x58] sm:$0xff] %v2355
        %2380 = vst [vmem:[#allocation2 + $0x60] sm:$0xff] %v2356
        %2381 = vst [vmem:[#allocation2 + $0x68] sm:$0xff] %v2357
        %2382 = vst [vmem:[#allocation2 + $0x70] sm:$0xff] %v2358
        %2383 = vst [vmem:[#allocation2 + $0x78] sm:$0xff] %v2359
        %2384 = vst [vmem:[#allocation2 + $0x80] sm:$0xff] %v2360
        %2385 = vst [vmem:[#allocation2 + $0x88] sm:$0xff] %v2361
        %2386 = vst [vmem:[#allocation2 + $0x90] sm:$0xff] %v2362
        %2387 = vst [vmem:[#allocation2 + $0x98] sm:$0xff] %v2363
        %2388 = vst [vmem:[#allocation2 + $0xa0] sm:$0xff] %v2364
        %2389 = vst [vmem:[#allocation2 + $0xa8] sm:$0xff] %v2365
        %2390 = vst [vmem:[#allocation2 + $0xb0] sm:$0xff] %v2366
        %2391 = vst [vmem:[#allocation2 + $0xb8] sm:$0xff] %v2367
        %v2392 = vld [vmem:[#allocation2] sm:$0xff]
        %v2393 = vld [vmem:[#allocation2 + $0x8] sm:$0xff]
        %v2394 = vld [vmem:[#allocation2 + $0x10] sm:$0xff]
        %v2395 = vld [vmem:[#allocation2 + $0x18] sm:$0xff]
        %v2396 = vld [vmem:[#allocation2 + $0x20] sm:$0xff]
        %v2397 = vld [vmem:[#allocation2 + $0x28] sm:$0xff]
        %v2398 = vld [vmem:[#allocation2 + $0x30] sm:$0xff]
        %v2399 = vld [vmem:[#allocation2 + $0x38] sm:$0xff]
        %v2400 = vld [vmem:[#allocation2 + $0x40] sm:$0xff]
        %v2401 = vld [vmem:[#allocation2 + $0x48] sm:$0xff]
        %v2402 = vld [vmem:[#allocation2 + $0x50] sm:$0xff]
        %v2403 = vld [vmem:[#allocation2 + $0x58] sm:$0xff]
        %v2404 = vld [vmem:[#allocation2 + $0x60] sm:$0xff]
        %v2405 = vld [vmem:[#allocation2 + $0x68] sm:$0xff]
        %v2406 = vld [vmem:[#allocation2 + $0x70] sm:$0xff]
        %v2407 = vld [vmem:[#allocation2 + $0x78] sm:$0xff]
        %v2408 = vld [vmem:[#allocation2 + $0x80] sm:$0xff]
        %v2409 = vld [vmem:[#allocation2 + $0x88] sm:$0xff]
        %v2410 = vld [vmem:[#allocation2 + $0x90] sm:$0xff]
        %v2411 = vld [vmem:[#allocation2 + $0x98] sm:$0xff]
        %v2412 = vld [vmem:[#allocation2 + $0xa0] sm:$0xff]
        %v2413 = vld [vmem:[#allocation2 + $0xa8] sm:$0xff]
        %v2414 = vld [vmem:[#allocation2 + $0xb0] sm:$0xff]
        %v2415 = vld [vmem:[#allocation2 + $0xb8] sm:$0xff]
        %s2416 = scalar_lea.vmem %s991, 576 [#allocation3]
        %v2417 = vld [vmem:[%s2416] sm:$0xff]
        %v2418 = vld [vmem:[%s2416 + $0x8] sm:$0xff]
        %v2419 = vld [vmem:[%s2416 + $0x10] sm:$0xff]
        %v2420 = vld [vmem:[%s2416 + $0x18] sm:$0xff]
        %v2421 = vld [vmem:[%s2416 + $0x20] sm:$0xff]
        %v2422 = vld [vmem:[%s2416 + $0x28] sm:$0xff]
        %v2423 = vld [vmem:[%s2416 + $0x30] sm:$0xff]
        %v2424 = vld [vmem:[%s2416 + $0x38] sm:$0xff]
        %v2425 = vld [vmem:[%s2416 + $0x40] sm:$0xff]
        %v2426 = vld [vmem:[%s2416 + $0x48] sm:$0xff]
        %v2427 = vld [vmem:[%s2416 + $0x50] sm:$0xff]
        %v2428 = vld [vmem:[%s2416 + $0x58] sm:$0xff]
        %v2429 = vld [vmem:[%s2416 + $0x60] sm:$0xff]
        %v2430 = vld [vmem:[%s2416 + $0x68] sm:$0xff]
        %v2431 = vld [vmem:[%s2416 + $0x70] sm:$0xff]
        %v2432 = vld [vmem:[%s2416 + $0x78] sm:$0xff]
        %v2433 = vld [vmem:[%s2416 + $0x80] sm:$0xff]
        %v2434 = vld [vmem:[%s2416 + $0x88] sm:$0xff]
        %v2435 = vld [vmem:[%s2416 + $0x90] sm:$0xff]
        %v2436 = vld [vmem:[%s2416 + $0x98] sm:$0xff]
        %v2437 = vld [vmem:[%s2416 + $0xa0] sm:$0xff]
        %v2438 = vld [vmem:[%s2416 + $0xa8] sm:$0xff]
        %v2439 = vld [vmem:[%s2416 + $0xb0] sm:$0xff]
        %v2440 = vld [vmem:[%s2416 + $0xb8] sm:$0xff]
        %s2441 = scalar_lea.vmem %s1, 384
        %v2442 = vld [vmem:[%s2441] sm:$0xf]
        %v2443 = vld [vmem:[%s2441 + $0x4] sm:$0xf]
        %v2444 = vld [vmem:[%s2441 + $0x8] sm:$0xf]
        %v2445 = vld [vmem:[%s2441 + $0xc] sm:$0xf]
        %v2446 = vld [vmem:[%s2441 + $0x10] sm:$0xf]
        %v2447 = vld [vmem:[%s2441 + $0x14] sm:$0xf]
        %v2448 = vld [vmem:[%s2441 + $0x18] sm:$0xf]
        %v2449 = vld [vmem:[%s2441 + $0x1c] sm:$0xf]
        %v2450 = vld [vmem:[%s2441 + $0x20] sm:$0xf]
        %v2451 = vld [vmem:[%s2441 + $0x24] sm:$0xf]
        %v2452 = vld [vmem:[%s2441 + $0x28] sm:$0xf]
        %v2453 = vld [vmem:[%s2441 + $0x2c] sm:$0xf]
        %v2454 = vld [vmem:[%s2441 + $0x30] sm:$0xf]
        %v2455 = vld [vmem:[%s2441 + $0x34] sm:$0xf]
        %v2456 = vld [vmem:[%s2441 + $0x38] sm:$0xf]
        %v2457 = vld [vmem:[%s2441 + $0x3c] sm:$0xf]
        %v2458 = vld [vmem:[%s2441 + $0x40] sm:$0xf]
        %v2459 = vld [vmem:[%s2441 + $0x44] sm:$0xf]
        %v2460 = vld [vmem:[%s2441 + $0x48] sm:$0xf]
        %v2461 = vld [vmem:[%s2441 + $0x4c] sm:$0xf]
        %v2462 = vld [vmem:[%s2441 + $0x50] sm:$0xf]
        %v2463 = vld [vmem:[%s2441 + $0x54] sm:$0xf]
        %v2464 = vld [vmem:[%s2441 + $0x58] sm:$0xf]
        %v2465 = vld [vmem:[%s2441 + $0x5c] sm:$0xf]
        %v2466 = vld [vmem:[%s2441 + $0x60] sm:$0xf]
        %v2467 = vld [vmem:[%s2441 + $0x64] sm:$0xf]
        %v2468 = vld [vmem:[%s2441 + $0x68] sm:$0xf]
        %v2469 = vld [vmem:[%s2441 + $0x6c] sm:$0xf]
        %v2470 = vld [vmem:[%s2441 + $0x70] sm:$0xf]
        %v2471 = vld [vmem:[%s2441 + $0x74] sm:$0xf]
        %v2472 = vld [vmem:[%s2441 + $0x78] sm:$0xf]
        %v2473 = vld [vmem:[%s2441 + $0x7c] sm:$0xf]
        %v2498 = vunpack.c.l.b16 %v2417
        %v2499 = vunpack.c.h.b16 %v2417
        %v2500 = vunpack.c.l.b16 %v2418
        %v2501 = vunpack.c.h.b16 %v2418
        %v2502 = vunpack.c.l.b16 %v2419
        %v2503 = vunpack.c.h.b16 %v2419
        %v2504 = vunpack.c.l.b16 %v2420
        %v2505 = vunpack.c.h.b16 %v2420
        %v2506 = vunpack.c.l.b16 %v2421
        %v2507 = vunpack.c.h.b16 %v2421
        %v2508 = vunpack.c.l.b16 %v2422
        %v2509 = vunpack.c.h.b16 %v2422
        %v2510 = vunpack.c.l.b16 %v2423
        %v2511 = vunpack.c.h.b16 %v2423
        %v2512 = vunpack.c.l.b16 %v2424
        %v2513 = vunpack.c.h.b16 %v2424
        %v2514 = vunpack.c.l.b16 %v2425
        %v2515 = vunpack.c.h.b16 %v2425
        %v2516 = vunpack.c.l.b16 %v2426
        %v2517 = vunpack.c.h.b16 %v2426
        %v2518 = vunpack.c.l.b16 %v2427
        %v2519 = vunpack.c.h.b16 %v2427
        %v2520 = vunpack.c.l.b16 %v2428
        %v2521 = vunpack.c.h.b16 %v2428
        %v2522 = vunpack.c.l.b16 %v2429
        %v2523 = vunpack.c.h.b16 %v2429
        %v2524 = vunpack.c.l.b16 %v2430
        %v2525 = vunpack.c.h.b16 %v2430
        %v2526 = vunpack.c.l.b16 %v2431
        %v2527 = vunpack.c.h.b16 %v2431
        %v2528 = vunpack.c.l.b16 %v2432
        %v2529 = vunpack.c.h.b16 %v2432
        %v2530 = vunpack.c.l.b16 %v2433
        %v2531 = vunpack.c.h.b16 %v2433
        %v2532 = vunpack.c.l.b16 %v2434
        %v2533 = vunpack.c.h.b16 %v2434
        %v2534 = vunpack.c.l.b16 %v2435
        %v2535 = vunpack.c.h.b16 %v2435
        %v2536 = vunpack.c.l.b16 %v2436
        %v2537 = vunpack.c.h.b16 %v2436
        %v2538 = vunpack.c.l.b16 %v2437
        %v2539 = vunpack.c.h.b16 %v2437
        %v2540 = vunpack.c.l.b16 %v2438
        %v2541 = vunpack.c.h.b16 %v2438
        %v2542 = vunpack.c.l.b16 %v2439
        %v2543 = vunpack.c.h.b16 %v2439
        %v2544 = vunpack.c.l.b16 %v2440
        %v2545 = vunpack.c.h.b16 %v2440
        %v2546 = vpack.c.b16 %v2500, %v2498
        %v2547 = vpack.c.b16 %v2501, %v2499
        %v2548 = vpack.c.b16 %v2504, %v2502
        %v2549 = vpack.c.b16 %v2505, %v2503
        %v2550 = vpack.c.b16 %v2508, %v2506
        %v2551 = vpack.c.b16 %v2509, %v2507
        %v2552 = vpack.c.b16 %v2512, %v2510
        %v2553 = vpack.c.b16 %v2513, %v2511
        %v2554 = vpack.c.b16 %v2516, %v2514
        %v2555 = vpack.c.b16 %v2517, %v2515
        %v2556 = vpack.c.b16 %v2520, %v2518
        %v2557 = vpack.c.b16 %v2521, %v2519
        %v2558 = vpack.c.b16 %v2524, %v2522
        %v2559 = vpack.c.b16 %v2525, %v2523
        %v2560 = vpack.c.b16 %v2528, %v2526
        %v2561 = vpack.c.b16 %v2529, %v2527
        %v2562 = vpack.c.b16 %v2532, %v2530
        %v2563 = vpack.c.b16 %v2533, %v2531
        %v2564 = vpack.c.b16 %v2536, %v2534
        %v2565 = vpack.c.b16 %v2537, %v2535
        %v2566 = vpack.c.b16 %v2540, %v2538
        %v2567 = vpack.c.b16 %v2541, %v2539
        %v2568 = vpack.c.b16 %v2544, %v2542
        %v2569 = vpack.c.b16 %v2545, %v2543
        %v2626 = vunpack.c.l.b16 %v2442
        %v2627 = vunpack.c.l.b16 %v2443
        %v2628 = vunpack.c.l.b16 %v2444
        %v2629 = vunpack.c.l.b16 %v2445
        %v2630 = vunpack.c.l.b16 %v2446
        %v2631 = vunpack.c.l.b16 %v2447
        %v2632 = vunpack.c.l.b16 %v2448
        %v2633 = vunpack.c.l.b16 %v2449
        %v2634 = vunpack.c.l.b16 %v2450
        %v2635 = vunpack.c.l.b16 %v2451
        %v2636 = vunpack.c.l.b16 %v2452
        %v2637 = vunpack.c.l.b16 %v2453
        %v2638 = vunpack.c.l.b16 %v2454
        %v2639 = vunpack.c.l.b16 %v2455
        %v2640 = vunpack.c.l.b16 %v2456
        %v2641 = vunpack.c.l.b16 %v2457
        %v2642 = vunpack.c.l.b16 %v2458
        %v2643 = vunpack.c.l.b16 %v2459
        %v2644 = vunpack.c.l.b16 %v2460
        %v2645 = vunpack.c.l.b16 %v2461
        %v2646 = vunpack.c.l.b16 %v2462
        %v2647 = vunpack.c.l.b16 %v2463
        %v2648 = vunpack.c.l.b16 %v2464
        %v2649 = vunpack.c.l.b16 %v2465
        %v2650 = vunpack.c.l.b16 %v2466
        %v2651 = vunpack.c.l.b16 %v2467
        %v2652 = vunpack.c.l.b16 %v2468
        %v2653 = vunpack.c.l.b16 %v2469
        %v2654 = vunpack.c.l.b16 %v2470
        %v2655 = vunpack.c.l.b16 %v2471
        %v2656 = vunpack.c.l.b16 %v2472
        %v2657 = vunpack.c.l.b16 %v2473
        %v2658 = vpack.c.b16 %v2627, %v2626
        %v2659 = vpack.c.b16 %v2629, %v2628
        %v2660 = vpack.c.b16 %v2631, %v2630
        %v2661 = vpack.c.b16 %v2633, %v2632
        %v2662 = vpack.c.b16 %v2635, %v2634
        %v2663 = vpack.c.b16 %v2637, %v2636
        %v2664 = vpack.c.b16 %v2639, %v2638
        %v2665 = vpack.c.b16 %v2641, %v2640
        %v2666 = vpack.c.b16 %v2643, %v2642
        %v2667 = vpack.c.b16 %v2645, %v2644
        %v2668 = vpack.c.b16 %v2647, %v2646
        %v2669 = vpack.c.b16 %v2649, %v2648
        %v2670 = vpack.c.b16 %v2651, %v2650
        %v2671 = vpack.c.b16 %v2653, %v2652
        %v2672 = vpack.c.b16 %v2655, %v2654
        %v2673 = vpack.c.b16 %v2657, %v2656
        %2690 = vmatprep.subr.bf16.mxu0 0
        %2691 = vmatpush1.bf16.msra.mxu0 %v2658
        %2692 = vmatprep.subr.bf16.mxu0 0
        %2693 = vmatpush1.bf16.msra.mxu0 %v2659
        %2694 = vmatprep.subr.bf16.mxu0 0
        %2695 = vmatpush1.bf16.msra.mxu0 %v2660
        %2696 = vmatprep.subr.bf16.mxu0 0
        %2697 = vmatpush1.bf16.msra.mxu0 %v2661
        %2698 = vmatprep.subr.bf16.mxu0 0
        %2699 = vmatpush1.bf16.msra.mxu0 %v2662
        %2700 = vmatprep.subr.bf16.mxu0 0
        %2701 = vmatpush1.bf16.msra.mxu0 %v2663
        %2702 = vmatprep.subr.bf16.mxu0 0
        %2703 = vmatpush1.bf16.msra.mxu0 %v2664
        %2704 = vmatprep.subr.bf16.mxu0 0
        %2705 = vmatpush1.bf16.msra.mxu0 %v2665
        %2706 = vmatprep.subr.bf16.mxu0 0
        %2707 = vmatpush1.bf16.msra.mxu0 %v2666
        %2708 = vmatprep.subr.bf16.mxu0 0
        %2709 = vmatpush1.bf16.msra.mxu0 %v2667
        %2710 = vmatprep.subr.bf16.mxu0 0
        %2711 = vmatpush1.bf16.msra.mxu0 %v2668
        %2712 = vmatprep.subr.bf16.mxu0 0
        %2713 = vmatpush1.bf16.msra.mxu0 %v2669
        %2714 = vmatprep.subr.bf16.mxu0 0
        %2715 = vmatpush1.bf16.msra.mxu0 %v2670
        %2716 = vmatprep.subr.bf16.mxu0 0
        %2717 = vmatpush1.bf16.msra.mxu0 %v2671
        %2718 = vmatprep.subr.bf16.mxu0 0
        %2719 = vmatpush1.bf16.msra.mxu0 %v2672
        %2720 = vmatprep.subr.bf16.mxu0 0
        %2721 = vmatpush1.bf16.msra.mxu0 %v2673
        %2722 = vmatprep.mubr.bf16.mxu0 %v2547
        %2723 = vmatmul.mubr.bf16.gmra.mrb[0].mxu0 %v2546
        %v2724 = vpop.f32.mrb[0].mxu0
        %v2725 = vadd.f32 0.0, %v2724
        %v2726 = vpop.f32.mrb[0].mxu0
        %v2727 = vpop.f32.mrb[0].mxu0
        %v2728 = vadd.f32 0.0, %v2727
        %v2729 = vpop.f32.mrb[0].mxu0
        %2730 = vmatprep.mubr.bf16.mxu0 %v2549
        %2731 = vmatmul.mubr.bf16.gmra.mrb[0].mxu0 %v2548
        %v2732 = vpop.f32.mrb[0].mxu0
        %v2733 = vadd.f32 0.0, %v2732
        %v2734 = vpop.f32.mrb[0].mxu0
        %v2735 = vpop.f32.mrb[0].mxu0
        %v2736 = vadd.f32 0.0, %v2735
        %v2737 = vpop.f32.mrb[0].mxu0
        %2738 = vmatprep.mubr.bf16.mxu0 %v2551
        %2739 = vmatmul.mubr.bf16.gmra.mrb[0].mxu0 %v2550
        %v2740 = vpop.f32.mrb[0].mxu0
        %v2741 = vadd.f32 0.0, %v2740
        %v2742 = vpop.f32.mrb[0].mxu0
        %v2743 = vpop.f32.mrb[0].mxu0
        %v2744 = vadd.f32 0.0, %v2743
        %v2745 = vpop.f32.mrb[0].mxu0
        %2746 = vmatprep.mubr.bf16.mxu0 %v2553
        %2747 = vmatmul.mubr.bf16.gmra.mrb[0].mxu0 %v2552
        %v2748 = vpop.f32.mrb[0].mxu0
        %v2749 = vadd.f32 0.0, %v2748
        %v2750 = vpop.f32.mrb[0].mxu0
        %v2751 = vpop.f32.mrb[0].mxu0
        %v2752 = vadd.f32 0.0, %v2751
        %v2753 = vpop.f32.mrb[0].mxu0
        %2754 = vmatprep.mubr.bf16.mxu0 %v2555
        %2755 = vmatmul.mubr.bf16.gmra.mrb[0].mxu0 %v2554
        %v2756 = vpop.f32.mrb[0].mxu0
        %v2757 = vadd.f32 0.0, %v2756
        %v2758 = vpop.f32.mrb[0].mxu0
        %v2759 = vpop.f32.mrb[0].mxu0
        %v2760 = vadd.f32 0.0, %v2759
        %v2761 = vpop.f32.mrb[0].mxu0
        %2762 = vmatprep.mubr.bf16.mxu0 %v2557
        %2763 = vmatmul.mubr.bf16.gmra.mrb[0].mxu0 %v2556
        %v2764 = vpop.f32.mrb[0].mxu0
        %v2765 = vadd.f32 0.0, %v2764
        %v2766 = vpop.f32.mrb[0].mxu0
        %v2767 = vpop.f32.mrb[0].mxu0
        %v2768 = vadd.f32 0.0, %v2767
        %v2769 = vpop.f32.mrb[0].mxu0
        %2770 = vmatprep.mubr.bf16.mxu0 %v2559
        %2771 = vmatmul.mubr.bf16.gmra.mrb[0].mxu0 %v2558
        %v2772 = vpop.f32.mrb[0].mxu0
        %v2773 = vadd.f32 0.0, %v2772
        %v2774 = vpop.f32.mrb[0].mxu0
        %v2775 = vpop.f32.mrb[0].mxu0
        %v2776 = vadd.f32 0.0, %v2775
        %v2777 = vpop.f32.mrb[0].mxu0
        %2778 = vmatprep.mubr.bf16.mxu0 %v2561
        %2779 = vmatmul.mubr.bf16.gmra.mrb[0].mxu0 %v2560
        %v2780 = vpop.f32.mrb[0].mxu0
        %v2781 = vadd.f32 0.0, %v2780
        %v2782 = vpop.f32.mrb[0].mxu0
        %v2783 = vpop.f32.mrb[0].mxu0
        %v2784 = vadd.f32 0.0, %v2783
        %v2785 = vpop.f32.mrb[0].mxu0
        %2786 = vmatprep.mubr.bf16.mxu0 %v2563
        %2787 = vmatmul.mubr.bf16.gmra.mrb[0].mxu0 %v2562
        %v2788 = vpop.f32.mrb[0].mxu0
        %v2789 = vadd.f32 0.0, %v2788
        %v2790 = vpop.f32.mrb[0].mxu0
        %v2791 = vpop.f32.mrb[0].mxu0
        %v2792 = vadd.f32 0.0, %v2791
        %v2793 = vpop.f32.mrb[0].mxu0
        %2794 = vmatprep.mubr.bf16.mxu0 %v2565
        %2795 = vmatmul.mubr.bf16.gmra.mrb[0].mxu0 %v2564
        %v2796 = vpop.f32.mrb[0].mxu0
        %v2797 = vadd.f32 0.0, %v2796
        %v2798 = vpop.f32.mrb[0].mxu0
        %v2799 = vpop.f32.mrb[0].mxu0
        %v2800 = vadd.f32 0.0, %v2799
        %v2801 = vpop.f32.mrb[0].mxu0
        %2802 = vmatprep.mubr.bf16.mxu0 %v2567
        %2803 = vmatmul.mubr.bf16.gmra.mrb[0].mxu0 %v2566
        %v2804 = vpop.f32.mrb[0].mxu0
        %v2805 = vadd.f32 0.0, %v2804
        %v2806 = vpop.f32.mrb[0].mxu0
        %v2807 = vpop.f32.mrb[0].mxu0
        %v2808 = vadd.f32 0.0, %v2807
        %v2809 = vpop.f32.mrb[0].mxu0
        %2810 = vmatprep.mubr.bf16.mxu0 %v2569
        %2811 = vmatmul.mubr.bf16.gmra.mrb[0].mxu0 %v2568
        %v2812 = vpop.f32.mrb[0].mxu0
        %v2813 = vadd.f32 0.0, %v2812
        %v2814 = vpop.f32.mrb[0].mxu0
        %v2815 = vpop.f32.mrb[0].mxu0
        %v2816 = vadd.f32 0.0, %v2815
        %v2817 = vpop.f32.mrb[0].mxu0
        %2818 = vdwg.mxu0
        %v2819 = vadd.f32 %v2392, %v2725
        %v2820 = vadd.f32 %v2393, %v2728
        %v2821 = vadd.f32 %v2394, %v2733
        %v2822 = vadd.f32 %v2395, %v2736
        %v2823 = vadd.f32 %v2396, %v2741
        %v2824 = vadd.f32 %v2397, %v2744
        %v2825 = vadd.f32 %v2398, %v2749
        %v2826 = vadd.f32 %v2399, %v2752
        %v2827 = vadd.f32 %v2400, %v2757
        %v2828 = vadd.f32 %v2401, %v2760
        %v2829 = vadd.f32 %v2402, %v2765
        %v2830 = vadd.f32 %v2403, %v2768
        %v2831 = vadd.f32 %v2404, %v2773
        %v2832 = vadd.f32 %v2405, %v2776
        %v2833 = vadd.f32 %v2406, %v2781
        %v2834 = vadd.f32 %v2407, %v2784
        %v2835 = vadd.f32 %v2408, %v2789
        %v2836 = vadd.f32 %v2409, %v2792
        %v2837 = vadd.f32 %v2410, %v2797
        %v2838 = vadd.f32 %v2411, %v2800
        %v2839 = vadd.f32 %v2412, %v2805
        %v2840 = vadd.f32 %v2413, %v2808
        %v2841 = vadd.f32 %v2414, %v2813
        %v2842 = vadd.f32 %v2415, %v2816
        %2843 = vst [vmem:[#allocation2] sm:$0xff] %v2819
        %2844 = vst [vmem:[#allocation2 + $0x8] sm:$0xff] %v2820
        %2845 = vst [vmem:[#allocation2 + $0x10] sm:$0xff] %v2821
        %2846 = vst [vmem:[#allocation2 + $0x18] sm:$0xff] %v2822
        %2847 = vst [vmem:[#allocation2 + $0x20] sm:$0xff] %v2823
        %2848 = vst [vmem:[#allocation2 + $0x28] sm:$0xff] %v2824
        %2849 = vst [vmem:[#allocation2 + $0x30] sm:$0xff] %v2825
        %2850 = vst [vmem:[#allocation2 + $0x38] sm:$0xff] %v2826
        %2851 = vst [vmem:[#allocation2 + $0x40] sm:$0xff] %v2827
        %2852 = vst [vmem:[#allocation2 + $0x48] sm:$0xff] %v2828
        %2853 = vst [vmem:[#allocation2 + $0x50] sm:$0xff] %v2829
        %2854 = vst [vmem:[#allocation2 + $0x58] sm:$0xff] %v2830
        %2855 = vst [vmem:[#allocation2 + $0x60] sm:$0xff] %v2831
        %2856 = vst [vmem:[#allocation2 + $0x68] sm:$0xff] %v2832
        %2857 = vst [vmem:[#allocation2 + $0x70] sm:$0xff] %v2833
        %2858 = vst [vmem:[#allocation2 + $0x78] sm:$0xff] %v2834
        %2859 = vst [vmem:[#allocation2 + $0x80] sm:$0xff] %v2835
        %2860 = vst [vmem:[#allocation2 + $0x88] sm:$0xff] %v2836
        %2861 = vst [vmem:[#allocation2 + $0x90] sm:$0xff] %v2837
        %2862 = vst [vmem:[#allocation2 + $0x98] sm:$0xff] %v2838
        %2863 = vst [vmem:[#allocation2 + $0xa0] sm:$0xff] %v2839
        %2864 = vst [vmem:[#allocation2 + $0xa8] sm:$0xff] %v2840
        %2865 = vst [vmem:[#allocation2 + $0xb0] sm:$0xff] %v2841
        %2866 = vst [vmem:[#allocation2 + $0xb8] sm:$0xff] %v2842
        %v2867 = vld [vmem:[#allocation2] sm:$0xff]
        %v2868 = vld [vmem:[#allocation2 + $0x8] sm:$0xff]
        %v2869 = vld [vmem:[#allocation2 + $0x10] sm:$0xff]
        %v2870 = vld [vmem:[#allocation2 + $0x18] sm:$0xff]
        %v2871 = vld [vmem:[#allocation2 + $0x20] sm:$0xff]
        %v2872 = vld [vmem:[#allocation2 + $0x28] sm:$0xff]
        %v2873 = vld [vmem:[#allocation2 + $0x30] sm:$0xff]
        %v2874 = vld [vmem:[#allocation2 + $0x38] sm:$0xff]
        %v2875 = vld [vmem:[#allocation2 + $0x40] sm:$0xff]
        %v2876 = vld [vmem:[#allocation2 + $0x48] sm:$0xff]
        %v2877 = vld [vmem:[#allocation2 + $0x50] sm:$0xff]
        %v2878 = vld [vmem:[#allocation2 + $0x58] sm:$0xff]
        %v2879 = vld [vmem:[#allocation2 + $0x60] sm:$0xff]
        %v2880 = vld [vmem:[#allocation2 + $0x68] sm:$0xff]
        %v2881 = vld [vmem:[#allocation2 + $0x70] sm:$0xff]
        %v2882 = vld [vmem:[#allocation2 + $0x78] sm:$0xff]
        %v2883 = vld [vmem:[#allocation2 + $0x80] sm:$0xff]
        %v2884 = vld [vmem:[#allocation2 + $0x88] sm:$0xff]
        %v2885 = vld [vmem:[#allocation2 + $0x90] sm:$0xff]
        %v2886 = vld [vmem:[#allocation2 + $0x98] sm:$0xff]
        %v2887 = vld [vmem:[#allocation2 + $0xa0] sm:$0xff]
        %v2888 = vld [vmem:[#allocation2 + $0xa8] sm:$0xff]
        %v2889 = vld [vmem:[#allocation2 + $0xb0] sm:$0xff]
        %v2890 = vld [vmem:[#allocation2 + $0xb8] sm:$0xff]
        %s2891 = scalar_lea.vmem %s991, 768 [#allocation3]
        %v2892 = vld [vmem:[%s2891] sm:$0xff]
        %v2893 = vld [vmem:[%s2891 + $0x8] sm:$0xff]
        %v2894 = vld [vmem:[%s2891 + $0x10] sm:$0xff]
        %v2895 = vld [vmem:[%s2891 + $0x18] sm:$0xff]
        %v2896 = vld [vmem:[%s2891 + $0x20] sm:$0xff]
        %v2897 = vld [vmem:[%s2891 + $0x28] sm:$0xff]
        %v2898 = vld [vmem:[%s2891 + $0x30] sm:$0xff]
        %v2899 = vld [vmem:[%s2891 + $0x38] sm:$0xff]
        %v2900 = vld [vmem:[%s2891 + $0x40] sm:$0xff]
        %v2901 = vld [vmem:[%s2891 + $0x48] sm:$0xff]
        %v2902 = vld [vmem:[%s2891 + $0x50] sm:$0xff]
        %v2903 = vld [vmem:[%s2891 + $0x58] sm:$0xff]
        %v2904 = vld [vmem:[%s2891 + $0x60] sm:$0xff]
        %v2905 = vld [vmem:[%s2891 + $0x68] sm:$0xff]
        %v2906 = vld [vmem:[%s2891 + $0x70] sm:$0xff]
        %v2907 = vld [vmem:[%s2891 + $0x78] sm:$0xff]
        %v2908 = vld [vmem:[%s2891 + $0x80] sm:$0xff]
        %v2909 = vld [vmem:[%s2891 + $0x88] sm:$0xff]
        %v2910 = vld [vmem:[%s2891 + $0x90] sm:$0xff]
        %v2911 = vld [vmem:[%s2891 + $0x98] sm:$0xff]
        %v2912 = vld [vmem:[%s2891 + $0xa0] sm:$0xff]
        %v2913 = vld [vmem:[%s2891 + $0xa8] sm:$0xff]
        %v2914 = vld [vmem:[%s2891 + $0xb0] sm:$0xff]
        %v2915 = vld [vmem:[%s2891 + $0xb8] sm:$0xff]
        %s2916 = scalar_lea.vmem %s1, 512
        %v2917 = vld [vmem:[%s2916] sm:$0xf]
        %v2918 = vld [vmem:[%s2916 + $0x4] sm:$0xf]
        %v2919 = vld [vmem:[%s2916 + $0x8] sm:$0xf]
        %v2920 = vld [vmem:[%s2916 + $0xc] sm:$0xf]
        %v2921 = vld [vmem:[%s2916 + $0x10] sm:$0xf]
        %v2922 = vld [vmem:[%s2916 + $0x14] sm:$0xf]
        %v2923 = vld [vmem:[%s2916 + $0x18] sm:$0xf]
        %v2924 = vld [vmem:[%s2916 + $0x1c] sm:$0xf]
        %v2925 = vld [vmem:[%s2916 + $0x20] sm:$0xf]
        %v2926 = vld [vmem:[%s2916 + $0x24] sm:$0xf]
        %v2927 = vld [vmem:[%s2916 + $0x28] sm:$0xf]
        %v2928 = vld [vmem:[%s2916 + $0x2c] sm:$0xf]
        %v2929 = vld [vmem:[%s2916 + $0x30] sm:$0xf]
        %v2930 = vld [vmem:[%s2916 + $0x34] sm:$0xf]
        %v2931 = vld [vmem:[%s2916 + $0x38] sm:$0xf]
        %v2932 = vld [vmem:[%s2916 + $0x3c] sm:$0xf]
        %v2933 = vld [vmem:[%s2916 + $0x40] sm:$0xf]
        %v2934 = vld [vmem:[%s2916 + $0x44] sm:$0xf]
        %v2935 = vld [vmem:[%s2916 + $0x48] sm:$0xf]
        %v2936 = vld [vmem:[%s2916 + $0x4c] sm:$0xf]
        %v2937 = vld [vmem:[%s2916 + $0x50] sm:$0xf]
        %v2938 = vld [vmem:[%s2916 + $0x54] sm:$0xf]
        %v2939 = vld [vmem:[%s2916 + $0x58] sm:$0xf]
        %v2940 = vld [vmem:[%s2916 + $0x5c] sm:$0xf]
        %v2941 = vld [vmem:[%s2916 + $0x60] sm:$0xf]
        %v2942 = vld [vmem:[%s2916 + $0x64] sm:$0xf]
        %v2943 = vld [vmem:[%s2916 + $0x68] sm:$0xf]
        %v2944 = vld [vmem:[%s2916 + $0x6c] sm:$0xf]
        %v2945 = vld [vmem:[%s2916 + $0x70] sm:$0xf]
        %v2946 = vld [vmem:[%s2916 + $0x74] sm:$0xf]
        %v2947 = vld [vmem:[%s2916 + $0x78] sm:$0xf]
        %v2948 = vld [vmem:[%s2916 + $0x7c] sm:$0xf]
        %v2973 = vunpack.c.l.b16 %v2892
        %v2974 = vunpack.c.h.b16 %v2892
        %v2975 = vunpack.c.l.b16 %v2893
        %v2976 = vunpack.c.h.b16 %v2893
        %v2977 = vunpack.c.l.b16 %v2894
        %v2978 = vunpack.c.h.b16 %v2894
        %v2979 = vunpack.c.l.b16 %v2895
        %v2980 = vunpack.c.h.b16 %v2895
        %v2981 = vunpack.c.l.b16 %v2896
        %v2982 = vunpack.c.h.b16 %v2896
        %v2983 = vunpack.c.l.b16 %v2897
        %v2984 = vunpack.c.h.b16 %v2897
        %v2985 = vunpack.c.l.b16 %v2898
        %v2986 = vunpack.c.h.b16 %v2898
        %v2987 = vunpack.c.l.b16 %v2899
        %v2988 = vunpack.c.h.b16 %v2899
        %v2989 = vunpack.c.l.b16 %v2900
        %v2990 = vunpack.c.h.b16 %v2900
        %v2991 = vunpack.c.l.b16 %v2901
        %v2992 = vunpack.c.h.b16 %v2901
        %v2993 = vunpack.c.l.b16 %v2902
        %v2994 = vunpack.c.h.b16 %v2902
        %v2995 = vunpack.c.l.b16 %v2903
        %v2996 = vunpack.c.h.b16 %v2903
        %v2997 = vunpack.c.l.b16 %v2904
        %v2998 = vunpack.c.h.b16 %v2904
        %v2999 = vunpack.c.l.b16 %v2905
        %v3000 = vunpack.c.h.b16 %v2905
        %v3001 = vunpack.c.l.b16 %v2906
        %v3002 = vunpack.c.h.b16 %v2906
        %v3003 = vunpack.c.l.b16 %v2907
        %v3004 = vunpack.c.h.b16 %v2907
        %v3005 = vunpack.c.l.b16 %v2908
        %v3006 = vunpack.c.h.b16 %v2908
        %v3007 = vunpack.c.l.b16 %v2909
        %v3008 = vunpack.c.h.b16 %v2909
        %v3009 = vunpack.c.l.b16 %v2910
        %v3010 = vunpack.c.h.b16 %v2910
        %v3011 = vunpack.c.l.b16 %v2911
        %v3012 = vunpack.c.h.b16 %v2911
        %v3013 = vunpack.c.l.b16 %v2912
        %v3014 = vunpack.c.h.b16 %v2912
        %v3015 = vunpack.c.l.b16 %v2913
        %v3016 = vunpack.c.h.b16 %v2913
        %v3017 = vunpack.c.l.b16 %v2914
        %v3018 = vunpack.c.h.b16 %v2914
        %v3019 = vunpack.c.l.b16 %v2915
        %v3020 = vunpack.c.h.b16 %v2915
        %v3021 = vpack.c.b16 %v2975, %v2973
        %v3022 = vpack.c.b16 %v2976, %v2974
        %v3023 = vpack.c.b16 %v2979, %v2977
        %v3024 = vpack.c.b16 %v2980, %v2978
        %v3025 = vpack.c.b16 %v2983, %v2981
        %v3026 = vpack.c.b16 %v2984, %v2982
        %v3027 = vpack.c.b16 %v2987, %v2985
        %v3028 = vpack.c.b16 %v2988, %v2986
        %v3029 = vpack.c.b16 %v2991, %v2989
        %v3030 = vpack.c.b16 %v2992, %v2990
        %v3031 = vpack.c.b16 %v2995, %v2993
        %v3032 = vpack.c.b16 %v2996, %v2994
        %v3033 = vpack.c.b16 %v2999, %v2997
        %v3034 = vpack.c.b16 %v3000, %v2998
        %v3035 = vpack.c.b16 %v3003, %v3001
        %v3036 = vpack.c.b16 %v3004, %v3002
        %v3037 = vpack.c.b16 %v3007, %v3005
        %v3038 = vpack.c.b16 %v3008, %v3006
        %v3039 = vpack.c.b16 %v3011, %v3009
        %v3040 = vpack.c.b16 %v3012, %v3010
        %v3041 = vpack.c.b16 %v3015, %v3013
        %v3042 = vpack.c.b16 %v3016, %v3014
        %v3043 = vpack.c.b16 %v3019, %v3017
        %v3044 = vpack.c.b16 %v3020, %v3018
        %v3101 = vunpack.c.l.b16 %v2917
        %v3102 = vunpack.c.l.b16 %v2918
        %v3103 = vunpack.c.l.b16 %v2919
        %v3104 = vunpack.c.l.b16 %v2920
        %v3105 = vunpack.c.l.b16 %v2921
        %v3106 = vunpack.c.l.b16 %v2922
        %v3107 = vunpack.c.l.b16 %v2923
        %v3108 = vunpack.c.l.b16 %v2924
        %v3109 = vunpack.c.l.b16 %v2925
        %v3110 = vunpack.c.l.b16 %v2926
        %v3111 = vunpack.c.l.b16 %v2927
        %v3112 = vunpack.c.l.b16 %v2928
        %v3113 = vunpack.c.l.b16 %v2929
        %v3114 = vunpack.c.l.b16 %v2930
        %v3115 = vunpack.c.l.b16 %v2931
        %v3116 = vunpack.c.l.b16 %v2932
        %v3117 = vunpack.c.l.b16 %v2933
        %v3118 = vunpack.c.l.b16 %v2934
        %v3119 = vunpack.c.l.b16 %v2935
        %v3120 = vunpack.c.l.b16 %v2936
        %v3121 = vunpack.c.l.b16 %v2937
        %v3122 = vunpack.c.l.b16 %v2938
        %v3123 = vunpack.c.l.b16 %v2939
        %v3124 = vunpack.c.l.b16 %v2940
        %v3125 = vunpack.c.l.b16 %v2941
        %v3126 = vunpack.c.l.b16 %v2942
        %v3127 = vunpack.c.l.b16 %v2943
        %v3128 = vunpack.c.l.b16 %v2944
        %v3129 = vunpack.c.l.b16 %v2945
        %v3130 = vunpack.c.l.b16 %v2946
        %v3131 = vunpack.c.l.b16 %v2947
        %v3132 = vunpack.c.l.b16 %v2948
        %v3133 = vpack.c.b16 %v3102, %v3101
        %v3134 = vpack.c.b16 %v3104, %v3103
        %v3135 = vpack.c.b16 %v3106, %v3105
        %v3136 = vpack.c.b16 %v3108, %v3107
        %v3137 = vpack.c.b16 %v3110, %v3109
        %v3138 = vpack.c.b16 %v3112, %v3111
        %v3139 = vpack.c.b16 %v3114, %v3113
        %v3140 = vpack.c.b16 %v3116, %v3115
        %v3141 = vpack.c.b16 %v3118, %v3117
        %v3142 = vpack.c.b16 %v3120, %v3119
        %v3143 = vpack.c.b16 %v3122, %v3121
        %v3144 = vpack.c.b16 %v3124, %v3123
        %v3145 = vpack.c.b16 %v3126, %v3125
        %v3146 = vpack.c.b16 %v3128, %v3127
        %v3147 = vpack.c.b16 %v3130, %v3129
        %v3148 = vpack.c.b16 %v3132, %v3131
        %3165 = vmatprep.subr.bf16.mxu0 0
        %3166 = vmatpush1.bf16.msra.mxu0 %v3133
        %3167 = vmatprep.subr.bf16.mxu0 0
        %3168 = vmatpush1.bf16.msra.mxu0 %v3134
        %3169 = vmatprep.subr.bf16.mxu0 0
        %3170 = vmatpush1.bf16.msra.mxu0 %v3135
        %3171 = vmatprep.subr.bf16.mxu0 0
        %3172 = vmatpush1.bf16.msra.mxu0 %v3136
        %3173 = vmatprep.subr.bf16.mxu0 0
        %3174 = vmatpush1.bf16.msra.mxu0 %v3137
        %3175 = vmatprep.subr.bf16.mxu0 0
        %3176 = vmatpush1.bf16.msra.mxu0 %v3138
        %3177 = vmatprep.subr.bf16.mxu0 0
        %3178 = vmatpush1.bf16.msra.mxu0 %v3139
        %3179 = vmatprep.subr.bf16.mxu0 0
        %3180 = vmatpush1.bf16.msra.mxu0 %v3140
        %3181 = vmatprep.subr.bf16.mxu0 0
        %3182 = vmatpush1.bf16.msra.mxu0 %v3141
        %3183 = vmatprep.subr.bf16.mxu0 0
        %3184 = vmatpush1.bf16.msra.mxu0 %v3142
        %3185 = vmatprep.subr.bf16.mxu0 0
        %3186 = vmatpush1.bf16.msra.mxu0 %v3143
        %3187 = vmatprep.subr.bf16.mxu0 0
        %3188 = vmatpush1.bf16.msra.mxu0 %v3144
        %3189 = vmatprep.subr.bf16.mxu0 0
        %3190 = vmatpush1.bf16.msra.mxu0 %v3145
        %3191 = vmatprep.subr.bf16.mxu0 0
        %3192 = vmatpush1.bf16.msra.mxu0 %v3146
        %3193 = vmatprep.subr.bf16.mxu0 0
        %3194 = vmatpush1.bf16.msra.mxu0 %v3147
        %3195 = vmatprep.subr.bf16.mxu0 0
        %3196 = vmatpush1.bf16.msra.mxu0 %v3148
        %3197 = vmatprep.mubr.bf16.mxu0 %v3022
        %3198 = vmatmul.mubr.bf16.gmra.mrb[0].mxu0 %v3021
        %v3199 = vpop.f32.mrb[0].mxu0
        %v3200 = vadd.f32 0.0, %v3199
        %v3201 = vpop.f32.mrb[0].mxu0
        %v3202 = vpop.f32.mrb[0].mxu0
        %v3203 = vadd.f32 0.0, %v3202
        %v3204 = vpop.f32.mrb[0].mxu0
        %3205 = vmatprep.mubr.bf16.mxu0 %v3024
        %3206 = vmatmul.mubr.bf16.gmra.mrb[0].mxu0 %v3023
        %v3207 = vpop.f32.mrb[0].mxu0
        %v3208 = vadd.f32 0.0, %v3207
        %v3209 = vpop.f32.mrb[0].mxu0
        %v3210 = vpop.f32.mrb[0].mxu0
        %v3211 = vadd.f32 0.0, %v3210
        %v3212 = vpop.f32.mrb[0].mxu0
        %3213 = vmatprep.mubr.bf16.mxu0 %v3026
        %3214 = vmatmul.mubr.bf16.gmra.mrb[0].mxu0 %v3025
        %v3215 = vpop.f32.mrb[0].mxu0
        %v3216 = vadd.f32 0.0, %v3215
        %v3217 = vpop.f32.mrb[0].mxu0
        %v3218 = vpop.f32.mrb[0].mxu0
        %v3219 = vadd.f32 0.0, %v3218
        %v3220 = vpop.f32.mrb[0].mxu0
        %3221 = vmatprep.mubr.bf16.mxu0 %v3028
        %3222 = vmatmul.mubr.bf16.gmra.mrb[0].mxu0 %v3027
        %v3223 = vpop.f32.mrb[0].mxu0
        %v3224 = vadd.f32 0.0, %v3223
        %v3225 = vpop.f32.mrb[0].mxu0
        %v3226 = vpop.f32.mrb[0].mxu0
        %v3227 = vadd.f32 0.0, %v3226
        %v3228 = vpop.f32.mrb[0].mxu0
        %3229 = vmatprep.mubr.bf16.mxu0 %v3030
        %3230 = vmatmul.mubr.bf16.gmra.mrb[0].mxu0 %v3029
        %v3231 = vpop.f32.mrb[0].mxu0
        %v3232 = vadd.f32 0.0, %v3231
        %v3233 = vpop.f32.mrb[0].mxu0
        %v3234 = vpop.f32.mrb[0].mxu0
        %v3235 = vadd.f32 0.0, %v3234
        %v3236 = vpop.f32.mrb[0].mxu0
        %3237 = vmatprep.mubr.bf16.mxu0 %v3032
        %3238 = vmatmul.mubr.bf16.gmra.mrb[0].mxu0 %v3031
        %v3239 = vpop.f32.mrb[0].mxu0
        %v3240 = vadd.f32 0.0, %v3239
        %v3241 = vpop.f32.mrb[0].mxu0
        %v3242 = vpop.f32.mrb[0].mxu0
        %v3243 = vadd.f32 0.0, %v3242
        %v3244 = vpop.f32.mrb[0].mxu0
        %3245 = vmatprep.mubr.bf16.mxu0 %v3034
        %3246 = vmatmul.mubr.bf16.gmra.mrb[0].mxu0 %v3033
        %v3247 = vpop.f32.mrb[0].mxu0
        %v3248 = vadd.f32 0.0, %v3247
        %v3249 = vpop.f32.mrb[0].mxu0
        %v3250 = vpop.f32.mrb[0].mxu0
        %v3251 = vadd.f32 0.0, %v3250
        %v3252 = vpop.f32.mrb[0].mxu0
        %3253 = vmatprep.mubr.bf16.mxu0 %v3036
        %3254 = vmatmul.mubr.bf16.gmra.mrb[0].mxu0 %v3035
        %v3255 = vpop.f32.mrb[0].mxu0
        %v3256 = vadd.f32 0.0, %v3255
        %v3257 = vpop.f32.mrb[0].mxu0
        %v3258 = vpop.f32.mrb[0].mxu0
        %v3259 = vadd.f32 0.0, %v3258
        %v3260 = vpop.f32.mrb[0].mxu0
        %3261 = vmatprep.mubr.bf16.mxu0 %v3038
        %3262 = vmatmul.mubr.bf16.gmra.mrb[0].mxu0 %v3037
        %v3263 = vpop.f32.mrb[0].mxu0
        %v3264 = vadd.f32 0.0, %v3263
        %v3265 = vpop.f32.mrb[0].mxu0
        %v3266 = vpop.f32.mrb[0].mxu0
        %v3267 = vadd.f32 0.0, %v3266
        %v3268 = vpop.f32.mrb[0].mxu0
        %3269 = vmatprep.mubr.bf16.mxu0 %v3040
        %3270 = vmatmul.mubr.bf16.gmra.mrb[0].mxu0 %v3039
        %v3271 = vpop.f32.mrb[0].mxu0
        %v3272 = vadd.f32 0.0, %v3271
        %v3273 = vpop.f32.mrb[0].mxu0
        %v3274 = vpop.f32.mrb[0].mxu0
        %v3275 = vadd.f32 0.0, %v3274
        %v3276 = vpop.f32.mrb[0].mxu0
        %3277 = vmatprep.mubr.bf16.mxu0 %v3042
        %3278 = vmatmul.mubr.bf16.gmra.mrb[0].mxu0 %v3041
        %v3279 = vpop.f32.mrb[0].mxu0
        %v3280 = vadd.f32 0.0, %v3279
        %v3281 = vpop.f32.mrb[0].mxu0
        %v3282 = vpop.f32.mrb[0].mxu0
        %v3283 = vadd.f32 0.0, %v3282
        %v3284 = vpop.f32.mrb[0].mxu0
        %3285 = vmatprep.mubr.bf16.mxu0 %v3044
        %3286 = vmatmul.mubr.bf16.gmra.mrb[0].mxu0 %v3043
        %v3287 = vpop.f32.mrb[0].mxu0
        %v3288 = vadd.f32 0.0, %v3287
        %v3289 = vpop.f32.mrb[0].mxu0
        %v3290 = vpop.f32.mrb[0].mxu0
        %v3291 = vadd.f32 0.0, %v3290
        %v3292 = vpop.f32.mrb[0].mxu0
        %3293 = vdwg.mxu0
        %v3294 = vadd.f32 %v2867, %v3200
        %v3295 = vadd.f32 %v2868, %v3203
        %v3296 = vadd.f32 %v2869, %v3208
        %v3297 = vadd.f32 %v2870, %v3211
        %v3298 = vadd.f32 %v2871, %v3216
        %v3299 = vadd.f32 %v2872, %v3219
        %v3300 = vadd.f32 %v2873, %v3224
        %v3301 = vadd.f32 %v2874, %v3227
        %v3302 = vadd.f32 %v2875, %v3232
        %v3303 = vadd.f32 %v2876, %v3235
        %v3304 = vadd.f32 %v2877, %v3240
        %v3305 = vadd.f32 %v2878, %v3243
        %v3306 = vadd.f32 %v2879, %v3248
        %v3307 = vadd.f32 %v2880, %v3251
        %v3308 = vadd.f32 %v2881, %v3256
        %v3309 = vadd.f32 %v2882, %v3259
        %v3310 = vadd.f32 %v2883, %v3264
        %v3311 = vadd.f32 %v2884, %v3267
        %v3312 = vadd.f32 %v2885, %v3272
        %v3313 = vadd.f32 %v2886, %v3275
        %v3314 = vadd.f32 %v2887, %v3280
        %v3315 = vadd.f32 %v2888, %v3283
        %v3316 = vadd.f32 %v2889, %v3288
        %v3317 = vadd.f32 %v2890, %v3291
        %3318 = vst [vmem:[#allocation2] sm:$0xff] %v3294
        %3319 = vst [vmem:[#allocation2 + $0x8] sm:$0xff] %v3295
        %3320 = vst [vmem:[#allocation2 + $0x10] sm:$0xff] %v3296
        %3321 = vst [vmem:[#allocation2 + $0x18] sm:$0xff] %v3297
        %3322 = vst [vmem:[#allocation2 + $0x20] sm:$0xff] %v3298
        %3323 = vst [vmem:[#allocation2 + $0x28] sm:$0xff] %v3299
        %3324 = vst [vmem:[#allocation2 + $0x30] sm:$0xff] %v3300
        %3325 = vst [vmem:[#allocation2 + $0x38] sm:$0xff] %v3301
        %3326 = vst [vmem:[#allocation2 + $0x40] sm:$0xff] %v3302
        %3327 = vst [vmem:[#allocation2 + $0x48] sm:$0xff] %v3303
        %3328 = vst [vmem:[#allocation2 + $0x50] sm:$0xff] %v3304
        %3329 = vst [vmem:[#allocation2 + $0x58] sm:$0xff] %v3305
        %3330 = vst [vmem:[#allocation2 + $0x60] sm:$0xff] %v3306
        %3331 = vst [vmem:[#allocation2 + $0x68] sm:$0xff] %v3307
        %3332 = vst [vmem:[#allocation2 + $0x70] sm:$0xff] %v3308
        %3333 = vst [vmem:[#allocation2 + $0x78] sm:$0xff] %v3309
        %3334 = vst [vmem:[#allocation2 + $0x80] sm:$0xff] %v3310
        %3335 = vst [vmem:[#allocation2 + $0x88] sm:$0xff] %v3311
        %3336 = vst [vmem:[#allocation2 + $0x90] sm:$0xff] %v3312
        %3337 = vst [vmem:[#allocation2 + $0x98] sm:$0xff] %v3313
        %3338 = vst [vmem:[#allocation2 + $0xa0] sm:$0xff] %v3314
        %3339 = vst [vmem:[#allocation2 + $0xa8] sm:$0xff] %v3315
        %3340 = vst [vmem:[#allocation2 + $0xb0] sm:$0xff] %v3316
        %3341 = vst [vmem:[#allocation2 + $0xb8] sm:$0xff] %v3317
        %v3342 = vld [vmem:[#allocation2] sm:$0xff]
        %v3343 = vld [vmem:[#allocation2 + $0x8] sm:$0xff]
        %v3344 = vld [vmem:[#allocation2 + $0x10] sm:$0xff]
        %v3345 = vld [vmem:[#allocation2 + $0x18] sm:$0xff]
        %v3346 = vld [vmem:[#allocation2 + $0x20] sm:$0xff]
        %v3347 = vld [vmem:[#allocation2 + $0x28] sm:$0xff]
        %v3348 = vld [vmem:[#allocation2 + $0x30] sm:$0xff]
        %v3349 = vld [vmem:[#allocation2 + $0x38] sm:$0xff]
        %v3350 = vld [vmem:[#allocation2 + $0x40] sm:$0xff]
        %v3351 = vld [vmem:[#allocation2 + $0x48] sm:$0xff]
        %v3352 = vld [vmem:[#allocation2 + $0x50] sm:$0xff]
        %v3353 = vld [vmem:[#allocation2 + $0x58] sm:$0xff]
        %v3354 = vld [vmem:[#allocation2 + $0x60] sm:$0xff]
        %v3355 = vld [vmem:[#allocation2 + $0x68] sm:$0xff]
        %v3356 = vld [vmem:[#allocation2 + $0x70] sm:$0xff]
        %v3357 = vld [vmem:[#allocation2 + $0x78] sm:$0xff]
        %v3358 = vld [vmem:[#allocation2 + $0x80] sm:$0xff]
        %v3359 = vld [vmem:[#allocation2 + $0x88] sm:$0xff]
        %v3360 = vld [vmem:[#allocation2 + $0x90] sm:$0xff]
        %v3361 = vld [vmem:[#allocation2 + $0x98] sm:$0xff]
        %v3362 = vld [vmem:[#allocation2 + $0xa0] sm:$0xff]
        %v3363 = vld [vmem:[#allocation2 + $0xa8] sm:$0xff]
        %v3364 = vld [vmem:[#allocation2 + $0xb0] sm:$0xff]
        %v3365 = vld [vmem:[#allocation2 + $0xb8] sm:$0xff]
        %s3366 = scalar_lea.vmem %s991, 960 [#allocation3]
        %v3367 = vld [vmem:[%s3366] sm:$0xff]
        %v3368 = vld [vmem:[%s3366 + $0x8] sm:$0xff]
        %v3369 = vld [vmem:[%s3366 + $0x10] sm:$0xff]
        %v3370 = vld [vmem:[%s3366 + $0x18] sm:$0xff]
        %v3371 = vld [vmem:[%s3366 + $0x20] sm:$0xff]
        %v3372 = vld [vmem:[%s3366 + $0x28] sm:$0xff]
        %v3373 = vld [vmem:[%s3366 + $0x30] sm:$0xff]
        %v3374 = vld [vmem:[%s3366 + $0x38] sm:$0xff]
        %v3375 = vld [vmem:[%s3366 + $0x40] sm:$0xff]
        %v3376 = vld [vmem:[%s3366 + $0x48] sm:$0xff]
        %v3377 = vld [vmem:[%s3366 + $0x50] sm:$0xff]
        %v3378 = vld [vmem:[%s3366 + $0x58] sm:$0xff]
        %v3379 = vld [vmem:[%s3366 + $0x60] sm:$0xff]
        %v3380 = vld [vmem:[%s3366 + $0x68] sm:$0xff]
        %v3381 = vld [vmem:[%s3366 + $0x70] sm:$0xff]
        %v3382 = vld [vmem:[%s3366 + $0x78] sm:$0xff]
        %v3383 = vld [vmem:[%s3366 + $0x80] sm:$0xff]
        %v3384 = vld [vmem:[%s3366 + $0x88] sm:$0xff]
        %v3385 = vld [vmem:[%s3366 + $0x90] sm:$0xff]
        %v3386 = vld [vmem:[%s3366 + $0x98] sm:$0xff]
        %v3387 = vld [vmem:[%s3366 + $0xa0] sm:$0xff]
        %v3388 = vld [vmem:[%s3366 + $0xa8] sm:$0xff]
        %v3389 = vld [vmem:[%s3366 + $0xb0] sm:$0xff]
        %v3390 = vld [vmem:[%s3366 + $0xb8] sm:$0xff]
        %s3391 = scalar_lea.vmem %s1, 640
        %v3392 = vld [vmem:[%s3391] sm:$0xf]
        %v3393 = vld [vmem:[%s3391 + $0x4] sm:$0xf]
        %v3394 = vld [vmem:[%s3391 + $0x8] sm:$0xf]
        %v3395 = vld [vmem:[%s3391 + $0xc] sm:$0xf]
        %v3396 = vld [vmem:[%s3391 + $0x10] sm:$0xf]
        %v3397 = vld [vmem:[%s3391 + $0x14] sm:$0xf]
        %v3398 = vld [vmem:[%s3391 + $0x18] sm:$0xf]
        %v3399 = vld [vmem:[%s3391 + $0x1c] sm:$0xf]
        %v3400 = vld [vmem:[%s3391 + $0x20] sm:$0xf]
        %v3401 = vld [vmem:[%s3391 + $0x24] sm:$0xf]
        %v3402 = vld [vmem:[%s3391 + $0x28] sm:$0xf]
        %v3403 = vld [vmem:[%s3391 + $0x2c] sm:$0xf]
        %v3404 = vld [vmem:[%s3391 + $0x30] sm:$0xf]
        %v3405 = vld [vmem:[%s3391 + $0x34] sm:$0xf]
        %v3406 = vld [vmem:[%s3391 + $0x38] sm:$0xf]
        %v3407 = vld [vmem:[%s3391 + $0x3c] sm:$0xf]
        %v3408 = vld [vmem:[%s3391 + $0x40] sm:$0xf]
        %v3409 = vld [vmem:[%s3391 + $0x44] sm:$0xf]
        %v3410 = vld [vmem:[%s3391 + $0x48] sm:$0xf]
        %v3411 = vld [vmem:[%s3391 + $0x4c] sm:$0xf]
        %v3412 = vld [vmem:[%s3391 + $0x50] sm:$0xf]
        %v3413 = vld [vmem:[%s3391 + $0x54] sm:$0xf]
        %v3414 = vld [vmem:[%s3391 + $0x58] sm:$0xf]
        %v3415 = vld [vmem:[%s3391 + $0x5c] sm:$0xf]
        %v3416 = vld [vmem:[%s3391 + $0x60] sm:$0xf]
        %v3417 = vld [vmem:[%s3391 + $0x64] sm:$0xf]
        %v3418 = vld [vmem:[%s3391 + $0x68] sm:$0xf]
        %v3419 = vld [vmem:[%s3391 + $0x6c] sm:$0xf]
        %v3420 = vld [vmem:[%s3391 + $0x70] sm:$0xf]
        %v3421 = vld [vmem:[%s3391 + $0x74] sm:$0xf]
        %v3422 = vld [vmem:[%s3391 + $0x78] sm:$0xf]
        %v3423 = vld [vmem:[%s3391 + $0x7c] sm:$0xf]
        %v3448 = vunpack.c.l.b16 %v3367
        %v3449 = vunpack.c.h.b16 %v3367
        %v3450 = vunpack.c.l.b16 %v3368
        %v3451 = vunpack.c.h.b16 %v3368
        %v3452 = vunpack.c.l.b16 %v3369
        %v3453 = vunpack.c.h.b16 %v3369
        %v3454 = vunpack.c.l.b16 %v3370
        %v3455 = vunpack.c.h.b16 %v3370
        %v3456 = vunpack.c.l.b16 %v3371
        %v3457 = vunpack.c.h.b16 %v3371
        %v3458 = vunpack.c.l.b16 %v3372
        %v3459 = vunpack.c.h.b16 %v3372
        %v3460 = vunpack.c.l.b16 %v3373
        %v3461 = vunpack.c.h.b16 %v3373
        %v3462 = vunpack.c.l.b16 %v3374
        %v3463 = vunpack.c.h.b16 %v3374
        %v3464 = vunpack.c.l.b16 %v3375
        %v3465 = vunpack.c.h.b16 %v3375
        %v3466 = vunpack.c.l.b16 %v3376
        %v3467 = vunpack.c.h.b16 %v3376
        %v3468 = vunpack.c.l.b16 %v3377
        %v3469 = vunpack.c.h.b16 %v3377
        %v3470 = vunpack.c.l.b16 %v3378
        %v3471 = vunpack.c.h.b16 %v3378
        %v3472 = vunpack.c.l.b16 %v3379
        %v3473 = vunpack.c.h.b16 %v3379
        %v3474 = vunpack.c.l.b16 %v3380
        %v3475 = vunpack.c.h.b16 %v3380
        %v3476 = vunpack.c.l.b16 %v3381
        %v3477 = vunpack.c.h.b16 %v3381
        %v3478 = vunpack.c.l.b16 %v3382
        %v3479 = vunpack.c.h.b16 %v3382
        %v3480 = vunpack.c.l.b16 %v3383
        %v3481 = vunpack.c.h.b16 %v3383
        %v3482 = vunpack.c.l.b16 %v3384
        %v3483 = vunpack.c.h.b16 %v3384
        %v3484 = vunpack.c.l.b16 %v3385
        %v3485 = vunpack.c.h.b16 %v3385
        %v3486 = vunpack.c.l.b16 %v3386
        %v3487 = vunpack.c.h.b16 %v3386
        %v3488 = vunpack.c.l.b16 %v3387
        %v3489 = vunpack.c.h.b16 %v3387
        %v3490 = vunpack.c.l.b16 %v3388
        %v3491 = vunpack.c.h.b16 %v3388
        %v3492 = vunpack.c.l.b16 %v3389
        %v3493 = vunpack.c.h.b16 %v3389
        %v3494 = vunpack.c.l.b16 %v3390
        %v3495 = vunpack.c.h.b16 %v3390
        %v3496 = vpack.c.b16 %v3450, %v3448
        %v3497 = vpack.c.b16 %v3451, %v3449
        %v3498 = vpack.c.b16 %v3454, %v3452
        %v3499 = vpack.c.b16 %v3455, %v3453
        %v3500 = vpack.c.b16 %v3458, %v3456
        %v3501 = vpack.c.b16 %v3459, %v3457
        %v3502 = vpack.c.b16 %v3462, %v3460
        %v3503 = vpack.c.b16 %v3463, %v3461
        %v3504 = vpack.c.b16 %v3466, %v3464
        %v3505 = vpack.c.b16 %v3467, %v3465
        %v3506 = vpack.c.b16 %v3470, %v3468
        %v3507 = vpack.c.b16 %v3471, %v3469
        %v3508 = vpack.c.b16 %v3474, %v3472
        %v3509 = vpack.c.b16 %v3475, %v3473
        %v3510 = vpack.c.b16 %v3478, %v3476
        %v3511 = vpack.c.b16 %v3479, %v3477
        %v3512 = vpack.c.b16 %v3482, %v3480
        %v3513 = vpack.c.b16 %v3483, %v3481
        %v3514 = vpack.c.b16 %v3486, %v3484
        %v3515 = vpack.c.b16 %v3487, %v3485
        %v3516 = vpack.c.b16 %v3490, %v3488
        %v3517 = vpack.c.b16 %v3491, %v3489
        %v3518 = vpack.c.b16 %v3494, %v3492
        %v3519 = vpack.c.b16 %v3495, %v3493
        %v3576 = vunpack.c.l.b16 %v3392
        %v3577 = vunpack.c.l.b16 %v3393
        %v3578 = vunpack.c.l.b16 %v3394
        %v3579 = vunpack.c.l.b16 %v3395
        %v3580 = vunpack.c.l.b16 %v3396
        %v3581 = vunpack.c.l.b16 %v3397
        %v3582 = vunpack.c.l.b16 %v3398
        %v3583 = vunpack.c.l.b16 %v3399
        %v3584 = vunpack.c.l.b16 %v3400
        %v3585 = vunpack.c.l.b16 %v3401
        %v3586 = vunpack.c.l.b16 %v3402
        %v3587 = vunpack.c.l.b16 %v3403
        %v3588 = vunpack.c.l.b16 %v3404
        %v3589 = vunpack.c.l.b16 %v3405
        %v3590 = vunpack.c.l.b16 %v3406
        %v3591 = vunpack.c.l.b16 %v3407
        %v3592 = vunpack.c.l.b16 %v3408
        %v3593 = vunpack.c.l.b16 %v3409
        %v3594 = vunpack.c.l.b16 %v3410
        %v3595 = vunpack.c.l.b16 %v3411
        %v3596 = vunpack.c.l.b16 %v3412
        %v3597 = vunpack.c.l.b16 %v3413
        %v3598 = vunpack.c.l.b16 %v3414
        %v3599 = vunpack.c.l.b16 %v3415
        %v3600 = vunpack.c.l.b16 %v3416
        %v3601 = vunpack.c.l.b16 %v3417
        %v3602 = vunpack.c.l.b16 %v3418
        %v3603 = vunpack.c.l.b16 %v3419
        %v3604 = vunpack.c.l.b16 %v3420
        %v3605 = vunpack.c.l.b16 %v3421
        %v3606 = vunpack.c.l.b16 %v3422
        %v3607 = vunpack.c.l.b16 %v3423
        %v3608 = vpack.c.b16 %v3577, %v3576
        %v3609 = vpack.c.b16 %v3579, %v3578
        %v3610 = vpack.c.b16 %v3581, %v3580
        %v3611 = vpack.c.b16 %v3583, %v3582
        %v3612 = vpack.c.b16 %v3585, %v3584
        %v3613 = vpack.c.b16 %v3587, %v3586
        %v3614 = vpack.c.b16 %v3589, %v3588
        %v3615 = vpack.c.b16 %v3591, %v3590
        %v3616 = vpack.c.b16 %v3593, %v3592
        %v3617 = vpack.c.b16 %v3595, %v3594
        %v3618 = vpack.c.b16 %v3597, %v3596
        %v3619 = vpack.c.b16 %v3599, %v3598
        %v3620 = vpack.c.b16 %v3601, %v3600
        %v3621 = vpack.c.b16 %v3603, %v3602
        %v3622 = vpack.c.b16 %v3605, %v3604
        %v3623 = vpack.c.b16 %v3607, %v3606
        %3640 = vmatprep.subr.bf16.mxu0 0
        %3641 = vmatpush1.bf16.msra.mxu0 %v3608
        %3642 = vmatprep.subr.bf16.mxu0 0
        %3643 = vmatpush1.bf16.msra.mxu0 %v3609
        %3644 = vmatprep.subr.bf16.mxu0 0
        %3645 = vmatpush1.bf16.msra.mxu0 %v3610
        %3646 = vmatprep.subr.bf16.mxu0 0
        %3647 = vmatpush1.bf16.msra.mxu0 %v3611
        %3648 = vmatprep.subr.bf16.mxu0 0
        %3649 = vmatpush1.bf16.msra.mxu0 %v3612
        %3650 = vmatprep.subr.bf16.mxu0 0
        %3651 = vmatpush1.bf16.msra.mxu0 %v3613
        %3652 = vmatprep.subr.bf16.mxu0 0
        %3653 = vmatpush1.bf16.msra.mxu0 %v3614
        %3654 = vmatprep.subr.bf16.mxu0 0
        %3655 = vmatpush1.bf16.msra.mxu0 %v3615
        %3656 = vmatprep.subr.bf16.mxu0 0
        %3657 = vmatpush1.bf16.msra.mxu0 %v3616
        %3658 = vmatprep.subr.bf16.mxu0 0
        %3659 = vmatpush1.bf16.msra.mxu0 %v3617
        %3660 = vmatprep.subr.bf16.mxu0 0
        %3661 = vmatpush1.bf16.msra.mxu0 %v3618
        %3662 = vmatprep.subr.bf16.mxu0 0
        %3663 = vmatpush1.bf16.msra.mxu0 %v3619
        %3664 = vmatprep.subr.bf16.mxu0 0
        %3665 = vmatpush1.bf16.msra.mxu0 %v3620
        %3666 = vmatprep.subr.bf16.mxu0 0
        %3667 = vmatpush1.bf16.msra.mxu0 %v3621
        %3668 = vmatprep.subr.bf16.mxu0 0
        %3669 = vmatpush1.bf16.msra.mxu0 %v3622
        %3670 = vmatprep.subr.bf16.mxu0 0
        %3671 = vmatpush1.bf16.msra.mxu0 %v3623
        %3672 = vmatprep.mubr.bf16.mxu0 %v3497
        %3673 = vmatmul.mubr.bf16.gmra.mrb[0].mxu0 %v3496
        %v3674 = vpop.f32.mrb[0].mxu0
        %v3675 = vadd.f32 0.0, %v3674
        %v3676 = vpop.f32.mrb[0].mxu0
        %v3677 = vpop.f32.mrb[0].mxu0
        %v3678 = vadd.f32 0.0, %v3677
        %v3679 = vpop.f32.mrb[0].mxu0
        %3680 = vmatprep.mubr.bf16.mxu0 %v3499
        %3681 = vmatmul.mubr.bf16.gmra.mrb[0].mxu0 %v3498
        %v3682 = vpop.f32.mrb[0].mxu0
        %v3683 = vadd.f32 0.0, %v3682
        %v3684 = vpop.f32.mrb[0].mxu0
        %v3685 = vpop.f32.mrb[0].mxu0
        %v3686 = vadd.f32 0.0, %v3685
        %v3687 = vpop.f32.mrb[0].mxu0
        %3688 = vmatprep.mubr.bf16.mxu0 %v3501
        %3689 = vmatmul.mubr.bf16.gmra.mrb[0].mxu0 %v3500
        %v3690 = vpop.f32.mrb[0].mxu0
        %v3691 = vadd.f32 0.0, %v3690
        %v3692 = vpop.f32.mrb[0].mxu0
        %v3693 = vpop.f32.mrb[0].mxu0
        %v3694 = vadd.f32 0.0, %v3693
        %v3695 = vpop.f32.mrb[0].mxu0
        %3696 = vmatprep.mubr.bf16.mxu0 %v3503
        %3697 = vmatmul.mubr.bf16.gmra.mrb[0].mxu0 %v3502
        %v3698 = vpop.f32.mrb[0].mxu0
        %v3699 = vadd.f32 0.0, %v3698
        %v3700 = vpop.f32.mrb[0].mxu0
        %v3701 = vpop.f32.mrb[0].mxu0
        %v3702 = vadd.f32 0.0, %v3701
        %v3703 = vpop.f32.mrb[0].mxu0
        %3704 = vmatprep.mubr.bf16.mxu0 %v3505
        %3705 = vmatmul.mubr.bf16.gmra.mrb[0].mxu0 %v3504
        %v3706 = vpop.f32.mrb[0].mxu0
        %v3707 = vadd.f32 0.0, %v3706
        %v3708 = vpop.f32.mrb[0].mxu0
        %v3709 = vpop.f32.mrb[0].mxu0
        %v3710 = vadd.f32 0.0, %v3709
        %v3711 = vpop.f32.mrb[0].mxu0
        %3712 = vmatprep.mubr.bf16.mxu0 %v3507
        %3713 = vmatmul.mubr.bf16.gmra.mrb[0].mxu0 %v3506
        %v3714 = vpop.f32.mrb[0].mxu0
        %v3715 = vadd.f32 0.0, %v3714
        %v3716 = vpop.f32.mrb[0].mxu0
        %v3717 = vpop.f32.mrb[0].mxu0
        %v3718 = vadd.f32 0.0, %v3717
        %v3719 = vpop.f32.mrb[0].mxu0
        %3720 = vmatprep.mubr.bf16.mxu0 %v3509
        %3721 = vmatmul.mubr.bf16.gmra.mrb[0].mxu0 %v3508
        %v3722 = vpop.f32.mrb[0].mxu0
        %v3723 = vadd.f32 0.0, %v3722
        %v3724 = vpop.f32.mrb[0].mxu0
        %v3725 = vpop.f32.mrb[0].mxu0
        %v3726 = vadd.f32 0.0, %v3725
        %v3727 = vpop.f32.mrb[0].mxu0
        %3728 = vmatprep.mubr.bf16.mxu0 %v3511
        %3729 = vmatmul.mubr.bf16.gmra.mrb[0].mxu0 %v3510
        %v3730 = vpop.f32.mrb[0].mxu0
        %v3731 = vadd.f32 0.0, %v3730
        %v3732 = vpop.f32.mrb[0].mxu0
        %v3733 = vpop.f32.mrb[0].mxu0
        %v3734 = vadd.f32 0.0, %v3733
        %v3735 = vpop.f32.mrb[0].mxu0
        %3736 = vmatprep.mubr.bf16.mxu0 %v3513
        %3737 = vmatmul.mubr.bf16.gmra.mrb[0].mxu0 %v3512
        %v3738 = vpop.f32.mrb[0].mxu0
        %v3739 = vadd.f32 0.0, %v3738
        %v3740 = vpop.f32.mrb[0].mxu0
        %v3741 = vpop.f32.mrb[0].mxu0
        %v3742 = vadd.f32 0.0, %v3741
        %v3743 = vpop.f32.mrb[0].mxu0
        %3744 = vmatprep.mubr.bf16.mxu0 %v3515
        %3745 = vmatmul.mubr.bf16.gmra.mrb[0].mxu0 %v3514
        %v3746 = vpop.f32.mrb[0].mxu0
        %v3747 = vadd.f32 0.0, %v3746
        %v3748 = vpop.f32.mrb[0].mxu0
        %v3749 = vpop.f32.mrb[0].mxu0
        %v3750 = vadd.f32 0.0, %v3749
        %v3751 = vpop.f32.mrb[0].mxu0
        %3752 = vmatprep.mubr.bf16.mxu0 %v3517
        %3753 = vmatmul.mubr.bf16.gmra.mrb[0].mxu0 %v3516
        %v3754 = vpop.f32.mrb[0].mxu0
        %v3755 = vadd.f32 0.0, %v3754
        %v3756 = vpop.f32.mrb[0].mxu0
        %v3757 = vpop.f32.mrb[0].mxu0
        %v3758 = vadd.f32 0.0, %v3757
        %v3759 = vpop.f32.mrb[0].mxu0
        %3760 = vmatprep.mubr.bf16.mxu0 %v3519
        %3761 = vmatmul.mubr.bf16.gmra.mrb[0].mxu0 %v3518
        %v3762 = vpop.f32.mrb[0].mxu0
        %v3763 = vadd.f32 0.0, %v3762
        %v3764 = vpop.f32.mrb[0].mxu0
        %v3765 = vpop.f32.mrb[0].mxu0
        %v3766 = vadd.f32 0.0, %v3765
        %v3767 = vpop.f32.mrb[0].mxu0
        %3768 = vdwg.mxu0
        %v3769 = vadd.f32 %v3342, %v3675
        %v3770 = vadd.f32 %v3343, %v3678
        %v3771 = vadd.f32 %v3344, %v3683
        %v3772 = vadd.f32 %v3345, %v3686
        %v3773 = vadd.f32 %v3346, %v3691
        %v3774 = vadd.f32 %v3347, %v3694
        %v3775 = vadd.f32 %v3348, %v3699
        %v3776 = vadd.f32 %v3349, %v3702
        %v3777 = vadd.f32 %v3350, %v3707
        %v3778 = vadd.f32 %v3351, %v3710
        %v3779 = vadd.f32 %v3352, %v3715
        %v3780 = vadd.f32 %v3353, %v3718
        %v3781 = vadd.f32 %v3354, %v3723
        %v3782 = vadd.f32 %v3355, %v3726
        %v3783 = vadd.f32 %v3356, %v3731
        %v3784 = vadd.f32 %v3357, %v3734
        %v3785 = vadd.f32 %v3358, %v3739
        %v3786 = vadd.f32 %v3359, %v3742
        %v3787 = vadd.f32 %v3360, %v3747
        %v3788 = vadd.f32 %v3361, %v3750
        %v3789 = vadd.f32 %v3362, %v3755
        %v3790 = vadd.f32 %v3363, %v3758
        %v3791 = vadd.f32 %v3364, %v3763
        %v3792 = vadd.f32 %v3365, %v3766
        %3793 = vst [vmem:[#allocation2] sm:$0xff] %v3769
        %3794 = vst [vmem:[#allocation2 + $0x8] sm:$0xff] %v3770
        %3795 = vst [vmem:[#allocation2 + $0x10] sm:$0xff] %v3771
        %3796 = vst [vmem:[#allocation2 + $0x18] sm:$0xff] %v3772
        %3797 = vst [vmem:[#allocation2 + $0x20] sm:$0xff] %v3773
        %3798 = vst [vmem:[#allocation2 + $0x28] sm:$0xff] %v3774
        %3799 = vst [vmem:[#allocation2 + $0x30] sm:$0xff] %v3775
        %3800 = vst [vmem:[#allocation2 + $0x38] sm:$0xff] %v3776
        %3801 = vst [vmem:[#allocation2 + $0x40] sm:$0xff] %v3777
        %3802 = vst [vmem:[#allocation2 + $0x48] sm:$0xff] %v3778
        %3803 = vst [vmem:[#allocation2 + $0x50] sm:$0xff] %v3779
        %3804 = vst [vmem:[#allocation2 + $0x58] sm:$0xff] %v3780
        %3805 = vst [vmem:[#allocation2 + $0x60] sm:$0xff] %v3781
        %3806 = vst [vmem:[#allocation2 + $0x68] sm:$0xff] %v3782
        %3807 = vst [vmem:[#allocation2 + $0x70] sm:$0xff] %v3783
        %3808 = vst [vmem:[#allocation2 + $0x78] sm:$0xff] %v3784
        %3809 = vst [vmem:[#allocation2 + $0x80] sm:$0xff] %v3785
        %3810 = vst [vmem:[#allocation2 + $0x88] sm:$0xff] %v3786
        %3811 = vst [vmem:[#allocation2 + $0x90] sm:$0xff] %v3787
        %3812 = vst [vmem:[#allocation2 + $0x98] sm:$0xff] %v3788
        %3813 = vst [vmem:[#allocation2 + $0xa0] sm:$0xff] %v3789
        %3814 = vst [vmem:[#allocation2 + $0xa8] sm:$0xff] %v3790
        %3815 = vst [vmem:[#allocation2 + $0xb0] sm:$0xff] %v3791
        %3816 = vst [vmem:[#allocation2 + $0xb8] sm:$0xff] %v3792
        %v3817 = vld [vmem:[#allocation2] sm:$0xff]
        %v3818 = vld [vmem:[#allocation2 + $0x8] sm:$0xff]
        %v3819 = vld [vmem:[#allocation2 + $0x10] sm:$0xff]
        %v3820 = vld [vmem:[#allocation2 + $0x18] sm:$0xff]
        %v3821 = vld [vmem:[#allocation2 + $0x20] sm:$0xff]
        %v3822 = vld [vmem:[#allocation2 + $0x28] sm:$0xff]
        %v3823 = vld [vmem:[#allocation2 + $0x30] sm:$0xff]
        %v3824 = vld [vmem:[#allocation2 + $0x38] sm:$0xff]
        %v3825 = vld [vmem:[#allocation2 + $0x40] sm:$0xff]
        %v3826 = vld [vmem:[#allocation2 + $0x48] sm:$0xff]
        %v3827 = vld [vmem:[#allocation2 + $0x50] sm:$0xff]
        %v3828 = vld [vmem:[#allocation2 + $0x58] sm:$0xff]
        %v3829 = vld [vmem:[#allocation2 + $0x60] sm:$0xff]
        %v3830 = vld [vmem:[#allocation2 + $0x68] sm:$0xff]
        %v3831 = vld [vmem:[#allocation2 + $0x70] sm:$0xff]
        %v3832 = vld [vmem:[#allocation2 + $0x78] sm:$0xff]
        %v3833 = vld [vmem:[#allocation2 + $0x80] sm:$0xff]
        %v3834 = vld [vmem:[#allocation2 + $0x88] sm:$0xff]
        %v3835 = vld [vmem:[#allocation2 + $0x90] sm:$0xff]
        %v3836 = vld [vmem:[#allocation2 + $0x98] sm:$0xff]
        %v3837 = vld [vmem:[#allocation2 + $0xa0] sm:$0xff]
        %v3838 = vld [vmem:[#allocation2 + $0xa8] sm:$0xff]
        %v3839 = vld [vmem:[#allocation2 + $0xb0] sm:$0xff]
        %v3840 = vld [vmem:[#allocation2 + $0xb8] sm:$0xff]
        %s3841 = scalar_lea.vmem %s991, 1152 [#allocation3]
        %v3842 = vld [vmem:[%s3841] sm:$0xff]
        %v3843 = vld [vmem:[%s3841 + $0x8] sm:$0xff]
        %v3844 = vld [vmem:[%s3841 + $0x10] sm:$0xff]
        %v3845 = vld [vmem:[%s3841 + $0x18] sm:$0xff]
        %v3846 = vld [vmem:[%s3841 + $0x20] sm:$0xff]
        %v3847 = vld [vmem:[%s3841 + $0x28] sm:$0xff]
        %v3848 = vld [vmem:[%s3841 + $0x30] sm:$0xff]
        %v3849 = vld [vmem:[%s3841 + $0x38] sm:$0xff]
        %v3850 = vld [vmem:[%s3841 + $0x40] sm:$0xff]
        %v3851 = vld [vmem:[%s3841 + $0x48] sm:$0xff]
        %v3852 = vld [vmem:[%s3841 + $0x50] sm:$0xff]
        %v3853 = vld [vmem:[%s3841 + $0x58] sm:$0xff]
        %v3854 = vld [vmem:[%s3841 + $0x60] sm:$0xff]
        %v3855 = vld [vmem:[%s3841 + $0x68] sm:$0xff]
        %v3856 = vld [vmem:[%s3841 + $0x70] sm:$0xff]
        %v3857 = vld [vmem:[%s3841 + $0x78] sm:$0xff]
        %v3858 = vld [vmem:[%s3841 + $0x80] sm:$0xff]
        %v3859 = vld [vmem:[%s3841 + $0x88] sm:$0xff]
        %v3860 = vld [vmem:[%s3841 + $0x90] sm:$0xff]
        %v3861 = vld [vmem:[%s3841 + $0x98] sm:$0xff]
        %v3862 = vld [vmem:[%s3841 + $0xa0] sm:$0xff]
        %v3863 = vld [vmem:[%s3841 + $0xa8] sm:$0xff]
        %v3864 = vld [vmem:[%s3841 + $0xb0] sm:$0xff]
        %v3865 = vld [vmem:[%s3841 + $0xb8] sm:$0xff]
        %s3866 = scalar_lea.vmem %s1, 768
        %v3867 = vld [vmem:[%s3866] sm:$0xf]
        %v3868 = vld [vmem:[%s3866 + $0x4] sm:$0xf]
        %v3869 = vld [vmem:[%s3866 + $0x8] sm:$0xf]
        %v3870 = vld [vmem:[%s3866 + $0xc] sm:$0xf]
        %v3871 = vld [vmem:[%s3866 + $0x10] sm:$0xf]
        %v3872 = vld [vmem:[%s3866 + $0x14] sm:$0xf]
        %v3873 = vld [vmem:[%s3866 + $0x18] sm:$0xf]
        %v3874 = vld [vmem:[%s3866 + $0x1c] sm:$0xf]
        %v3875 = vld [vmem:[%s3866 + $0x20] sm:$0xf]
        %v3876 = vld [vmem:[%s3866 + $0x24] sm:$0xf]
        %v3877 = vld [vmem:[%s3866 + $0x28] sm:$0xf]
        %v3878 = vld [vmem:[%s3866 + $0x2c] sm:$0xf]
        %v3879 = vld [vmem:[%s3866 + $0x30] sm:$0xf]
        %v3880 = vld [vmem:[%s3866 + $0x34] sm:$0xf]
        %v3881 = vld [vmem:[%s3866 + $0x38] sm:$0xf]
        %v3882 = vld [vmem:[%s3866 + $0x3c] sm:$0xf]
        %v3883 = vld [vmem:[%s3866 + $0x40] sm:$0xf]
        %v3884 = vld [vmem:[%s3866 + $0x44] sm:$0xf]
        %v3885 = vld [vmem:[%s3866 + $0x48] sm:$0xf]
        %v3886 = vld [vmem:[%s3866 + $0x4c] sm:$0xf]
        %v3887 = vld [vmem:[%s3866 + $0x50] sm:$0xf]
        %v3888 = vld [vmem:[%s3866 + $0x54] sm:$0xf]
        %v3889 = vld [vmem:[%s3866 + $0x58] sm:$0xf]
        %v3890 = vld [vmem:[%s3866 + $0x5c] sm:$0xf]
        %v3891 = vld [vmem:[%s3866 + $0x60] sm:$0xf]
        %v3892 = vld [vmem:[%s3866 + $0x64] sm:$0xf]
        %v3893 = vld [vmem:[%s3866 + $0x68] sm:$0xf]
        %v3894 = vld [vmem:[%s3866 + $0x6c] sm:$0xf]
        %v3895 = vld [vmem:[%s3866 + $0x70] sm:$0xf]
        %v3896 = vld [vmem:[%s3866 + $0x74] sm:$0xf]
        %v3897 = vld [vmem:[%s3866 + $0x78] sm:$0xf]
        %v3898 = vld [vmem:[%s3866 + $0x7c] sm:$0xf]
        %v3923 = vunpack.c.l.b16 %v3842
        %v3924 = vunpack.c.h.b16 %v3842
        %v3925 = vunpack.c.l.b16 %v3843
        %v3926 = vunpack.c.h.b16 %v3843
        %v3927 = vunpack.c.l.b16 %v3844
        %v3928 = vunpack.c.h.b16 %v3844
        %v3929 = vunpack.c.l.b16 %v3845
        %v3930 = vunpack.c.h.b16 %v3845
        %v3931 = vunpack.c.l.b16 %v3846
        %v3932 = vunpack.c.h.b16 %v3846
        %v3933 = vunpack.c.l.b16 %v3847
        %v3934 = vunpack.c.h.b16 %v3847
        %v3935 = vunpack.c.l.b16 %v3848
        %v3936 = vunpack.c.h.b16 %v3848
        %v3937 = vunpack.c.l.b16 %v3849
        %v3938 = vunpack.c.h.b16 %v3849
        %v3939 = vunpack.c.l.b16 %v3850
        %v3940 = vunpack.c.h.b16 %v3850
        %v3941 = vunpack.c.l.b16 %v3851
        %v3942 = vunpack.c.h.b16 %v3851
        %v3943 = vunpack.c.l.b16 %v3852
        %v3944 = vunpack.c.h.b16 %v3852
        %v3945 = vunpack.c.l.b16 %v3853
        %v3946 = vunpack.c.h.b16 %v3853
        %v3947 = vunpack.c.l.b16 %v3854
        %v3948 = vunpack.c.h.b16 %v3854
        %v3949 = vunpack.c.l.b16 %v3855
        %v3950 = vunpack.c.h.b16 %v3855
        %v3951 = vunpack.c.l.b16 %v3856
        %v3952 = vunpack.c.h.b16 %v3856
        %v3953 = vunpack.c.l.b16 %v3857
        %v3954 = vunpack.c.h.b16 %v3857
        %v3955 = vunpack.c.l.b16 %v3858
        %v3956 = vunpack.c.h.b16 %v3858
        %v3957 = vunpack.c.l.b16 %v3859
        %v3958 = vunpack.c.h.b16 %v3859
        %v3959 = vunpack.c.l.b16 %v3860
        %v3960 = vunpack.c.h.b16 %v3860
        %v3961 = vunpack.c.l.b16 %v3861
        %v3962 = vunpack.c.h.b16 %v3861
        %v3963 = vunpack.c.l.b16 %v3862
        %v3964 = vunpack.c.h.b16 %v3862
        %v3965 = vunpack.c.l.b16 %v3863
        %v3966 = vunpack.c.h.b16 %v3863
        %v3967 = vunpack.c.l.b16 %v3864
        %v3968 = vunpack.c.h.b16 %v3864
        %v3969 = vunpack.c.l.b16 %v3865
        %v3970 = vunpack.c.h.b16 %v3865
        %v3971 = vpack.c.b16 %v3925, %v3923
        %v3972 = vpack.c.b16 %v3926, %v3924
        %v3973 = vpack.c.b16 %v3929, %v3927
        %v3974 = vpack.c.b16 %v3930, %v3928
        %v3975 = vpack.c.b16 %v3933, %v3931
        %v3976 = vpack.c.b16 %v3934, %v3932
        %v3977 = vpack.c.b16 %v3937, %v3935
        %v3978 = vpack.c.b16 %v3938, %v3936
        %v3979 = vpack.c.b16 %v3941, %v3939
        %v3980 = vpack.c.b16 %v3942, %v3940
        %v3981 = vpack.c.b16 %v3945, %v3943
        %v3982 = vpack.c.b16 %v3946, %v3944
        %v3983 = vpack.c.b16 %v3949, %v3947
        %v3984 = vpack.c.b16 %v3950, %v3948
        %v3985 = vpack.c.b16 %v3953, %v3951
        %v3986 = vpack.c.b16 %v3954, %v3952
        %v3987 = vpack.c.b16 %v3957, %v3955
        %v3988 = vpack.c.b16 %v3958, %v3956
        %v3989 = vpack.c.b16 %v3961, %v3959
        %v3990 = vpack.c.b16 %v3962, %v3960
        %v3991 = vpack.c.b16 %v3965, %v3963
        %v3992 = vpack.c.b16 %v3966, %v3964
        %v3993 = vpack.c.b16 %v3969, %v3967
        %v3994 = vpack.c.b16 %v3970, %v3968
        %v4051 = vunpack.c.l.b16 %v3867
        %v4052 = vunpack.c.l.b16 %v3868
        %v4053 = vunpack.c.l.b16 %v3869
        %v4054 = vunpack.c.l.b16 %v3870
        %v4055 = vunpack.c.l.b16 %v3871
        %v4056 = vunpack.c.l.b16 %v3872
        %v4057 = vunpack.c.l.b16 %v3873
        %v4058 = vunpack.c.l.b16 %v3874
        %v4059 = vunpack.c.l.b16 %v3875
        %v4060 = vunpack.c.l.b16 %v3876
        %v4061 = vunpack.c.l.b16 %v3877
        %v4062 = vunpack.c.l.b16 %v3878
        %v4063 = vunpack.c.l.b16 %v3879
        %v4064 = vunpack.c.l.b16 %v3880
        %v4065 = vunpack.c.l.b16 %v3881
        %v4066 = vunpack.c.l.b16 %v3882
        %v4067 = vunpack.c.l.b16 %v3883
        %v4068 = vunpack.c.l.b16 %v3884
        %v4069 = vunpack.c.l.b16 %v3885
        %v4070 = vunpack.c.l.b16 %v3886
        %v4071 = vunpack.c.l.b16 %v3887
        %v4072 = vunpack.c.l.b16 %v3888
        %v4073 = vunpack.c.l.b16 %v3889
        %v4074 = vunpack.c.l.b16 %v3890
        %v4075 = vunpack.c.l.b16 %v3891
        %v4076 = vunpack.c.l.b16 %v3892
        %v4077 = vunpack.c.l.b16 %v3893
        %v4078 = vunpack.c.l.b16 %v3894
        %v4079 = vunpack.c.l.b16 %v3895
        %v4080 = vunpack.c.l.b16 %v3896
        %v4081 = vunpack.c.l.b16 %v3897
        %v4082 = vunpack.c.l.b16 %v3898
        %v4083 = vpack.c.b16 %v4052, %v4051
        %v4084 = vpack.c.b16 %v4054, %v4053
        %v4085 = vpack.c.b16 %v4056, %v4055
        %v4086 = vpack.c.b16 %v4058, %v4057
        %v4087 = vpack.c.b16 %v4060, %v4059
        %v4088 = vpack.c.b16 %v4062, %v4061
        %v4089 = vpack.c.b16 %v4064, %v4063
        %v4090 = vpack.c.b16 %v4066, %v4065
        %v4091 = vpack.c.b16 %v4068, %v4067
        %v4092 = vpack.c.b16 %v4070, %v4069
        %v4093 = vpack.c.b16 %v4072, %v4071
        %v4094 = vpack.c.b16 %v4074, %v4073
        %v4095 = vpack.c.b16 %v4076, %v4075
        %v4096 = vpack.c.b16 %v4078, %v4077
        %v4097 = vpack.c.b16 %v4080, %v4079
        %v4098 = vpack.c.b16 %v4082, %v4081
        %4115 = vmatprep.subr.bf16.mxu0 0
        %4116 = vmatpush1.bf16.msra.mxu0 %v4083
        %4117 = vmatprep.subr.bf16.mxu0 0
        %4118 = vmatpush1.bf16.msra.mxu0 %v4084
        %4119 = vmatprep.subr.bf16.mxu0 0
        %4120 = vmatpush1.bf16.msra.mxu0 %v4085
        %4121 = vmatprep.subr.bf16.mxu0 0
        %4122 = vmatpush1.bf16.msra.mxu0 %v4086
        %4123 = vmatprep.subr.bf16.mxu0 0
        %4124 = vmatpush1.bf16.msra.mxu0 %v4087
        %4125 = vmatprep.subr.bf16.mxu0 0
        %4126 = vmatpush1.bf16.msra.mxu0 %v4088
        %4127 = vmatprep.subr.bf16.mxu0 0
        %4128 = vmatpush1.bf16.msra.mxu0 %v4089
        %4129 = vmatprep.subr.bf16.mxu0 0
        %4130 = vmatpush1.bf16.msra.mxu0 %v4090
        %4131 = vmatprep.subr.bf16.mxu0 0
        %4132 = vmatpush1.bf16.msra.mxu0 %v4091
        %4133 = vmatprep.subr.bf16.mxu0 0
        %4134 = vmatpush1.bf16.msra.mxu0 %v4092
        %4135 = vmatprep.subr.bf16.mxu0 0
        %4136 = vmatpush1.bf16.msra.mxu0 %v4093
        %4137 = vmatprep.subr.bf16.mxu0 0
        %4138 = vmatpush1.bf16.msra.mxu0 %v4094
        %4139 = vmatprep.subr.bf16.mxu0 0
        %4140 = vmatpush1.bf16.msra.mxu0 %v4095
        %4141 = vmatprep.subr.bf16.mxu0 0
        %4142 = vmatpush1.bf16.msra.mxu0 %v4096
        %4143 = vmatprep.subr.bf16.mxu0 0
        %4144 = vmatpush1.bf16.msra.mxu0 %v4097
        %4145 = vmatprep.subr.bf16.mxu0 0
        %4146 = vmatpush1.bf16.msra.mxu0 %v4098
        %4147 = vmatprep.mubr.bf16.mxu0 %v3972
        %4148 = vmatmul.mubr.bf16.gmra.mrb[0].mxu0 %v3971
        %v4149 = vpop.f32.mrb[0].mxu0
        %v4150 = vadd.f32 0.0, %v4149
        %v4151 = vpop.f32.mrb[0].mxu0
        %v4152 = vpop.f32.mrb[0].mxu0
        %v4153 = vadd.f32 0.0, %v4152
        %v4154 = vpop.f32.mrb[0].mxu0
        %4155 = vmatprep.mubr.bf16.mxu0 %v3974
        %4156 = vmatmul.mubr.bf16.gmra.mrb[0].mxu0 %v3973
        %v4157 = vpop.f32.mrb[0].mxu0
        %v4158 = vadd.f32 0.0, %v4157
        %v4159 = vpop.f32.mrb[0].mxu0
        %v4160 = vpop.f32.mrb[0].mxu0
        %v4161 = vadd.f32 0.0, %v4160
        %v4162 = vpop.f32.mrb[0].mxu0
        %4163 = vmatprep.mubr.bf16.mxu0 %v3976
        %4164 = vmatmul.mubr.bf16.gmra.mrb[0].mxu0 %v3975
        %v4165 = vpop.f32.mrb[0].mxu0
        %v4166 = vadd.f32 0.0, %v4165
        %v4167 = vpop.f32.mrb[0].mxu0
        %v4168 = vpop.f32.mrb[0].mxu0
        %v4169 = vadd.f32 0.0, %v4168
        %v4170 = vpop.f32.mrb[0].mxu0
        %4171 = vmatprep.mubr.bf16.mxu0 %v3978
        %4172 = vmatmul.mubr.bf16.gmra.mrb[0].mxu0 %v3977
        %v4173 = vpop.f32.mrb[0].mxu0
        %v4174 = vadd.f32 0.0, %v4173
        %v4175 = vpop.f32.mrb[0].mxu0
        %v4176 = vpop.f32.mrb[0].mxu0
        %v4177 = vadd.f32 0.0, %v4176
        %v4178 = vpop.f32.mrb[0].mxu0
        %4179 = vmatprep.mubr.bf16.mxu0 %v3980
        %4180 = vmatmul.mubr.bf16.gmra.mrb[0].mxu0 %v3979
        %v4181 = vpop.f32.mrb[0].mxu0
        %v4182 = vadd.f32 0.0, %v4181
        %v4183 = vpop.f32.mrb[0].mxu0
        %v4184 = vpop.f32.mrb[0].mxu0
        %v4185 = vadd.f32 0.0, %v4184
        %v4186 = vpop.f32.mrb[0].mxu0
        %4187 = vmatprep.mubr.bf16.mxu0 %v3982
        %4188 = vmatmul.mubr.bf16.gmra.mrb[0].mxu0 %v3981
        %v4189 = vpop.f32.mrb[0].mxu0
        %v4190 = vadd.f32 0.0, %v4189
        %v4191 = vpop.f32.mrb[0].mxu0
        %v4192 = vpop.f32.mrb[0].mxu0
        %v4193 = vadd.f32 0.0, %v4192
        %v4194 = vpop.f32.mrb[0].mxu0
        %4195 = vmatprep.mubr.bf16.mxu0 %v3984
        %4196 = vmatmul.mubr.bf16.gmra.mrb[0].mxu0 %v3983
        %v4197 = vpop.f32.mrb[0].mxu0
        %v4198 = vadd.f32 0.0, %v4197
        %v4199 = vpop.f32.mrb[0].mxu0
        %v4200 = vpop.f32.mrb[0].mxu0
        %v4201 = vadd.f32 0.0, %v4200
        %v4202 = vpop.f32.mrb[0].mxu0
        %4203 = vmatprep.mubr.bf16.mxu0 %v3986
        %4204 = vmatmul.mubr.bf16.gmra.mrb[0].mxu0 %v3985
        %v4205 = vpop.f32.mrb[0].mxu0
        %v4206 = vadd.f32 0.0, %v4205
        %v4207 = vpop.f32.mrb[0].mxu0
        %v4208 = vpop.f32.mrb[0].mxu0
        %v4209 = vadd.f32 0.0, %v4208
        %v4210 = vpop.f32.mrb[0].mxu0
        %4211 = vmatprep.mubr.bf16.mxu0 %v3988
        %4212 = vmatmul.mubr.bf16.gmra.mrb[0].mxu0 %v3987
        %v4213 = vpop.f32.mrb[0].mxu0
        %v4214 = vadd.f32 0.0, %v4213
        %v4215 = vpop.f32.mrb[0].mxu0
        %v4216 = vpop.f32.mrb[0].mxu0
        %v4217 = vadd.f32 0.0, %v4216
        %v4218 = vpop.f32.mrb[0].mxu0
        %4219 = vmatprep.mubr.bf16.mxu0 %v3990
        %4220 = vmatmul.mubr.bf16.gmra.mrb[0].mxu0 %v3989
        %v4221 = vpop.f32.mrb[0].mxu0
        %v4222 = vadd.f32 0.0, %v4221
        %v4223 = vpop.f32.mrb[0].mxu0
        %v4224 = vpop.f32.mrb[0].mxu0
        %v4225 = vadd.f32 0.0, %v4224
        %v4226 = vpop.f32.mrb[0].mxu0
        %4227 = vmatprep.mubr.bf16.mxu0 %v3992
        %4228 = vmatmul.mubr.bf16.gmra.mrb[0].mxu0 %v3991
        %v4229 = vpop.f32.mrb[0].mxu0
        %v4230 = vadd.f32 0.0, %v4229
        %v4231 = vpop.f32.mrb[0].mxu0
        %v4232 = vpop.f32.mrb[0].mxu0
        %v4233 = vadd.f32 0.0, %v4232
        %v4234 = vpop.f32.mrb[0].mxu0
        %4235 = vmatprep.mubr.bf16.mxu0 %v3994
        %4236 = vmatmul.mubr.bf16.gmra.mrb[0].mxu0 %v3993
        %v4237 = vpop.f32.mrb[0].mxu0
        %v4238 = vadd.f32 0.0, %v4237
        %v4239 = vpop.f32.mrb[0].mxu0
        %v4240 = vpop.f32.mrb[0].mxu0
        %v4241 = vadd.f32 0.0, %v4240
        %v4242 = vpop.f32.mrb[0].mxu0
        %4243 = vdwg.mxu0
        %v4244 = vadd.f32 %v3817, %v4150
        %v4245 = vadd.f32 %v3818, %v4153
        %v4246 = vadd.f32 %v3819, %v4158
        %v4247 = vadd.f32 %v3820, %v4161
        %v4248 = vadd.f32 %v3821, %v4166
        %v4249 = vadd.f32 %v3822, %v4169
        %v4250 = vadd.f32 %v3823, %v4174
        %v4251 = vadd.f32 %v3824, %v4177
        %v4252 = vadd.f32 %v3825, %v4182
        %v4253 = vadd.f32 %v3826, %v4185
        %v4254 = vadd.f32 %v3827, %v4190
        %v4255 = vadd.f32 %v3828, %v4193
        %v4256 = vadd.f32 %v3829, %v4198
        %v4257 = vadd.f32 %v3830, %v4201
        %v4258 = vadd.f32 %v3831, %v4206
        %v4259 = vadd.f32 %v3832, %v4209
        %v4260 = vadd.f32 %v3833, %v4214
        %v4261 = vadd.f32 %v3834, %v4217
        %v4262 = vadd.f32 %v3835, %v4222
        %v4263 = vadd.f32 %v3836, %v4225
        %v4264 = vadd.f32 %v3837, %v4230
        %v4265 = vadd.f32 %v3838, %v4233
        %v4266 = vadd.f32 %v3839, %v4238
        %v4267 = vadd.f32 %v3840, %v4241
        %4268 = vst [vmem:[#allocation2] sm:$0xff] %v4244
        %4269 = vst [vmem:[#allocation2 + $0x8] sm:$0xff] %v4245
        %4270 = vst [vmem:[#allocation2 + $0x10] sm:$0xff] %v4246
        %4271 = vst [vmem:[#allocation2 + $0x18] sm:$0xff] %v4247
        %4272 = vst [vmem:[#allocation2 + $0x20] sm:$0xff] %v4248
        %4273 = vst [vmem:[#allocation2 + $0x28] sm:$0xff] %v4249
        %4274 = vst [vmem:[#allocation2 + $0x30] sm:$0xff] %v4250
        %4275 = vst [vmem:[#allocation2 + $0x38] sm:$0xff] %v4251
        %4276 = vst [vmem:[#allocation2 + $0x40] sm:$0xff] %v4252
        %4277 = vst [vmem:[#allocation2 + $0x48] sm:$0xff] %v4253
        %4278 = vst [vmem:[#allocation2 + $0x50] sm:$0xff] %v4254
        %4279 = vst [vmem:[#allocation2 + $0x58] sm:$0xff] %v4255
        %4280 = vst [vmem:[#allocation2 + $0x60] sm:$0xff] %v4256
        %4281 = vst [vmem:[#allocation2 + $0x68] sm:$0xff] %v4257
        %4282 = vst [vmem:[#allocation2 + $0x70] sm:$0xff] %v4258
        %4283 = vst [vmem:[#allocation2 + $0x78] sm:$0xff] %v4259
        %4284 = vst [vmem:[#allocation2 + $0x80] sm:$0xff] %v4260
        %4285 = vst [vmem:[#allocation2 + $0x88] sm:$0xff] %v4261
        %4286 = vst [vmem:[#allocation2 + $0x90] sm:$0xff] %v4262
        %4287 = vst [vmem:[#allocation2 + $0x98] sm:$0xff] %v4263
        %4288 = vst [vmem:[#allocation2 + $0xa0] sm:$0xff] %v4264
        %4289 = vst [vmem:[#allocation2 + $0xa8] sm:$0xff] %v4265
        %4290 = vst [vmem:[#allocation2 + $0xb0] sm:$0xff] %v4266
        %4291 = vst [vmem:[#allocation2 + $0xb8] sm:$0xff] %v4267
        %v4292 = vld [vmem:[#allocation2] sm:$0xff]
        %v4293 = vld [vmem:[#allocation2 + $0x8] sm:$0xff]
        %v4294 = vld [vmem:[#allocation2 + $0x10] sm:$0xff]
        %v4295 = vld [vmem:[#allocation2 + $0x18] sm:$0xff]
        %v4296 = vld [vmem:[#allocation2 + $0x20] sm:$0xff]
        %v4297 = vld [vmem:[#allocation2 + $0x28] sm:$0xff]
        %v4298 = vld [vmem:[#allocation2 + $0x30] sm:$0xff]
        %v4299 = vld [vmem:[#allocation2 + $0x38] sm:$0xff]
        %v4300 = vld [vmem:[#allocation2 + $0x40] sm:$0xff]
        %v4301 = vld [vmem:[#allocation2 + $0x48] sm:$0xff]
        %v4302 = vld [vmem:[#allocation2 + $0x50] sm:$0xff]
        %v4303 = vld [vmem:[#allocation2 + $0x58] sm:$0xff]
        %v4304 = vld [vmem:[#allocation2 + $0x60] sm:$0xff]
        %v4305 = vld [vmem:[#allocation2 + $0x68] sm:$0xff]
        %v4306 = vld [vmem:[#allocation2 + $0x70] sm:$0xff]
        %v4307 = vld [vmem:[#allocation2 + $0x78] sm:$0xff]
        %v4308 = vld [vmem:[#allocation2 + $0x80] sm:$0xff]
        %v4309 = vld [vmem:[#allocation2 + $0x88] sm:$0xff]
        %v4310 = vld [vmem:[#allocation2 + $0x90] sm:$0xff]
        %v4311 = vld [vmem:[#allocation2 + $0x98] sm:$0xff]
        %v4312 = vld [vmem:[#allocation2 + $0xa0] sm:$0xff]
        %v4313 = vld [vmem:[#allocation2 + $0xa8] sm:$0xff]
        %v4314 = vld [vmem:[#allocation2 + $0xb0] sm:$0xff]
        %v4315 = vld [vmem:[#allocation2 + $0xb8] sm:$0xff]
        %s4316 = scalar_lea.vmem %s991, 1344 [#allocation3]
        %v4317 = vld [vmem:[%s4316] sm:$0xff]
        %v4318 = vld [vmem:[%s4316 + $0x8] sm:$0xff]
        %v4319 = vld [vmem:[%s4316 + $0x10] sm:$0xff]
        %v4320 = vld [vmem:[%s4316 + $0x18] sm:$0xff]
        %v4321 = vld [vmem:[%s4316 + $0x20] sm:$0xff]
        %v4322 = vld [vmem:[%s4316 + $0x28] sm:$0xff]
        %v4323 = vld [vmem:[%s4316 + $0x30] sm:$0xff]
        %v4324 = vld [vmem:[%s4316 + $0x38] sm:$0xff]
        %v4325 = vld [vmem:[%s4316 + $0x40] sm:$0xff]
        %v4326 = vld [vmem:[%s4316 + $0x48] sm:$0xff]
        %v4327 = vld [vmem:[%s4316 + $0x50] sm:$0xff]
        %v4328 = vld [vmem:[%s4316 + $0x58] sm:$0xff]
        %v4329 = vld [vmem:[%s4316 + $0x60] sm:$0xff]
        %v4330 = vld [vmem:[%s4316 + $0x68] sm:$0xff]
        %v4331 = vld [vmem:[%s4316 + $0x70] sm:$0xff]
        %v4332 = vld [vmem:[%s4316 + $0x78] sm:$0xff]
        %v4333 = vld [vmem:[%s4316 + $0x80] sm:$0xff]
        %v4334 = vld [vmem:[%s4316 + $0x88] sm:$0xff]
        %v4335 = vld [vmem:[%s4316 + $0x90] sm:$0xff]
        %v4336 = vld [vmem:[%s4316 + $0x98] sm:$0xff]
        %v4337 = vld [vmem:[%s4316 + $0xa0] sm:$0xff]
        %v4338 = vld [vmem:[%s4316 + $0xa8] sm:$0xff]
        %v4339 = vld [vmem:[%s4316 + $0xb0] sm:$0xff]
        %v4340 = vld [vmem:[%s4316 + $0xb8] sm:$0xff]
        %s4341 = scalar_lea.vmem %s1, 896
        %v4342 = vld [vmem:[%s4341] sm:$0xf]
        %v4343 = vld [vmem:[%s4341 + $0x4] sm:$0xf]
        %v4344 = vld [vmem:[%s4341 + $0x8] sm:$0xf]
        %v4345 = vld [vmem:[%s4341 + $0xc] sm:$0xf]
        %v4346 = vld [vmem:[%s4341 + $0x10] sm:$0xf]
        %v4347 = vld [vmem:[%s4341 + $0x14] sm:$0xf]
        %v4348 = vld [vmem:[%s4341 + $0x18] sm:$0xf]
        %v4349 = vld [vmem:[%s4341 + $0x1c] sm:$0xf]
        %v4350 = vld [vmem:[%s4341 + $0x20] sm:$0xf]
        %v4351 = vld [vmem:[%s4341 + $0x24] sm:$0xf]
        %v4352 = vld [vmem:[%s4341 + $0x28] sm:$0xf]
        %v4353 = vld [vmem:[%s4341 + $0x2c] sm:$0xf]
        %v4354 = vld [vmem:[%s4341 + $0x30] sm:$0xf]
        %v4355 = vld [vmem:[%s4341 + $0x34] sm:$0xf]
        %v4356 = vld [vmem:[%s4341 + $0x38] sm:$0xf]
        %v4357 = vld [vmem:[%s4341 + $0x3c] sm:$0xf]
        %v4358 = vld [vmem:[%s4341 + $0x40] sm:$0xf]
        %v4359 = vld [vmem:[%s4341 + $0x44] sm:$0xf]
        %v4360 = vld [vmem:[%s4341 + $0x48] sm:$0xf]
        %v4361 = vld [vmem:[%s4341 + $0x4c] sm:$0xf]
        %v4362 = vld [vmem:[%s4341 + $0x50] sm:$0xf]
        %v4363 = vld [vmem:[%s4341 + $0x54] sm:$0xf]
        %v4364 = vld [vmem:[%s4341 + $0x58] sm:$0xf]
        %v4365 = vld [vmem:[%s4341 + $0x5c] sm:$0xf]
        %v4366 = vld [vmem:[%s4341 + $0x60] sm:$0xf]
        %v4367 = vld [vmem:[%s4341 + $0x64] sm:$0xf]
        %v4368 = vld [vmem:[%s4341 + $0x68] sm:$0xf]
        %v4369 = vld [vmem:[%s4341 + $0x6c] sm:$0xf]
        %v4370 = vld [vmem:[%s4341 + $0x70] sm:$0xf]
        %v4371 = vld [vmem:[%s4341 + $0x74] sm:$0xf]
        %v4372 = vld [vmem:[%s4341 + $0x78] sm:$0xf]
        %v4373 = vld [vmem:[%s4341 + $0x7c] sm:$0xf]
        %v4398 = vunpack.c.l.b16 %v4317
        %v4399 = vunpack.c.h.b16 %v4317
        %v4400 = vunpack.c.l.b16 %v4318
        %v4401 = vunpack.c.h.b16 %v4318
        %v4402 = vunpack.c.l.b16 %v4319
        %v4403 = vunpack.c.h.b16 %v4319
        %v4404 = vunpack.c.l.b16 %v4320
        %v4405 = vunpack.c.h.b16 %v4320
        %v4406 = vunpack.c.l.b16 %v4321
        %v4407 = vunpack.c.h.b16 %v4321
        %v4408 = vunpack.c.l.b16 %v4322
        %v4409 = vunpack.c.h.b16 %v4322
        %v4410 = vunpack.c.l.b16 %v4323
        %v4411 = vunpack.c.h.b16 %v4323
        %v4412 = vunpack.c.l.b16 %v4324
        %v4413 = vunpack.c.h.b16 %v4324
        %v4414 = vunpack.c.l.b16 %v4325
        %v4415 = vunpack.c.h.b16 %v4325
        %v4416 = vunpack.c.l.b16 %v4326
        %v4417 = vunpack.c.h.b16 %v4326
        %v4418 = vunpack.c.l.b16 %v4327
        %v4419 = vunpack.c.h.b16 %v4327
        %v4420 = vunpack.c.l.b16 %v4328
        %v4421 = vunpack.c.h.b16 %v4328
        %v4422 = vunpack.c.l.b16 %v4329
        %v4423 = vunpack.c.h.b16 %v4329
        %v4424 = vunpack.c.l.b16 %v4330
        %v4425 = vunpack.c.h.b16 %v4330
        %v4426 = vunpack.c.l.b16 %v4331
        %v4427 = vunpack.c.h.b16 %v4331
        %v4428 = vunpack.c.l.b16 %v4332
        %v4429 = vunpack.c.h.b16 %v4332
        %v4430 = vunpack.c.l.b16 %v4333
        %v4431 = vunpack.c.h.b16 %v4333
        %v4432 = vunpack.c.l.b16 %v4334
        %v4433 = vunpack.c.h.b16 %v4334
        %v4434 = vunpack.c.l.b16 %v4335
        %v4435 = vunpack.c.h.b16 %v4335
        %v4436 = vunpack.c.l.b16 %v4336
        %v4437 = vunpack.c.h.b16 %v4336
        %v4438 = vunpack.c.l.b16 %v4337
        %v4439 = vunpack.c.h.b16 %v4337
        %v4440 = vunpack.c.l.b16 %v4338
        %v4441 = vunpack.c.h.b16 %v4338
        %v4442 = vunpack.c.l.b16 %v4339
        %v4443 = vunpack.c.h.b16 %v4339
        %v4444 = vunpack.c.l.b16 %v4340
        %v4445 = vunpack.c.h.b16 %v4340
        %v4446 = vpack.c.b16 %v4400, %v4398
        %v4447 = vpack.c.b16 %v4401, %v4399
        %v4448 = vpack.c.b16 %v4404, %v4402
        %v4449 = vpack.c.b16 %v4405, %v4403
        %v4450 = vpack.c.b16 %v4408, %v4406
        %v4451 = vpack.c.b16 %v4409, %v4407
        %v4452 = vpack.c.b16 %v4412, %v4410
        %v4453 = vpack.c.b16 %v4413, %v4411
        %v4454 = vpack.c.b16 %v4416, %v4414
        %v4455 = vpack.c.b16 %v4417, %v4415
        %v4456 = vpack.c.b16 %v4420, %v4418
        %v4457 = vpack.c.b16 %v4421, %v4419
        %v4458 = vpack.c.b16 %v4424, %v4422
        %v4459 = vpack.c.b16 %v4425, %v4423
        %v4460 = vpack.c.b16 %v4428, %v4426
        %v4461 = vpack.c.b16 %v4429, %v4427
        %v4462 = vpack.c.b16 %v4432, %v4430
        %v4463 = vpack.c.b16 %v4433, %v4431
        %v4464 = vpack.c.b16 %v4436, %v4434
        %v4465 = vpack.c.b16 %v4437, %v4435
        %v4466 = vpack.c.b16 %v4440, %v4438
        %v4467 = vpack.c.b16 %v4441, %v4439
        %v4468 = vpack.c.b16 %v4444, %v4442
        %v4469 = vpack.c.b16 %v4445, %v4443
        %v4526 = vunpack.c.l.b16 %v4342
        %v4527 = vunpack.c.l.b16 %v4343
        %v4528 = vunpack.c.l.b16 %v4344
        %v4529 = vunpack.c.l.b16 %v4345
        %v4530 = vunpack.c.l.b16 %v4346
        %v4531 = vunpack.c.l.b16 %v4347
        %v4532 = vunpack.c.l.b16 %v4348
        %v4533 = vunpack.c.l.b16 %v4349
        %v4534 = vunpack.c.l.b16 %v4350
        %v4535 = vunpack.c.l.b16 %v4351
        %v4536 = vunpack.c.l.b16 %v4352
        %v4537 = vunpack.c.l.b16 %v4353
        %v4538 = vunpack.c.l.b16 %v4354
        %v4539 = vunpack.c.l.b16 %v4355
        %v4540 = vunpack.c.l.b16 %v4356
        %v4541 = vunpack.c.l.b16 %v4357
        %v4542 = vunpack.c.l.b16 %v4358
        %v4543 = vunpack.c.l.b16 %v4359
        %v4544 = vunpack.c.l.b16 %v4360
        %v4545 = vunpack.c.l.b16 %v4361
        %v4546 = vunpack.c.l.b16 %v4362
        %v4547 = vunpack.c.l.b16 %v4363
        %v4548 = vunpack.c.l.b16 %v4364
        %v4549 = vunpack.c.l.b16 %v4365
        %v4550 = vunpack.c.l.b16 %v4366
        %v4551 = vunpack.c.l.b16 %v4367
        %v4552 = vunpack.c.l.b16 %v4368
        %v4553 = vunpack.c.l.b16 %v4369
        %v4554 = vunpack.c.l.b16 %v4370
        %v4555 = vunpack.c.l.b16 %v4371
        %v4556 = vunpack.c.l.b16 %v4372
        %v4557 = vunpack.c.l.b16 %v4373
        %v4558 = vpack.c.b16 %v4527, %v4526
        %v4559 = vpack.c.b16 %v4529, %v4528
        %v4560 = vpack.c.b16 %v4531, %v4530
        %v4561 = vpack.c.b16 %v4533, %v4532
        %v4562 = vpack.c.b16 %v4535, %v4534
        %v4563 = vpack.c.b16 %v4537, %v4536
        %v4564 = vpack.c.b16 %v4539, %v4538
        %v4565 = vpack.c.b16 %v4541, %v4540
        %v4566 = vpack.c.b16 %v4543, %v4542
        %v4567 = vpack.c.b16 %v4545, %v4544
        %v4568 = vpack.c.b16 %v4547, %v4546
        %v4569 = vpack.c.b16 %v4549, %v4548
        %v4570 = vpack.c.b16 %v4551, %v4550
        %v4571 = vpack.c.b16 %v4553, %v4552
        %v4572 = vpack.c.b16 %v4555, %v4554
        %v4573 = vpack.c.b16 %v4557, %v4556
        %4590 = vmatprep.subr.bf16.mxu0 0
        %4591 = vmatpush1.bf16.msra.mxu0 %v4558
        %4592 = vmatprep.subr.bf16.mxu0 0
        %4593 = vmatpush1.bf16.msra.mxu0 %v4559
        %4594 = vmatprep.subr.bf16.mxu0 0
        %4595 = vmatpush1.bf16.msra.mxu0 %v4560
        %4596 = vmatprep.subr.bf16.mxu0 0
        %4597 = vmatpush1.bf16.msra.mxu0 %v4561
        %4598 = vmatprep.subr.bf16.mxu0 0
        %4599 = vmatpush1.bf16.msra.mxu0 %v4562
        %4600 = vmatprep.subr.bf16.mxu0 0
        %4601 = vmatpush1.bf16.msra.mxu0 %v4563
        %4602 = vmatprep.subr.bf16.mxu0 0
        %4603 = vmatpush1.bf16.msra.mxu0 %v4564
        %4604 = vmatprep.subr.bf16.mxu0 0
        %4605 = vmatpush1.bf16.msra.mxu0 %v4565
        %4606 = vmatprep.subr.bf16.mxu0 0
        %4607 = vmatpush1.bf16.msra.mxu0 %v4566
        %4608 = vmatprep.subr.bf16.mxu0 0
        %4609 = vmatpush1.bf16.msra.mxu0 %v4567
        %4610 = vmatprep.subr.bf16.mxu0 0
        %4611 = vmatpush1.bf16.msra.mxu0 %v4568
        %4612 = vmatprep.subr.bf16.mxu0 0
        %4613 = vmatpush1.bf16.msra.mxu0 %v4569
        %4614 = vmatprep.subr.bf16.mxu0 0
        %4615 = vmatpush1.bf16.msra.mxu0 %v4570
        %4616 = vmatprep.subr.bf16.mxu0 0
        %4617 = vmatpush1.bf16.msra.mxu0 %v4571
        %4618 = vmatprep.subr.bf16.mxu0 0
        %4619 = vmatpush1.bf16.msra.mxu0 %v4572
        %4620 = vmatprep.subr.bf16.mxu0 0
        %4621 = vmatpush1.bf16.msra.mxu0 %v4573
        %4622 = vmatprep.mubr.bf16.mxu0 %v4447
        %4623 = vmatmul.mubr.bf16.gmra.mrb[0].mxu0 %v4446
        %v4624 = vpop.f32.mrb[0].mxu0
        %v4625 = vadd.f32 0.0, %v4624
        %v4626 = vpop.f32.mrb[0].mxu0
        %v4627 = vpop.f32.mrb[0].mxu0
        %v4628 = vadd.f32 0.0, %v4627
        %v4629 = vpop.f32.mrb[0].mxu0
        %4630 = vmatprep.mubr.bf16.mxu0 %v4449
        %4631 = vmatmul.mubr.bf16.gmra.mrb[0].mxu0 %v4448
        %v4632 = vpop.f32.mrb[0].mxu0
        %v4633 = vadd.f32 0.0, %v4632
        %v4634 = vpop.f32.mrb[0].mxu0
        %v4635 = vpop.f32.mrb[0].mxu0
        %v4636 = vadd.f32 0.0, %v4635
        %v4637 = vpop.f32.mrb[0].mxu0
        %4638 = vmatprep.mubr.bf16.mxu0 %v4451
        %4639 = vmatmul.mubr.bf16.gmra.mrb[0].mxu0 %v4450
        %v4640 = vpop.f32.mrb[0].mxu0
        %v4641 = vadd.f32 0.0, %v4640
        %v4642 = vpop.f32.mrb[0].mxu0
        %v4643 = vpop.f32.mrb[0].mxu0
        %v4644 = vadd.f32 0.0, %v4643
        %v4645 = vpop.f32.mrb[0].mxu0
        %4646 = vmatprep.mubr.bf16.mxu0 %v4453
        %4647 = vmatmul.mubr.bf16.gmra.mrb[0].mxu0 %v4452
        %v4648 = vpop.f32.mrb[0].mxu0
        %v4649 = vadd.f32 0.0, %v4648
        %v4650 = vpop.f32.mrb[0].mxu0
        %v4651 = vpop.f32.mrb[0].mxu0
        %v4652 = vadd.f32 0.0, %v4651
        %v4653 = vpop.f32.mrb[0].mxu0
        %4654 = vmatprep.mubr.bf16.mxu0 %v4455
        %4655 = vmatmul.mubr.bf16.gmra.mrb[0].mxu0 %v4454
        %v4656 = vpop.f32.mrb[0].mxu0
        %v4657 = vadd.f32 0.0, %v4656
        %v4658 = vpop.f32.mrb[0].mxu0
        %v4659 = vpop.f32.mrb[0].mxu0
        %v4660 = vadd.f32 0.0, %v4659
        %v4661 = vpop.f32.mrb[0].mxu0
        %4662 = vmatprep.mubr.bf16.mxu0 %v4457
        %4663 = vmatmul.mubr.bf16.gmra.mrb[0].mxu0 %v4456
        %v4664 = vpop.f32.mrb[0].mxu0
        %v4665 = vadd.f32 0.0, %v4664
        %v4666 = vpop.f32.mrb[0].mxu0
        %v4667 = vpop.f32.mrb[0].mxu0
        %v4668 = vadd.f32 0.0, %v4667
        %v4669 = vpop.f32.mrb[0].mxu0
        %4670 = vmatprep.mubr.bf16.mxu0 %v4459
        %4671 = vmatmul.mubr.bf16.gmra.mrb[0].mxu0 %v4458
        %v4672 = vpop.f32.mrb[0].mxu0
        %v4673 = vadd.f32 0.0, %v4672
        %v4674 = vpop.f32.mrb[0].mxu0
        %v4675 = vpop.f32.mrb[0].mxu0
        %v4676 = vadd.f32 0.0, %v4675
        %v4677 = vpop.f32.mrb[0].mxu0
        %4678 = vmatprep.mubr.bf16.mxu0 %v4461
        %4679 = vmatmul.mubr.bf16.gmra.mrb[0].mxu0 %v4460
        %v4680 = vpop.f32.mrb[0].mxu0
        %v4681 = vadd.f32 0.0, %v4680
        %v4682 = vpop.f32.mrb[0].mxu0
        %v4683 = vpop.f32.mrb[0].mxu0
        %v4684 = vadd.f32 0.0, %v4683
        %v4685 = vpop.f32.mrb[0].mxu0
        %4686 = vmatprep.mubr.bf16.mxu0 %v4463
        %4687 = vmatmul.mubr.bf16.gmra.mrb[0].mxu0 %v4462
        %v4688 = vpop.f32.mrb[0].mxu0
        %v4689 = vadd.f32 0.0, %v4688
        %v4690 = vpop.f32.mrb[0].mxu0
        %v4691 = vpop.f32.mrb[0].mxu0
        %v4692 = vadd.f32 0.0, %v4691
        %v4693 = vpop.f32.mrb[0].mxu0
        %4694 = vmatprep.mubr.bf16.mxu0 %v4465
        %4695 = vmatmul.mubr.bf16.gmra.mrb[0].mxu0 %v4464
        %v4696 = vpop.f32.mrb[0].mxu0
        %v4697 = vadd.f32 0.0, %v4696
        %v4698 = vpop.f32.mrb[0].mxu0
        %v4699 = vpop.f32.mrb[0].mxu0
        %v4700 = vadd.f32 0.0, %v4699
        %v4701 = vpop.f32.mrb[0].mxu0
        %4702 = vmatprep.mubr.bf16.mxu0 %v4467
        %4703 = vmatmul.mubr.bf16.gmra.mrb[0].mxu0 %v4466
        %v4704 = vpop.f32.mrb[0].mxu0
        %v4705 = vadd.f32 0.0, %v4704
        %v4706 = vpop.f32.mrb[0].mxu0
        %v4707 = vpop.f32.mrb[0].mxu0
        %v4708 = vadd.f32 0.0, %v4707
        %v4709 = vpop.f32.mrb[0].mxu0
        %4710 = vmatprep.mubr.bf16.mxu0 %v4469
        %4711 = vmatmul.mubr.bf16.gmra.mrb[0].mxu0 %v4468
        %v4712 = vpop.f32.mrb[0].mxu0
        %v4713 = vadd.f32 0.0, %v4712
        %v4714 = vpop.f32.mrb[0].mxu0
        %v4715 = vpop.f32.mrb[0].mxu0
        %v4716 = vadd.f32 0.0, %v4715
        %v4717 = vpop.f32.mrb[0].mxu0
        %4718 = vdwg.mxu0
        %v4719 = vadd.f32 %v4292, %v4625
        %v4720 = vadd.f32 %v4293, %v4628
        %v4721 = vadd.f32 %v4294, %v4633
        %v4722 = vadd.f32 %v4295, %v4636
        %v4723 = vadd.f32 %v4296, %v4641
        %v4724 = vadd.f32 %v4297, %v4644
        %v4725 = vadd.f32 %v4298, %v4649
        %v4726 = vadd.f32 %v4299, %v4652
        %v4727 = vadd.f32 %v4300, %v4657
        %v4728 = vadd.f32 %v4301, %v4660
        %v4729 = vadd.f32 %v4302, %v4665
        %v4730 = vadd.f32 %v4303, %v4668
        %v4731 = vadd.f32 %v4304, %v4673
        %v4732 = vadd.f32 %v4305, %v4676
        %v4733 = vadd.f32 %v4306, %v4681
        %v4734 = vadd.f32 %v4307, %v4684
        %v4735 = vadd.f32 %v4308, %v4689
        %v4736 = vadd.f32 %v4309, %v4692
        %v4737 = vadd.f32 %v4310, %v4697
        %v4738 = vadd.f32 %v4311, %v4700
        %v4739 = vadd.f32 %v4312, %v4705
        %v4740 = vadd.f32 %v4313, %v4708
        %v4741 = vadd.f32 %v4314, %v4713
        %v4742 = vadd.f32 %v4315, %v4716
        %4743 = vst [vmem:[#allocation2] sm:$0xff] %v4719
        %4744 = vst [vmem:[#allocation2 + $0x8] sm:$0xff] %v4720
        %4745 = vst [vmem:[#allocation2 + $0x10] sm:$0xff] %v4721
        %4746 = vst [vmem:[#allocation2 + $0x18] sm:$0xff] %v4722
        %4747 = vst [vmem:[#allocation2 + $0x20] sm:$0xff] %v4723
        %4748 = vst [vmem:[#allocation2 + $0x28] sm:$0xff] %v4724
        %4749 = vst [vmem:[#allocation2 + $0x30] sm:$0xff] %v4725
        %4750 = vst [vmem:[#allocation2 + $0x38] sm:$0xff] %v4726
        %4751 = vst [vmem:[#allocation2 + $0x40] sm:$0xff] %v4727
        %4752 = vst [vmem:[#allocation2 + $0x48] sm:$0xff] %v4728
        %4753 = vst [vmem:[#allocation2 + $0x50] sm:$0xff] %v4729
        %4754 = vst [vmem:[#allocation2 + $0x58] sm:$0xff] %v4730
        %4755 = vst [vmem:[#allocation2 + $0x60] sm:$0xff] %v4731
        %4756 = vst [vmem:[#allocation2 + $0x68] sm:$0xff] %v4732
        %4757 = vst [vmem:[#allocation2 + $0x70] sm:$0xff] %v4733
        %4758 = vst [vmem:[#allocation2 + $0x78] sm:$0xff] %v4734
        %4759 = vst [vmem:[#allocation2 + $0x80] sm:$0xff] %v4735
        %4760 = vst [vmem:[#allocation2 + $0x88] sm:$0xff] %v4736
        %4761 = vst [vmem:[#allocation2 + $0x90] sm:$0xff] %v4737
        %4762 = vst [vmem:[#allocation2 + $0x98] sm:$0xff] %v4738
        %4763 = vst [vmem:[#allocation2 + $0xa0] sm:$0xff] %v4739
        %4764 = vst [vmem:[#allocation2 + $0xa8] sm:$0xff] %v4740
        %4765 = vst [vmem:[#allocation2 + $0xb0] sm:$0xff] %v4741
        %4766 = vst [vmem:[#allocation2 + $0xb8] sm:$0xff] %v4742
        %v4767 = vld [vmem:[#allocation2] sm:$0xff]
        %v4768 = vld [vmem:[#allocation2 + $0x8] sm:$0xff]
        %v4769 = vld [vmem:[#allocation2 + $0x10] sm:$0xff]
        %v4770 = vld [vmem:[#allocation2 + $0x18] sm:$0xff]
        %v4771 = vld [vmem:[#allocation2 + $0x20] sm:$0xff]
        %v4772 = vld [vmem:[#allocation2 + $0x28] sm:$0xff]
        %v4773 = vld [vmem:[#allocation2 + $0x30] sm:$0xff]
        %v4774 = vld [vmem:[#allocation2 + $0x38] sm:$0xff]
        %v4775 = vld [vmem:[#allocation2 + $0x40] sm:$0xff]
        %v4776 = vld [vmem:[#allocation2 + $0x48] sm:$0xff]
        %v4777 = vld [vmem:[#allocation2 + $0x50] sm:$0xff]
        %v4778 = vld [vmem:[#allocation2 + $0x58] sm:$0xff]
        %v4779 = vld [vmem:[#allocation2 + $0x60] sm:$0xff]
        %v4780 = vld [vmem:[#allocation2 + $0x68] sm:$0xff]
        %v4781 = vld [vmem:[#allocation2 + $0x70] sm:$0xff]
        %v4782 = vld [vmem:[#allocation2 + $0x78] sm:$0xff]
        %v4783 = vld [vmem:[#allocation2 + $0x80] sm:$0xff]
        %v4784 = vld [vmem:[#allocation2 + $0x88] sm:$0xff]
        %v4785 = vld [vmem:[#allocation2 + $0x90] sm:$0xff]
        %v4786 = vld [vmem:[#allocation2 + $0x98] sm:$0xff]
        %v4787 = vld [vmem:[#allocation2 + $0xa0] sm:$0xff]
        %v4788 = vld [vmem:[#allocation2 + $0xa8] sm:$0xff]
        %v4789 = vld [vmem:[#allocation2 + $0xb0] sm:$0xff]
        %v4790 = vld [vmem:[#allocation2 + $0xb8] sm:$0xff]
        %v4791 = vld [vmem:[%s2] sm:$0x1]
        %v4793 = vlaneseq
        %v4794 = vshrl.u32 %v4793, 7
        %v4795 = vsub.s32 0, %v4794
        %v4796 = vrot.slane %v4791, %v4795
        %v4798 = vmul.f32 %v4767, %v4796
        %v4799 = vmul.f32 %v4768, %v4796
        %v4800 = vmul.f32 %v4769, %v4796
        %v4801 = vmul.f32 %v4770, %v4796
        %v4802 = vmul.f32 %v4771, %v4796
        %v4803 = vmul.f32 %v4772, %v4796
        %v4804 = vmul.f32 %v4773, %v4796
        %v4805 = vmul.f32 %v4774, %v4796
        %v4806 = vmul.f32 %v4775, %v4796
        %v4807 = vmul.f32 %v4776, %v4796
        %v4808 = vmul.f32 %v4777, %v4796
        %v4809 = vmul.f32 %v4778, %v4796
        %v4810 = vmul.f32 %v4779, %v4796
        %v4811 = vmul.f32 %v4780, %v4796
        %v4812 = vmul.f32 %v4781, %v4796
        %v4813 = vmul.f32 %v4782, %v4796
        %v4814 = vmul.f32 %v4783, %v4796
        %v4815 = vmul.f32 %v4784, %v4796
        %v4816 = vmul.f32 %v4785, %v4796
        %v4817 = vmul.f32 %v4786, %v4796
        %v4818 = vmul.f32 %v4787, %v4796
        %v4819 = vmul.f32 %v4788, %v4796
        %v4820 = vmul.f32 %v4789, %v4796
        %v4821 = vmul.f32 %v4790, %v4796
        %v4822 = vld [vmem:[%s3] sm:$0x1]
        %v4824 = vlaneseq
        %v4825 = vshrl.u32 %v4824, 7
        %v4826 = vsub.s32 0, %v4825
        %v4827 = vrot.slane %v4822, %v4826
        %v4829 = vadd.f32 %v4798, %v4827
        %v4830 = vadd.f32 %v4799, %v4827
        %v4831 = vadd.f32 %v4800, %v4827
        %v4832 = vadd.f32 %v4801, %v4827
        %v4833 = vadd.f32 %v4802, %v4827
        %v4834 = vadd.f32 %v4803, %v4827
        %v4835 = vadd.f32 %v4804, %v4827
        %v4836 = vadd.f32 %v4805, %v4827
        %v4837 = vadd.f32 %v4806, %v4827
        %v4838 = vadd.f32 %v4807, %v4827
        %v4839 = vadd.f32 %v4808, %v4827
        %v4840 = vadd.f32 %v4809, %v4827
        %v4841 = vadd.f32 %v4810, %v4827
        %v4842 = vadd.f32 %v4811, %v4827
        %v4843 = vadd.f32 %v4812, %v4827
        %v4844 = vadd.f32 %v4813, %v4827
        %v4845 = vadd.f32 %v4814, %v4827
        %v4846 = vadd.f32 %v4815, %v4827
        %v4847 = vadd.f32 %v4816, %v4827
        %v4848 = vadd.f32 %v4817, %v4827
        %v4849 = vadd.f32 %v4818, %v4827
        %v4850 = vadd.f32 %v4819, %v4827
        %v4851 = vadd.f32 %v4820, %v4827
        %v4852 = vadd.f32 %v4821, %v4827
        %v4853 = vmax.f32 %v4829, 0.0
        %v4854 = vmax.f32 %v4830, 0.0
        %v4855 = vmax.f32 %v4831, 0.0
        %v4856 = vmax.f32 %v4832, 0.0
        %v4857 = vmax.f32 %v4833, 0.0
        %v4858 = vmax.f32 %v4834, 0.0
        %v4859 = vmax.f32 %v4835, 0.0
        %v4860 = vmax.f32 %v4836, 0.0
        %v4861 = vmax.f32 %v4837, 0.0
        %v4862 = vmax.f32 %v4838, 0.0
        %v4863 = vmax.f32 %v4839, 0.0
        %v4864 = vmax.f32 %v4840, 0.0
        %v4865 = vmax.f32 %v4841, 0.0
        %v4866 = vmax.f32 %v4842, 0.0
        %v4867 = vmax.f32 %v4843, 0.0
        %v4868 = vmax.f32 %v4844, 0.0
        %v4869 = vmax.f32 %v4845, 0.0
        %v4870 = vmax.f32 %v4846, 0.0
        %v4871 = vmax.f32 %v4847, 0.0
        %v4872 = vmax.f32 %v4848, 0.0
        %v4873 = vmax.f32 %v4849, 0.0
        %v4874 = vmax.f32 %v4850, 0.0
        %v4875 = vmax.f32 %v4851, 0.0
        %v4876 = vmax.f32 %v4852, 0.0
        %4877 = vst [vmem:[%s1013] sm:$0xff] %v4853
        %4878 = vst [vmem:[%s1013 + $0x8] sm:$0xff] %v4854
        %4879 = vst [vmem:[%s1013 + $0x10] sm:$0xff] %v4855
        %4880 = vst [vmem:[%s1013 + $0x18] sm:$0xff] %v4856
        %4881 = vst [vmem:[%s1013 + $0x20] sm:$0xff] %v4857
        %4882 = vst [vmem:[%s1013 + $0x28] sm:$0xff] %v4858
        %4883 = vst [vmem:[%s1013 + $0x30] sm:$0xff] %v4859
        %4884 = vst [vmem:[%s1013 + $0x38] sm:$0xff] %v4860
        %4885 = vst [vmem:[%s1013 + $0x40] sm:$0xff] %v4861
        %4886 = vst [vmem:[%s1013 + $0x48] sm:$0xff] %v4862
        %4887 = vst [vmem:[%s1013 + $0x50] sm:$0xff] %v4863
        %4888 = vst [vmem:[%s1013 + $0x58] sm:$0xff] %v4864
        %4889 = vst [vmem:[%s1013 + $0x60] sm:$0xff] %v4865
        %4890 = vst [vmem:[%s1013 + $0x68] sm:$0xff] %v4866
        %4891 = vst [vmem:[%s1013 + $0x70] sm:$0xff] %v4867
        %4892 = vst [vmem:[%s1013 + $0x78] sm:$0xff] %v4868
        %4893 = vst [vmem:[%s1013 + $0x80] sm:$0xff] %v4869
        %4894 = vst [vmem:[%s1013 + $0x88] sm:$0xff] %v4870
        %4895 = vst [vmem:[%s1013 + $0x90] sm:$0xff] %v4871
        %4896 = vst [vmem:[%s1013 + $0x98] sm:$0xff] %v4872
        %4897 = vst [vmem:[%s1013 + $0xa0] sm:$0xff] %v4873
        %4898 = vst [vmem:[%s1013 + $0xa8] sm:$0xff] %v4874
        %4899 = vst [vmem:[%s1013 + $0xb0] sm:$0xff] %v4875
        %4900 = vst [vmem:[%s1013 + $0xb8] sm:$0xff] %v4876
        %s4901 = sand.u32 %s131, 1
        %s4902 = scalar_lea.sflag [#allocation5], %s4901
        %s4903 = sand.u32 %s131, 1
        %s4904 = smul.addr %s4903, 192
        %s4905 = scalar_lea.vmem [#allocation4], %s4904
        // Predicated region
        $region75: #{run.1} parent=69 // pred_check
          %p4906 = pneg %p141
        $region76: #{run.1} parent=69 // pred_check_branch
          %4908 = sbr.rel (%p4906) target = $region78
        $region77: #{run.1} parent=69 // pred_region
          %s4909 = smul.u32 24, %s23
          %s4911 = ssub.s32 3072, 3072
          %4912 = vsyncadd %s4902, %s4911
          %s4913 = smul.addr %s22, 72
          %s4914 = sadd.s32 %s4909, %s4913
          %s4915 = smul.addr %s4914, 128
          %s4916 = scalar_lea.hbm %s4, %s4915
          %s4917 = sshll.u32 %s4905, 4
          %s4918 = int_to_ptr.vmem [resolvable:$true] %s4917
          %4923 = dma.vmem_to_hbm [thread:$0]  %s4918, 3072, %s4916, %s4902, 128, 128, 8
        $region78: #{run.1} parent=69 // pred_fallthru
          _
      $region70: #{run.1} parent=5 // pred_fallthru
        _
      %p4924 = scmp.le.s32.totalorder 2, %s13
      // Predicated region
      $region79: #{run.1} parent=5 // pred_check
        %p4925 = pneg %p4924
      $region80: #{run.1} parent=5 // pred_check_branch
        %4927 = sbr.rel (%p4925) target = $region82
      $region81: #{run.1} parent=5 // pred_region
        %s4928 = ssub.s32 %s13, 2
        // Predicated region
        $region83: #{run.1} parent=81 // pred_check
          %p4929 = pneg %p147
        $region84: #{run.1} parent=81 // pred_check_branch
          %4931 = sbr.rel (%p4929) target = $region86
        $region85: #{run.1} parent=81 // pred_region
          %s4932 = sand.u32 %s132, 1
          %s4933 = scalar_lea.sflag [#allocation5], %s4932
          %s4934 = sand.u32 %s132, 1
          %s4935 = smul.addr %s4934, 192
          %s4936 = scalar_lea.vmem [#allocation4], %s4935
          %4937 = dma.done %s4933, 3072
        $region86: #{run.1} parent=81 // pred_fallthru
          _
      $region82: #{run.1} parent=5 // pred_fallthru
        _
    $region6: #{run.1} parent=1 // loop_footer
      %s17 = sadd.s32 1, %s13
    $region7: #{run.1} parent=1 // loop_footer_branch
      %12 = sbr.rel target = $region3
    $region8: #{run.1} parent=1 // loop_exit
      _
    %4938 = vsyncpa [#allocation5], 1
    %s4939 = scalar_lea.sflag [#allocation5], 1
    %4940 = vsyncpa %s4939, 1

</llo_original>
